<compile_context>
chip_gen: v7x
topology: tpu7x:2x2x1
jax: 0.10.0
libtpu: 0.0.40
codegen_flags: <defaults>
</compile_context>

<pallas_src>
import functools

import jax
import jax.numpy as jnp
import numpy as np
from jax.experimental import pallas as pl
from jax.experimental.pallas import tpu as pltpu

EPS = 1e-5


# --------------------------------------------------------------------------- #
# generation-aware VMEM budget / tile helpers
# --------------------------------------------------------------------------- #
def _detect_vmem_limit():
    try:
        cap = int(pltpu.get_tpu_info().vmem_capacity_bytes)   # v5e/v6e 128MiB, v7x 64MiB
    except Exception:
        cap = 64 * 1024 * 1024                                # conservative fallback (v7x)
    return int(min(cap - cap // 8, 112 * 1024 * 1024))        # leave headroom


_VMEM_LIMIT = _detect_vmem_limit()


def _pick_lane_tile(L, per_col_bytes):
    """Largest multiple of 128 dividing L whose pipeline footprint fits ~half VMEM."""
    if L % 128:
        return L  # callers pad L to a multiple of 128; full-axis fallback otherwise
    budget = _VMEM_LIMIT // 2
    cap = max(128, (budget // max(per_col_bytes, 1)) // 128 * 128)
    t = min(L, cap)
    while t > 128 and L % t:
        t -= 128
    return t


def _act_spec(block_shape, index_map, *, depth=2):
    """BlockSpec for a streamed activation; depth>2 requests deeper multi-buffering."""
    if depth > 2 and hasattr(pl, "Buffered"):
        try:
            return pl.BlockSpec(block_shape, index_map, pipeline_mode=pl.Buffered(depth))
        except TypeError:
            pass
    return pl.BlockSpec(block_shape, index_map)


# --------------------------------------------------------------------------- #
# kernels  (activations are (C, L) flat lane layout; params are (C, 1))
# --------------------------------------------------------------------------- #
def _mask_store_and_stats(y, bias_ref, mask_ref, y_ref, st_ref):
    """Zero invalid columns, add bias on valid ones, emit packed (sum, sum_sq)."""
    m = mask_ref[...]                                   # (1, T) 0/1 f32
    ym = y * m                                          # bias-free, masked (f32)
    y_ref[0] = (ym + bias_ref[...] * m).astype(y_ref.dtype)
    st_ref[0, 0] = jnp.concatenate(
        [jnp.sum(ym, axis=1, keepdims=True),
         jnp.sum(ym * ym, axis=1, keepdims=True)], axis=0)


def _conv1x1_first_kernel(x_ref, w_ref, bias_ref, mask_ref, y_ref, st_ref):
    """1x1 conv straight from the block input (no previous BN: identity skipped)."""
    y = jnp.dot(w_ref[...], x_ref[0].astype(jnp.float32),
                preferred_element_type=jnp.float32)
    _mask_store_and_stats(y, bias_ref, mask_ref, y_ref, st_ref)


def _bn_relu_conv1x1_kernel(x_ref, ab_ref, w_ref, bias_ref, mask_ref, y_ref, st_ref):
    """BN+ReLU of previous stage -> 1x1 conv -> masked pre-activation + stats."""
    h = jnp.maximum(x_ref[0].astype(jnp.float32) * ab_ref[0] + ab_ref[1], 0.0)
    y = jnp.dot(w_ref[...], h, preferred_element_type=jnp.float32)
    _mask_store_and_stats(y, bias_ref, mask_ref, y_ref, st_ref)


def _bn_relu_shift_conv_kernel(x_ref, ab_ref, w_ref, bias_ref, mask_ref,
                               y_ref, st_ref, h_scr, *, shift, L):
    """BN+ReLU -> 3-tap conv expressed as flat lane shifts {0, shift, 2*shift}.

    The post-activation is written once to a VMEM scratch (width L + 2*shift,
    tail zeroed) and the taps are three accumulating f32 dots against static
    ref-view slices -- no concatenated 3C operand, no relayout copies.
    Invalid output columns (wrapped taps) are zeroed via the column mask.
    """
    h = jnp.maximum(x_ref[0].astype(jnp.float32) * ab_ref[0] + ab_ref[1], 0.0)
    cin = h.shape[0]
    h_scr[:, :L] = h
    h_scr[:, L:] = jnp.zeros((cin, 2 * shift), jnp.float32)   # keep halo finite
    y = jnp.dot(w_ref[0], h, preferred_element_type=jnp.float32)
    y = y + jnp.dot(w_ref[1], h_scr[:, shift:shift + L],
                    preferred_element_type=jnp.float32)
    y = y + jnp.dot(w_ref[2], h_scr[:, 2 * shift:2 * shift + L],
                    preferred_element_type=jnp.float32)
    _mask_store_and_stats(y, bias_ref, mask_ref, y_ref, st_ref)


def _bn_relu_kernel(x_ref, ab_ref, o_ref):
    o_ref[0] = jnp.maximum(x_ref[0].astype(jnp.float32) * ab_ref[0] + ab_ref[1], 0.0)


# --------------------------------------------------------------------------- #
# per-stage pallas_call wrappers
# --------------------------------------------------------------------------- #
def _pointwise_stage(x, ab, w, bias, mask, *, act_dtype):
    N, Cin, L = x.shape
    Cout = w.shape[0]
    in_bpe = x.dtype.itemsize
    out_bpe = jnp.dtype(act_dtype).itemsize
    tile = _pick_lane_tile(L, 3 * (Cin * in_bpe + Cout * out_bpe))
    nT = L // tile
    # depth-3 buffering only pays off when the grid is deep enough (v5e feedback)
    depth = 3 if N * nT >= 4 else 2

    if ab is None:
        kernel = _conv1x1_first_kernel
        extra_specs = []
        args = (x, w, bias, mask)
    else:
        kernel = _bn_relu_conv1x1_kernel
        extra_specs = [pl.BlockSpec((2, Cin, 1), lambda n, t: (0, 0, 0))]
        args = (x, ab, w, bias, mask)

    in_specs = ([_act_spec((1, Cin, tile), lambda n, t: (n, 0, t), depth=depth)]
                + extra_specs
                + [pl.BlockSpec((Cout, Cin), lambda n, t: (0, 0)),
                   pl.BlockSpec((Cout, 1), lambda n, t: (0, 0)),
                   pl.BlockSpec((1, tile), lambda n, t: (0, t))])
    out_specs = (_act_spec((1, Cout, tile), lambda n, t: (n, 0, t), depth=depth),
                 pl.BlockSpec((1, 1, 2 * Cout, 1), lambda n, t: (n, t, 0, 0)))
    cost = pl.CostEstimate(
        flops=int(2 * N * L * Cin * Cout + 6 * N * L * Cout),
        transcendentals=0,
        bytes_accessed=int(N * L * (Cin * in_bpe + Cout * out_bpe)))
    return pl.pallas_call(
        kernel,
        grid=(N, nT),
        in_specs=in_specs,
        out_specs=out_specs,
        out_shape=(jax.ShapeDtypeStruct((N, Cout, L), act_dtype),
                   jax.ShapeDtypeStruct((N, nT, 2 * Cout, 1), jnp.float32)),
        compiler_params=pltpu.CompilerParams(
            dimension_semantics=("parallel", "parallel"),
            vmem_limit_bytes=_VMEM_LIMIT),
        cost_estimate=cost,
    )(*args)


def _shift_conv_stage(x, ab, w3, bias, mask, *, shift, act_dtype):
    # TODO(synk): for large C*H*W (v7x 64 MiB VMEM) add halo H-stripe tiling
    # (2-row / 2-col halo via manual make_async_copy) instead of one whole
    # image per grid step; at these sizes the full-image block is tiny.
    N, Cin, L = x.shape
    Cout = w3.shape[1]
    in_bpe = x.dtype.itemsize
    out_bpe = jnp.dtype(act_dtype).itemsize
    kernel = functools.partial(_bn_relu_shift_conv_kernel, shift=shift, L=L)
    cost = pl.CostEstimate(flops=int(6 * N * L * Cin * Cout),
                           transcendentals=0,
                           bytes_accessed=int(N * L * (Cin * in_bpe + Cout * out_bpe)))
    return pl.pallas_call(
        kernel,
        grid=(N,),
        in_specs=[pl.BlockSpec((1, Cin, L), lambda n: (n, 0, 0)),
                  pl.BlockSpec((2, Cin, 1), lambda n: (0, 0, 0)),
                  pl.BlockSpec((3, Cout, Cin), lambda n: (0, 0, 0)),
                  pl.BlockSpec((Cout, 1), lambda n: (0, 0)),
                  pl.BlockSpec((1, L), lambda n: (0, 0))],
        out_specs=(pl.BlockSpec((1, Cout, L), lambda n: (n, 0, 0)),
                   pl.BlockSpec((1, 1, 2 * Cout, 1), lambda n: (n, 0, 0, 0))),
        out_shape=(jax.ShapeDtypeStruct((N, Cout, L), act_dtype),
                   jax.ShapeDtypeStruct((N, 1, 2 * Cout, 1), jnp.float32)),
        scratch_shapes=[pltpu.VMEM((Cin, L + 2 * shift), jnp.float32)],
        compiler_params=pltpu.CompilerParams(
            dimension_semantics=("parallel",),
            vmem_limit_bytes=_VMEM_LIMIT),
        cost_estimate=cost,
    )(x, ab, w3, bias, mask)


def _bn_relu_stage(y, ab):
    N, C, L = y.shape
    in_bpe = y.dtype.itemsize
    tile = _pick_lane_tile(L, 3 * C * (in_bpe + 4))
    nT = L // tile
    depth = 3 if N * nT >= 4 else 2
    return pl.pallas_call(
        _bn_relu_kernel,
        grid=(N, nT),
        in_specs=[_act_spec((1, C, tile), lambda n, t: (n, 0, t), depth=depth),
                  pl.BlockSpec((2, C, 1), lambda n, t: (0, 0, 0))],
        out_specs=_act_spec((1, C, tile), lambda n, t: (n, 0, t), depth=depth),
        out_shape=jax.ShapeDtypeStruct((N, C, L), jnp.float32),
        compiler_params=pltpu.CompilerParams(
            dimension_semantics=("parallel", "parallel"),
            vmem_limit_bytes=_VMEM_LIMIT),
        cost_estimate=pl.CostEstimate(flops=int(3 * N * C * L), transcendentals=0,
                                      bytes_accessed=int(N * C * L * (in_bpe + 4))),
    )(y, ab)


# --------------------------------------------------------------------------- #
# BN glue: reduce packed per-tile partials -> per-channel (scale, shift)
# Stats were taken on (conv_out - bias): add the bias back to the mean here,
# which also removes the bias from the E[x^2]-E[x]^2 cancellation.
# --------------------------------------------------------------------------- #
def _bn_scale_shift(stats, count, conv_bias, gamma, beta):
    s = jnp.sum(stats, axis=(0, 1))                     # (2C, 1)
    C = s.shape[0] // 2
    mean_nb = s[:C] / count
    ex2 = s[C:] / count
    var = jnp.maximum(ex2 - mean_nb * mean_nb, 0.0)     # biased batch var
    mean = mean_nb + conv_bias
    a = gamma * jax.lax.rsqrt(var + EPS)
    b = beta - mean * a
    return jnp.stack([a, b], axis=0)                    # (2, C, 1) packed


# --------------------------------------------------------------------------- #
# forward (NCHW in, NCHW out — same as the PyTorch module)
# --------------------------------------------------------------------------- #
@functools.partial(jax.jit, static_argnames=("act_dtype",))
def basic_block_forward(x_nchw, params, *, act_dtype=jnp.bfloat16):
    x = x_nchw.astype(jnp.float32)
    N, Cin, H, W = x.shape
    C = params["w1"].shape[0]
    C2 = 2 * C
    Lraw = H * W
    L = ((Lraw + 127) // 128) * 128                     # lane-pad -> unmasked vst
    xf = x.reshape(N, Cin, Lraw)
    if L != Lraw:
        xf = jnp.pad(xf, ((0, 0), (0, 0), (0, L - Lraw)))

    # precomputed validity masks over the flat column axis (equivalent to an
    # in-kernel broadcasted_iota lane mask, built once on the host)
    cols = np.arange(L)
    hh, ww = cols // W, cols % W
    in_img = cols < Lraw
    m1 = jnp.asarray(in_img.astype(np.float32)[None, :])
    m2 = jnp.asarray((in_img & (hh <= H - 3)).astype(np.float32)[None, :])
    m3 = jnp.asarray((in_img & (hh <= H - 3) & (ww <= W - 3)).astype(np.float32)[None, :])

    # stage 1: 1x1 conv (3 -> C); identity pre-scale skipped entirely
    y1, st1 = _pointwise_stage(xf, None, params["w1"], params["b1"], m1,
                               act_dtype=act_dtype)
    ab1 = _bn_scale_shift(st1, N * H * W, params["b1"], params["g1"], params["be1"])

    # stage 2: BN1+ReLU -> (3,1) conv along H  (flat lane shift = W)
    y2, st2 = _shift_conv_stage(y1, ab1, params["w2s"], params["b2"], m2,
                                shift=W, act_dtype=act_dtype)
    ab2 = _bn_scale_shift(st2, N * (H - 2) * W,
                          params["b2"], params["g2"], params["be2"])

    # stage 3: BN2+ReLU -> (1,3) conv along W  (flat lane shift = 1)
    y3, st3 = _shift_conv_stage(y2, ab2, params["w3s"], params["b3"], m3,
                                shift=1, act_dtype=act_dtype)
    ab3 = _bn_scale_shift(st3, N * (H - 2) * (W - 2),
                          params["b3"], params["g3"], params["be3"])

    # stage 4: BN3+ReLU -> 1x1 conv (2C -> 2C); mask carried for stats
    y4, st4 = _pointwise_stage(y3, ab3, params["w4"], params["b4"], m3,
                               act_dtype=act_dtype)
    ab4 = _bn_scale_shift(st4, N * (H - 2) * (W - 2),
                          params["b4"], params["g4"], params["be4"])

    # stage 5: final BN4+ReLU; invalid columns discarded by the final slice
    y5 = _bn_relu_stage(y4, ab4)

    out = y5[:, :, :Lraw].reshape(N, C2, H, W)
    return out[:, :, :H - 2, :W - 2]


# --------------------------------------------------------------------------- #
# parameters
# --------------------------------------------------------------------------- #
def _weight_norm(v):
    # v: (out, in, kh, kw); g frozen to 1  =>  w = v / ||v||_(in,kh,kw)
    norm = jnp.sqrt(jnp.sum(v * v, axis=(1, 2, 3), keepdims=True))
    return v / norm


def init_params(key, out_channel):
    C, C2 = out_channel, 2 * out_channel
    ks = jax.random.split(key, 8)

    def conv_v(k, shape):
        fan_in = shape[1] * shape[2] * shape[3]
        return jax.random.normal(k, shape, jnp.float32) / np.sqrt(fan_in)

    v1 = _weight_norm(conv_v(ks[0], (C, 3, 1, 1)))
    v2 = _weight_norm(conv_v(ks[1], (C, C, 3, 1)))
    v3 = _weight_norm(conv_v(ks[2], (C2, C, 1, 3)))
    v4 = _weight_norm(conv_v(ks[3], (C2, C2, 1, 1)))

    return dict(
        # f32 weights (block is HBM-bound at these channel counts; the MXU has
        # huge slack, so f32 matmuls cost nothing and keep cascaded BN tight):
        #   1x1          -> (Cout, Cin)
        #   (3,1)/(1,3)  -> (3, Cout, Cin)  [tap, out, in]
        w1=v1[:, :, 0, 0],
        w2s=jnp.transpose(v2[:, :, :, 0], (2, 0, 1)),
        w3s=jnp.transpose(v3[:, :, 0, :], (2, 0, 1)),
        w4=v4[:, :, 0, 0],
        # conv biases, (Cout, 1) f32
        b1=0.1 * jax.random.normal(ks[4], (C, 1), jnp.float32),
        b2=0.1 * jax.random.normal(ks[5], (C, 1), jnp.float32),
        b3=0.1 * jax.random.normal(ks[6], (C2, 1), jnp.float32),
        b4=0.1 * jax.random.normal(ks[7], (C2, 1), jnp.float32),
        # BatchNorm affine params at PyTorch __init__ defaults
        g1=jnp.ones((C, 1), jnp.float32), be1=jnp.zeros((C, 1), jnp.float32),
        g2=jnp.ones((C, 1), jnp.float32), be2=jnp.zeros((C, 1), jnp.float32),
        g3=jnp.ones((C2, 1), jnp.float32), be3=jnp.zeros((C2, 1), jnp.float32),
        g4=jnp.ones((C2, 1), jnp.float32), be4=jnp.zeros((C2, 1), jnp.float32),
        # raw (out,in,kh,kw) f32 weights for the pure-JAX reference
        v1=v1, v2=v2, v3=v3, v4=v4,
    )


# --------------------------- pure-JAX reference (NCHW) ----------------------- #
def _bn_relu_nchw(y, gamma, beta):
    mean = jnp.mean(y, axis=(0, 2, 3), keepdims=True)
    var = jnp.mean((y - mean) ** 2, axis=(0, 2, 3), keepdims=True)
    yhat = (y - mean) * jax.lax.rsqrt(var + EPS)
    return jnp.maximum(yhat * gamma.reshape(1, -1, 1, 1)
                       + beta.reshape(1, -1, 1, 1), 0.0)


def reference_forward(x_nchw, p):
    def conv(x, w, b):
        y = jax.lax.conv_general_dilated(
            x, w, window_strides=(1, 1), padding="VALID",
            dimension_numbers=("NCHW", "OIHW", "NCHW"),
            precision=jax.lax.Precision.HIGHEST)
        return y + b.reshape(1, -1, 1, 1)

    h = _bn_relu_nchw(conv(x_nchw, p["v1"], p["b1"]), p["g1"], p["be1"])
    h = _bn_relu_nchw(conv(h, p["v2"], p["b2"]), p["g2"], p["be2"])
    h = _bn_relu_nchw(conv(h, p["v3"], p["b3"]), p["g3"], p["be3"])
    h = _bn_relu_nchw(conv(h, p["v4"], p["b4"]), p["g4"], p["be4"])
    return h


if __name__ == "__main__":
    key = jax.random.PRNGKey(0)
    k_x, k_p = jax.random.split(key)

    out_channel = 8
    N, H, W = 2, 16, 16
    x = jax.random.normal(k_x, (N, 3, H, W), jnp.float32)   # NCHW, like PyTorch

    params = init_params(k_p, out_channel)
    ref = jax.block_until_ready(reference_forward(x, params))

    # f32 handoff path: bit-tight vs the HIGHEST-precision reference.
    out_f32 = jax.block_until_ready(
        basic_block_forward(x, params, act_dtype=jnp.float32))
    assert out_f32.shape == (N, 2 * out_channel, H - 2, W - 2), out_f32.shape
    np.testing.assert_allclose(np.asarray(out_f32), np.asarray(ref),
                               rtol=1e-3, atol=1e-3)

    # bf16 inter-stage storage path (half the inter-stage HBM traffic): checked
    # loosely -- four cascaded training-mode BatchNorms amplify the bf16
    # handoff rounding well past f32 round-off.
    out_bf16 = jax.block_until_ready(
        basic_block_forward(x, params, act_dtype=jnp.bfloat16))
    np.testing.assert_allclose(np.asarray(out_bf16), np.asarray(ref),
                               rtol=1e-1, atol=1e-1)

    print("KERNEL_OK")
</pallas_src>

<mosaic_0001>
module attributes {stable_mosaic.version = 11 : i64} {
  func.func @_conv1x1_first_kernel(%arg0: i32, %arg1: i32, %arg2: memref<1x3x256xf32, #tpu.memory_space<vmem>>, %arg3: memref<8x3xf32, #tpu.memory_space<vmem>>, %arg4: memref<8x1xf32, #tpu.memory_space<vmem>>, %arg5: memref<1x256xf32, #tpu.memory_space<vmem>>, %arg6: memref<1x8x256xf32, #tpu.memory_space<vmem>>, %arg7: memref<1x1x16x1xf32, #tpu.memory_space<vmem>>) attributes {dimension_semantics = [#tpu.dimension_semantics<parallel>, #tpu.dimension_semantics<parallel>], iteration_bounds = array<i64: 2, 1>, scalar_prefetch = 0 : i64, scratch_operands = 0 : i64, tpu.core_type = #tpu.core_type<tc>, window_params = [{transform_indices = @transform_0, window_bounds = array<i64: 1, 3, 256>}, {pipeline_mode = #tpu.pipeline_mode<synchronous>, transform_indices = @transform_1, window_bounds = array<i64: 8, 3>}, {pipeline_mode = #tpu.pipeline_mode<synchronous>, transform_indices = @transform_2, window_bounds = array<i64: 8, 1>}, {transform_indices = @transform_3, window_bounds = array<i64: 1, 256>}, {transform_indices = @transform_4, window_bounds = array<i64: 1, 8, 256>}, {transform_indices = @transform_5, window_bounds = array<i64: 1, 1, 16, 1>}]} {
    %c0 = arith.constant 0 : index
    %c0_0 = arith.constant 0 : index
    %0 = vector.load %arg3[%c0, %c0_0] : memref<8x3xf32, #tpu.memory_space<vmem>>, vector<8x3xf32>
    %c0_1 = arith.constant 0 : index
    %c0_2 = arith.constant 0 : index
    %c0_3 = arith.constant 0 : index
    %1 = vector.load %arg2[%c0_1, %c0_2, %c0_3] : memref<1x3x256xf32, #tpu.memory_space<vmem>>, vector<1x3x256xf32>
    %2 = vector.shape_cast %1 : vector<1x3x256xf32> to vector<3x256xf32>
    %cst = arith.constant dense<0.000000e+00> : vector<8x256xf32>
    %3 = tpu.matmul %0, %2, %cst {dimension_numbers = #tpu.dot_dimension_numbers<[1], [0], [0], [1], [0, 0, 1, 1], [], []>} : vector<8x3xf32>, vector<3x256xf32>, vector<8x256xf32> -> vector<8x256xf32>
    %c0_4 = arith.constant 0 : index
    %c0_5 = arith.constant 0 : index
    %4 = vector.load %arg5[%c0_4, %c0_5] : memref<1x256xf32, #tpu.memory_space<vmem>>, vector<1x256xf32>
    %5 = vector.broadcast %4 : vector<1x256xf32> to vector<8x256xf32>
    %6 = arith.mulf %3, %5 : vector<8x256xf32>
    %c0_6 = arith.constant 0 : index
    %c0_7 = arith.constant 0 : index
    %7 = vector.load %arg4[%c0_6, %c0_7] : memref<8x1xf32, #tpu.memory_space<vmem>>, vector<8x1xf32>
    %8 = vector.broadcast %7 : vector<8x1xf32> to vector<8x256xf32>
    %9 = vector.broadcast %4 : vector<1x256xf32> to vector<8x256xf32>
    %10 = arith.mulf %8, %9 : vector<8x256xf32>
    %11 = arith.addf %6, %10 : vector<8x256xf32>
    %c0_8 = arith.constant 0 : index
    %c0_9 = arith.constant 0 : index
    %c0_10 = arith.constant 0 : index
    %12 = vector.load %arg6[%c0_8, %c0_9, %c0_10] : memref<1x8x256xf32, #tpu.memory_space<vmem>>, vector<1x8x256xf32>
    %13 = vector.shape_cast %12 : vector<1x8x256xf32> to vector<8x256xf32>
    %14 = vector.shape_cast %11 : vector<8x256xf32> to vector<1x8x256xf32>
    tpu.vector_store %arg6[%c0_8, %c0_9, %c0_10], %14 {strides = array<i32>} : memref<1x8x256xf32, #tpu.memory_space<vmem>>, vector<1x8x256xf32>,
    %cst_11 = arith.constant dense<0.000000e+00> : vector<8xf32>
    %15 = vector.multi_reduction <add>, %6, %cst_11 [1] : vector<8x256xf32> to vector<8xf32>
    %16 = vector.shape_cast %15 : vector<8xf32> to vector<8x1xf32>
    %17 = arith.mulf %6, %6 : vector<8x256xf32>
    %cst_12 = arith.constant dense<0.000000e+00> : vector<8xf32>
    %18 = vector.multi_reduction <add>, %17, %cst_12 [1] : vector<8x256xf32> to vector<8xf32>
    %19 = vector.shape_cast %18 : vector<8xf32> to vector<8x1xf32>
    %20 = tpu.concatenate %16, %19 in 0 : vector<8x1xf32>, vector<8x1xf32> -> vector<16x1xf32>
    %c0_13 = arith.constant 0 : index
    %c0_14 = arith.constant 0 : index
    %c0_15 = arith.constant 0 : index
    %c0_16 = arith.constant 0 : index
    %21 = vector.load %arg7[%c0_13, %c0_14, %c0_15, %c0_16] : memref<1x1x16x1xf32, #tpu.memory_space<vmem>>, vector<1x1x16x1xf32>
    %22 = vector.shape_cast %21 : vector<1x1x16x1xf32> to vector<16x1xf32>
    %23 = vector.shape_cast %20 : vector<16x1xf32> to vector<1x1x16x1xf32>
    tpu.vector_store %arg7[%c0_13, %c0_14, %c0_15, %c0_16], %23 {strides = array<i32>} : memref<1x1x16x1xf32, #tpu.memory_space<vmem>>, vector<1x1x16x1xf32>,
    return
  }
  func.func @transform_0(%arg0: i32, %arg1: i32) -> (i32, i32, i32) {
    %c0_i32 = arith.constant 0 : i32
    %c0_i32_0 = arith.constant 0 : i32
    return %arg0, %c0_i32, %arg1 : i32, i32, i32
  }
  func.func @transform_1(%arg0: i32, %arg1: i32) -> (i32, i32) {
    %c0_i32 = arith.constant 0 : i32
    %c0_i32_0 = arith.constant 0 : i32
    %c0_i32_1 = arith.constant 0 : i32
    return %c0_i32, %c0_i32_0 : i32, i32
  }
  func.func @transform_2(%arg0: i32, %arg1: i32) -> (i32, i32) {
    %c0_i32 = arith.constant 0 : i32
    %c0_i32_0 = arith.constant 0 : i32
    %c0_i32_1 = arith.constant 0 : i32
    return %c0_i32, %c0_i32_0 : i32, i32
  }
  func.func @transform_3(%arg0: i32, %arg1: i32) -> (i32, i32) {
    %c0_i32 = arith.constant 0 : i32
    %c0_i32_0 = arith.constant 0 : i32
    return %c0_i32, %arg1 : i32, i32
  }
  func.func @transform_4(%arg0: i32, %arg1: i32) -> (i32, i32, i32) {
    %c0_i32 = arith.constant 0 : i32
    %c0_i32_0 = arith.constant 0 : i32
    return %arg0, %c0_i32, %arg1 : i32, i32, i32
  }
  func.func @transform_5(%arg0: i32, %arg1: i32) -> (i32, i32, i32, i32) {
    %c0_i32 = arith.constant 0 : i32
    %c0_i32_0 = arith.constant 0 : i32
    %c0_i32_1 = arith.constant 0 : i32
    return %arg0, %arg1, %c0_i32, %c0_i32_0 : i32, i32, i32, i32
  }
}

module attributes {stable_mosaic.version = 11 : i64} {
  func.func @_bn_relu_shift_conv_kernel(%arg0: i32, %arg1: memref<1x8x256xf32, #tpu.memory_space<vmem>>, %arg2: memref<2x8x1xf32, #tpu.memory_space<vmem>>, %arg3: memref<3x8x8xf32, #tpu.memory_space<vmem>>, %arg4: memref<8x1xf32, #tpu.memory_space<vmem>>, %arg5: memref<1x256xf32, #tpu.memory_space<vmem>>, %arg6: memref<1x8x256xf32, #tpu.memory_space<vmem>>, %arg7: memref<1x1x16x1xf32, #tpu.memory_space<vmem>>, %arg8: memref<8x288xf32, #tpu.memory_space<vmem>>) attributes {dimension_semantics = [#tpu.dimension_semantics<parallel>], iteration_bounds = array<i64: 2>, scalar_prefetch = 0 : i64, scratch_operands = 1 : i64, tpu.core_type = #tpu.core_type<tc>, window_params = [{transform_indices = @transform_0, window_bounds = array<i64: 1, 8, 256>}, {pipeline_mode = #tpu.pipeline_mode<synchronous>, transform_indices = @transform_1, window_bounds = array<i64: 2, 8, 1>}, {pipeline_mode = #tpu.pipeline_mode<synchronous>, transform_indices = @transform_2, window_bounds = array<i64: 3, 8, 8>}, {pipeline_mode = #tpu.pipeline_mode<synchronous>, transform_indices = @transform_3, window_bounds = array<i64: 8, 1>}, {pipeline_mode = #tpu.pipeline_mode<synchronous>, transform_indices = @transform_4, window_bounds = array<i64: 1, 256>}, {transform_indices = @transform_5, window_bounds = array<i64: 1, 8, 256>}, {transform_indices = @transform_6, window_bounds = array<i64: 1, 1, 16, 1>}]} {
    %c0 = arith.constant 0 : index
    %c0_0 = arith.constant 0 : index
    %c0_1 = arith.constant 0 : index
    %0 = vector.load %arg1[%c0, %c0_0, %c0_1] : memref<1x8x256xf32, #tpu.memory_space<vmem>>, vector<1x8x256xf32>
    %1 = vector.shape_cast %0 : vector<1x8x256xf32> to vector<8x256xf32>
    %c0_2 = arith.constant 0 : index
    %c0_3 = arith.constant 0 : index
    %c0_4 = arith.constant 0 : index
    %2 = vector.load %arg2[%c0_2, %c0_3, %c0_4] : memref<2x8x1xf32, #tpu.memory_space<vmem>>, vector<1x8x1xf32>
    %3 = vector.shape_cast %2 : vector<1x8x1xf32> to vector<8x1xf32>
    %4 = vector.broadcast %3 : vector<8x1xf32> to vector<8x256xf32>
    %5 = arith.mulf %1, %4 : vector<8x256xf32>
    %c1 = arith.constant 1 : index
    %c0_5 = arith.constant 0 : index
    %c0_6 = arith.constant 0 : index
    %6 = vector.load %arg2[%c1, %c0_5, %c0_6] : memref<2x8x1xf32, #tpu.memory_space<vmem>>, vector<1x8x1xf32>
    %7 = vector.shape_cast %6 : vector<1x8x1xf32> to vector<8x1xf32>
    %8 = vector.broadcast %7 : vector<8x1xf32> to vector<8x256xf32>
    %9 = arith.addf %5, %8 : vector<8x256xf32>
    %cst = arith.constant 0.000000e+00 : f32
    %10 = vector.broadcast %cst : f32 to vector<8x256xf32>
    %11 = arith.maximumf %9, %10 : vector<8x256xf32>
    %c0_7 = arith.constant 0 : index
    %c0_8 = arith.constant 0 : index
    %12 = vector.load %arg8[%c0_7, %c0_8] : memref<8x288xf32, #tpu.memory_space<vmem>>, vector<8x256xf32>
    tpu.vector_store %arg8[%c0_7, %c0_8], %11 {strides = array<i32>} : memref<8x288xf32, #tpu.memory_space<vmem>>, vector<8x256xf32>,
    %cst_9 = arith.constant 0.000000e+00 : f32
    %13 = vector.broadcast %cst_9 : f32 to vector<8x32xf32>
    %c0_10 = arith.constant 0 : index
    %c256 = arith.constant 256 : index
    %14 = vector.load %arg8[%c0_10, %c256] : memref<8x288xf32, #tpu.memory_space<vmem>>, vector<8x32xf32>
    tpu.vector_store %arg8[%c0_10, %c256], %13 {strides = array<i32>} : memref<8x288xf32, #tpu.memory_space<vmem>>, vector<8x32xf32>,
    %c0_11 = arith.constant 0 : index
    %c0_12 = arith.constant 0 : index
    %c0_13 = arith.constant 0 : index
    %15 = vector.load %arg3[%c0_11, %c0_12, %c0_13] : memref<3x8x8xf32, #tpu.memory_space<vmem>>, vector<1x8x8xf32>
    %16 = vector.shape_cast %15 : vector<1x8x8xf32> to vector<8x8xf32>
    %cst_14 = arith.constant dense<0.000000e+00> : vector<8x256xf32>
    %17 = tpu.matmul %16, %11, %cst_14 {dimension_numbers = #tpu.dot_dimension_numbers<[1], [0], [0], [1], [0, 0, 1, 1], [], []>} : vector<8x8xf32>, vector<8x256xf32>, vector<8x256xf32> -> vector<8x256xf32>
    %c1_15 = arith.constant 1 : index
    %c0_16 = arith.constant 0 : index
    %c0_17 = arith.constant 0 : index
    %18 = vector.load %arg3[%c1_15, %c0_16, %c0_17] : memref<3x8x8xf32, #tpu.memory_space<vmem>>, vector<1x8x8xf32>
    %19 = vector.shape_cast %18 : vector<1x8x8xf32> to vector<8x8xf32>
    %c0_18 = arith.constant 0 : index
    %c16 = arith.constant 16 : index
    %20 = vector.load %arg8[%c0_18, %c16] : memref<8x288xf32, #tpu.memory_space<vmem>>, vector<8x256xf32>
    %cst_19 = arith.constant dense<0.000000e+00> : vector<8x256xf32>
    %21 = tpu.matmul %19, %20, %cst_19 {dimension_numbers = #tpu.dot_dimension_numbers<[1], [0], [0], [1], [0, 0, 1, 1], [], []>} : vector<8x8xf32>, vector<8x256xf32>, vector<8x256xf32> -> vector<8x256xf32>
    %22 = arith.addf %17, %21 : vector<8x256xf32>
    %c2 = arith.constant 2 : index
    %c0_20 = arith.constant 0 : index
    %c0_21 = arith.constant 0 : index
    %23 = vector.load %arg3[%c2, %c0_20, %c0_21] : memref<3x8x8xf32, #tpu.memory_space<vmem>>, vector<1x8x8xf32>
    %24 = vector.shape_cast %23 : vector<1x8x8xf32> to vector<8x8xf32>
    %c0_22 = arith.constant 0 : index
    %c32 = arith.constant 32 : index
    %25 = vector.load %arg8[%c0_22, %c32] : memref<8x288xf32, #tpu.memory_space<vmem>>, vector<8x256xf32>
    %cst_23 = arith.constant dense<0.000000e+00> : vector<8x256xf32>
    %26 = tpu.matmul %24, %25, %cst_23 {dimension_numbers = #tpu.dot_dimension_numbers<[1], [0], [0], [1], [0, 0, 1, 1], [], []>} : vector<8x8xf32>, vector<8x256xf32>, vector<8x256xf32> -> vector<8x256xf32>
    %27 = arith.addf %22, %26 : vector<8x256xf32>
    %c0_24 = arith.constant 0 : index
    %c0_25 = arith.constant 0 : index
    %28 = vector.load %arg5[%c0_24, %c0_25] : memref<1x256xf32, #tpu.memory_space<vmem>>, vector<1x256xf32>
    %29 = vector.broadcast %28 : vector<1x256xf32> to vector<8x256xf32>
    %30 = arith.mulf %27, %29 : vector<8x256xf32>
    %c0_26 = arith.constant 0 : index
    %c0_27 = arith.constant 0 : index
    %31 = vector.load %arg4[%c0_26, %c0_27] : memref<8x1xf32, #tpu.memory_space<vmem>>, vector<8x1xf32>
    %32 = vector.broadcast %31 : vector<8x1xf32> to vector<8x256xf32>
    %33 = vector.broadcast %28 : vector<1x256xf32> to vector<8x256xf32>
    %34 = arith.mulf %32, %33 : vector<8x256xf32>
    %35 = arith.addf %30, %34 : vector<8x256xf32>
    %c0_28 = arith.constant 0 : index
    %c0_29 = arith.constant 0 : index
    %c0_30 = arith.constant 0 : index
    %36 = vector.load %arg6[%c0_28, %c0_29, %c0_30] : memref<1x8x256xf32, #tpu.memory_space<vmem>>, vector<1x8x256xf32>
    %37 = vector.shape_cast %36 : vector<1x8x256xf32> to vector<8x256xf32>
    %38 = vector.shape_cast %35 : vector<8x256xf32> to vector<1x8x256xf32>
    tpu.vector_store %arg6[%c0_28, %c0_29, %c0_30], %38 {strides = array<i32>} : memref<1x8x256xf32, #tpu.memory_space<vmem>>, vector<1x8x256xf32>,
    %cst_31 = arith.constant dense<0.000000e+00> : vector<8xf32>
    %39 = vector.multi_reduction <add>, %30, %cst_31 [1] : vector<8x256xf32> to vector<8xf32>
    %40 = vector.shape_cast %39 : vector<8xf32> to vector<8x1xf32>
    %41 = arith.mulf %30, %30 : vector<8x256xf32>
    %cst_32 = arith.constant dense<0.000000e+00> : vector<8xf32>
    %42 = vector.multi_reduction <add>, %41, %cst_32 [1] : vector<8x256xf32> to vector<8xf32>
    %43 = vector.shape_cast %42 : vector<8xf32> to vector<8x1xf32>
    %44 = tpu.concatenate %40, %43 in 0 : vector<8x1xf32>, vector<8x1xf32> -> vector<16x1xf32>
    %c0_33 = arith.constant 0 : index
    %c0_34 = arith.constant 0 : index
    %c0_35 = arith.constant 0 : index
    %c0_36 = arith.constant 0 : index
    %45 = vector.load %arg7[%c0_33, %c0_34, %c0_35, %c0_36] : memref<1x1x16x1xf32, #tpu.memory_space<vmem>>, vector<1x1x16x1xf32>
    %46 = vector.shape_cast %45 : vector<1x1x16x1xf32> to vector<16x1xf32>
    %47 = vector.shape_cast %44 : vector<16x1xf32> to vector<1x1x16x1xf32>
    tpu.vector_store %arg7[%c0_33, %c0_34, %c0_35, %c0_36], %47 {strides = array<i32>} : memref<1x1x16x1xf32, #tpu.memory_space<vmem>>, vector<1x1x16x1xf32>,
    return
  }
  func.func @transform_0(%arg0: i32) -> (i32, i32, i32) {
    %c0_i32 = arith.constant 0 : i32
    %c0_i32_0 = arith.constant 0 : i32
    %c0_i32_1 = arith.constant 0 : i32
    return %arg0, %c0_i32, %c0_i32_0 : i32, i32, i32
  }
  func.func @transform_1(%arg0: i32) -> (i32, i32, i32) {
    %c0_i32 = arith.constant 0 : i32
    %c0_i32_0 = arith.constant 0 : i32
    %c0_i32_1 = arith.constant 0 : i32
    %c0_i32_2 = arith.constant 0 : i32
    return %c0_i32, %c0_i32_0, %c0_i32_1 : i32, i32, i32
  }
  func.func @transform_2(%arg0: i32) -> (i32, i32, i32) {
    %c0_i32 = arith.constant 0 : i32
    %c0_i32_0 = arith.constant 0 : i32
    %c0_i32_1 = arith.constant 0 : i32
    %c0_i32_2 = arith.constant 0 : i32
    return %c0_i32, %c0_i32_0, %c0_i32_1 : i32, i32, i32
  }
  func.func @transform_3(%arg0: i32) -> (i32, i32) {
    %c0_i32 = arith.constant 0 : i32
    %c0_i32_0 = arith.constant 0 : i32
    %c0_i32_1 = arith.constant 0 : i32
    return %c0_i32, %c0_i32_0 : i32, i32
  }
  func.func @transform_4(%arg0: i32) -> (i32, i32) {
    %c0_i32 = arith.constant 0 : i32
    %c0_i32_0 = arith.constant 0 : i32
    %c0_i32_1 = arith.constant 0 : i32
    return %c0_i32, %c0_i32_0 : i32, i32
  }
  func.func @transform_5(%arg0: i32) -> (i32, i32, i32) {
    %c0_i32 = arith.constant 0 : i32
    %c0_i32_0 = arith.constant 0 : i32
    %c0_i32_1 = arith.constant 0 : i32
    return %arg0, %c0_i32, %c0_i32_0 : i32, i32, i32
  }
  func.func @transform_6(%arg0: i32) -> (i32, i32, i32, i32) {
    %c0_i32 = arith.constant 0 : i32
    %c0_i32_0 = arith.constant 0 : i32
    %c0_i32_1 = arith.constant 0 : i32
    %c0_i32_2 = arith.constant 0 : i32
    return %arg0, %c0_i32, %c0_i32_0, %c0_i32_1 : i32, i32, i32, i32
  }
}

module attributes {stable_mosaic.version = 11 : i64} {
  func.func @_bn_relu_shift_conv_kernel(%arg0: i32, %arg1: memref<1x8x256xf32, #tpu.memory_space<vmem>>, %arg2: memref<2x8x1xf32, #tpu.memory_space<vmem>>, %arg3: memref<3x16x8xf32, #tpu.memory_space<vmem>>, %arg4: memref<16x1xf32, #tpu.memory_space<vmem>>, %arg5: memref<1x256xf32, #tpu.memory_space<vmem>>, %arg6: memref<1x16x256xf32, #tpu.memory_space<vmem>>, %arg7: memref<1x1x32x1xf32, #tpu.memory_space<vmem>>, %arg8: memref<8x258xf32, #tpu.memory_space<vmem>>) attributes {dimension_semantics = [#tpu.dimension_semantics<parallel>], iteration_bounds = array<i64: 2>, scalar_prefetch = 0 : i64, scratch_operands = 1 : i64, tpu.core_type = #tpu.core_type<tc>, window_params = [{transform_indices = @transform_0, window_bounds = array<i64: 1, 8, 256>}, {pipeline_mode = #tpu.pipeline_mode<synchronous>, transform_indices = @transform_1, window_bounds = array<i64: 2, 8, 1>}, {pipeline_mode = #tpu.pipeline_mode<synchronous>, transform_indices = @transform_2, window_bounds = array<i64: 3, 16, 8>}, {pipeline_mode = #tpu.pipeline_mode<synchronous>, transform_indices = @transform_3, window_bounds = array<i64: 16, 1>}, {pipeline_mode = #tpu.pipeline_mode<synchronous>, transform_indices = @transform_4, window_bounds = array<i64: 1, 256>}, {transform_indices = @transform_5, window_bounds = array<i64: 1, 16, 256>}, {transform_indices = @transform_6, window_bounds = array<i64: 1, 1, 32, 1>}]} {
    %c0 = arith.constant 0 : index
    %c0_0 = arith.constant 0 : index
    %c0_1 = arith.constant 0 : index
    %0 = vector.load %arg1[%c0, %c0_0, %c0_1] : memref<1x8x256xf32, #tpu.memory_space<vmem>>, vector<1x8x256xf32>
    %1 = vector.shape_cast %0 : vector<1x8x256xf32> to vector<8x256xf32>
    %c0_2 = arith.constant 0 : index
    %c0_3 = arith.constant 0 : index
    %c0_4 = arith.constant 0 : index
    %2 = vector.load %arg2[%c0_2, %c0_3, %c0_4] : memref<2x8x1xf32, #tpu.memory_space<vmem>>, vector<1x8x1xf32>
    %3 = vector.shape_cast %2 : vector<1x8x1xf32> to vector<8x1xf32>
    %4 = vector.broadcast %3 : vector<8x1xf32> to vector<8x256xf32>
    %5 = arith.mulf %1, %4 : vector<8x256xf32>
    %c1 = arith.constant 1 : index
    %c0_5 = arith.constant 0 : index
    %c0_6 = arith.constant 0 : index
    %6 = vector.load %arg2[%c1, %c0_5, %c0_6] : memref<2x8x1xf32, #tpu.memory_space<vmem>>, vector<1x8x1xf32>
    %7 = vector.shape_cast %6 : vector<1x8x1xf32> to vector<8x1xf32>
    %8 = vector.broadcast %7 : vector<8x1xf32> to vector<8x256xf32>
    %9 = arith.addf %5, %8 : vector<8x256xf32>
    %cst = arith.constant 0.000000e+00 : f32
    %10 = vector.broadcast %cst : f32 to vector<8x256xf32>
    %11 = arith.maximumf %9, %10 : vector<8x256xf32>
    %c0_7 = arith.constant 0 : index
    %c0_8 = arith.constant 0 : index
    %12 = vector.load %arg8[%c0_7, %c0_8] : memref<8x258xf32, #tpu.memory_space<vmem>>, vector<8x256xf32>
    tpu.vector_store %arg8[%c0_7, %c0_8], %11 {strides = array<i32>} : memref<8x258xf32, #tpu.memory_space<vmem>>, vector<8x256xf32>,
    %cst_9 = arith.constant 0.000000e+00 : f32
    %13 = vector.broadcast %cst_9 : f32 to vector<8x2xf32>
    %c0_10 = arith.constant 0 : index
    %c256 = arith.constant 256 : index
    %14 = vector.load %arg8[%c0_10, %c256] : memref<8x258xf32, #tpu.memory_space<vmem>>, vector<8x2xf32>
    tpu.vector_store %arg8[%c0_10, %c256], %13 {strides = array<i32>} : memref<8x258xf32, #tpu.memory_space<vmem>>, vector<8x2xf32>,
    %c0_11 = arith.constant 0 : index
    %c0_12 = arith.constant 0 : index
    %c0_13 = arith.constant 0 : index
    %15 = vector.load %arg3[%c0_11, %c0_12, %c0_13] : memref<3x16x8xf32, #tpu.memory_space<vmem>>, vector<1x16x8xf32>
    %16 = vector.shape_cast %15 : vector<1x16x8xf32> to vector<16x8xf32>
    %cst_14 = arith.constant dense<0.000000e+00> : vector<16x256xf32>
    %17 = tpu.matmul %16, %11, %cst_14 {dimension_numbers = #tpu.dot_dimension_numbers<[1], [0], [0], [1], [0, 0, 1, 1], [], []>} : vector<16x8xf32>, vector<8x256xf32>, vector<16x256xf32> -> vector<16x256xf32>
    %c1_15 = arith.constant 1 : index
    %c0_16 = arith.constant 0 : index
    %c0_17 = arith.constant 0 : index
    %18 = vector.load %arg3[%c1_15, %c0_16, %c0_17] : memref<3x16x8xf32, #tpu.memory_space<vmem>>, vector<1x16x8xf32>
    %19 = vector.shape_cast %18 : vector<1x16x8xf32> to vector<16x8xf32>
    %c0_18 = arith.constant 0 : index
    %c1_19 = arith.constant 1 : index
    %20 = vector.load %arg8[%c0_18, %c1_19] : memref<8x258xf32, #tpu.memory_space<vmem>>, vector<8x256xf32>
    %cst_20 = arith.constant dense<0.000000e+00> : vector<16x256xf32>
    %21 = tpu.matmul %19, %20, %cst_20 {dimension_numbers = #tpu.dot_dimension_numbers<[1], [0], [0], [1], [0, 0, 1, 1], [], []>} : vector<16x8xf32>, vector<8x256xf32>, vector<16x256xf32> -> vector<16x256xf32>
    %22 = arith.addf %17, %21 : vector<16x256xf32>
    %c2 = arith.constant 2 : index
    %c0_21 = arith.constant 0 : index
    %c0_22 = arith.constant 0 : index
    %23 = vector.load %arg3[%c2, %c0_21, %c0_22] : memref<3x16x8xf32, #tpu.memory_space<vmem>>, vector<1x16x8xf32>
    %24 = vector.shape_cast %23 : vector<1x16x8xf32> to vector<16x8xf32>
    %c0_23 = arith.constant 0 : index
    %c2_24 = arith.constant 2 : index
    %25 = vector.load %arg8[%c0_23, %c2_24] : memref<8x258xf32, #tpu.memory_space<vmem>>, vector<8x256xf32>
    %cst_25 = arith.constant dense<0.000000e+00> : vector<16x256xf32>
    %26 = tpu.matmul %24, %25, %cst_25 {dimension_numbers = #tpu.dot_dimension_numbers<[1], [0], [0], [1], [0, 0, 1, 1], [], []>} : vector<16x8xf32>, vector<8x256xf32>, vector<16x256xf32> -> vector<16x256xf32>
    %27 = arith.addf %22, %26 : vector<16x256xf32>
    %c0_26 = arith.constant 0 : index
    %c0_27 = arith.constant 0 : index
    %28 = vector.load %arg5[%c0_26, %c0_27] : memref<1x256xf32, #tpu.memory_space<vmem>>, vector<1x256xf32>
    %29 = vector.broadcast %28 : vector<1x256xf32> to vector<16x256xf32>
    %30 = arith.mulf %27, %29 : vector<16x256xf32>
    %c0_28 = arith.constant 0 : index
    %c0_29 = arith.constant 0 : index
    %31 = vector.load %arg4[%c0_28, %c0_29] : memref<16x1xf32, #tpu.memory_space<vmem>>, vector<16x1xf32>
    %32 = vector.broadcast %31 : vector<16x1xf32> to vector<16x256xf32>
    %33 = vector.broadcast %28 : vector<1x256xf32> to vector<16x256xf32>
    %34 = arith.mulf %32, %33 : vector<16x256xf32>
    %35 = arith.addf %30, %34 : vector<16x256xf32>
    %c0_30 = arith.constant 0 : index
    %c0_31 = arith.constant 0 : index
    %c0_32 = arith.constant 0 : index
    %36 = vector.load %arg6[%c0_30, %c0_31, %c0_32] : memref<1x16x256xf32, #tpu.memory_space<vmem>>, vector<1x16x256xf32>
    %37 = vector.shape_cast %36 : vector<1x16x256xf32> to vector<16x256xf32>
    %38 = vector.shape_cast %35 : vector<16x256xf32> to vector<1x16x256xf32>
    tpu.vector_store %arg6[%c0_30, %c0_31, %c0_32], %38 {strides = array<i32>} : memref<1x16x256xf32, #tpu.memory_space<vmem>>, vector<1x16x256xf32>,
    %cst_33 = arith.constant dense<0.000000e+00> : vector<16xf32>
    %39 = vector.multi_reduction <add>, %30, %cst_33 [1] : vector<16x256xf32> to vector<16xf32>
    %40 = vector.shape_cast %39 : vector<16xf32> to vector<16x1xf32>
    %41 = arith.mulf %30, %30 : vector<16x256xf32>
    %cst_34 = arith.constant dense<0.000000e+00> : vector<16xf32>
    %42 = vector.multi_reduction <add>, %41, %cst_34 [1] : vector<16x256xf32> to vector<16xf32>
    %43 = vector.shape_cast %42 : vector<16xf32> to vector<16x1xf32>
    %44 = tpu.concatenate %40, %43 in 0 : vector<16x1xf32>, vector<16x1xf32> -> vector<32x1xf32>
    %c0_35 = arith.constant 0 : index
    %c0_36 = arith.constant 0 : index
    %c0_37 = arith.constant 0 : index
    %c0_38 = arith.constant 0 : index
    %45 = vector.load %arg7[%c0_35, %c0_36, %c0_37, %c0_38] : memref<1x1x32x1xf32, #tpu.memory_space<vmem>>, vector<1x1x32x1xf32>
    %46 = vector.shape_cast %45 : vector<1x1x32x1xf32> to vector<32x1xf32>
    %47 = vector.shape_cast %44 : vector<32x1xf32> to vector<1x1x32x1xf32>
    tpu.vector_store %arg7[%c0_35, %c0_36, %c0_37, %c0_38], %47 {strides = array<i32>} : memref<1x1x32x1xf32, #tpu.memory_space<vmem>>, vector<1x1x32x1xf32>,
    return
  }
  func.func @transform_0(%arg0: i32) -> (i32, i32, i32) {
    %c0_i32 = arith.constant 0 : i32
    %c0_i32_0 = arith.constant 0 : i32
    %c0_i32_1 = arith.constant 0 : i32
    return %arg0, %c0_i32, %c0_i32_0 : i32, i32, i32
  }
  func.func @transform_1(%arg0: i32) -> (i32, i32, i32) {
    %c0_i32 = arith.constant 0 : i32
    %c0_i32_0 = arith.constant 0 : i32
    %c0_i32_1 = arith.constant 0 : i32
    %c0_i32_2 = arith.constant 0 : i32
    return %c0_i32, %c0_i32_0, %c0_i32_1 : i32, i32, i32
  }
  func.func @transform_2(%arg0: i32) -> (i32, i32, i32) {
    %c0_i32 = arith.constant 0 : i32
    %c0_i32_0 = arith.constant 0 : i32
    %c0_i32_1 = arith.constant 0 : i32
    %c0_i32_2 = arith.constant 0 : i32
    return %c0_i32, %c0_i32_0, %c0_i32_1 : i32, i32, i32
  }
  func.func @transform_3(%arg0: i32) -> (i32, i32) {
    %c0_i32 = arith.constant 0 : i32
    %c0_i32_0 = arith.constant 0 : i32
    %c0_i32_1 = arith.constant 0 : i32
    return %c0_i32, %c0_i32_0 : i32, i32
  }
  func.func @transform_4(%arg0: i32) -> (i32, i32) {
    %c0_i32 = arith.constant 0 : i32
    %c0_i32_0 = arith.constant 0 : i32
    %c0_i32_1 = arith.constant 0 : i32
    return %c0_i32, %c0_i32_0 : i32, i32
  }
  func.func @transform_5(%arg0: i32) -> (i32, i32, i32) {
    %c0_i32 = arith.constant 0 : i32
    %c0_i32_0 = arith.constant 0 : i32
    %c0_i32_1 = arith.constant 0 : i32
    return %arg0, %c0_i32, %c0_i32_0 : i32, i32, i32
  }
  func.func @transform_6(%arg0: i32) -> (i32, i32, i32, i32) {
    %c0_i32 = arith.constant 0 : i32
    %c0_i32_0 = arith.constant 0 : i32
    %c0_i32_1 = arith.constant 0 : i32
    %c0_i32_2 = arith.constant 0 : i32
    return %arg0, %c0_i32, %c0_i32_0, %c0_i32_1 : i32, i32, i32, i32
  }
}

module attributes {stable_mosaic.version = 11 : i64} {
  func.func @_bn_relu_conv1x1_kernel(%arg0: i32, %arg1: i32, %arg2: memref<1x16x256xf32, #tpu.memory_space<vmem>>, %arg3: memref<2x16x1xf32, #tpu.memory_space<vmem>>, %arg4: memref<16x16xf32, #tpu.memory_space<vmem>>, %arg5: memref<16x1xf32, #tpu.memory_space<vmem>>, %arg6: memref<1x256xf32, #tpu.memory_space<vmem>>, %arg7: memref<1x16x256xf32, #tpu.memory_space<vmem>>, %arg8: memref<1x1x32x1xf32, #tpu.memory_space<vmem>>) attributes {dimension_semantics = [#tpu.dimension_semantics<parallel>, #tpu.dimension_semantics<parallel>], iteration_bounds = array<i64: 2, 1>, scalar_prefetch = 0 : i64, scratch_operands = 0 : i64, tpu.core_type = #tpu.core_type<tc>, window_params = [{transform_indices = @transform_0, window_bounds = array<i64: 1, 16, 256>}, {pipeline_mode = #tpu.pipeline_mode<synchronous>, transform_indices = @transform_1, window_bounds = array<i64: 2, 16, 1>}, {pipeline_mode = #tpu.pipeline_mode<synchronous>, transform_indices = @transform_2, window_bounds = array<i64: 16, 16>}, {pipeline_mode = #tpu.pipeline_mode<synchronous>, transform_indices = @transform_3, window_bounds = array<i64: 16, 1>}, {transform_indices = @transform_4, window_bounds = array<i64: 1, 256>}, {transform_indices = @transform_5, window_bounds = array<i64: 1, 16, 256>}, {transform_indices = @transform_6, window_bounds = array<i64: 1, 1, 32, 1>}]} {
    %c0 = arith.constant 0 : index
    %c0_0 = arith.constant 0 : index
    %c0_1 = arith.constant 0 : index
    %0 = vector.load %arg2[%c0, %c0_0, %c0_1] : memref<1x16x256xf32, #tpu.memory_space<vmem>>, vector<1x16x256xf32>
    %1 = vector.shape_cast %0 : vector<1x16x256xf32> to vector<16x256xf32>
    %c0_2 = arith.constant 0 : index
    %c0_3 = arith.constant 0 : index
    %c0_4 = arith.constant 0 : index
    %2 = vector.load %arg3[%c0_2, %c0_3, %c0_4] : memref<2x16x1xf32, #tpu.memory_space<vmem>>, vector<1x16x1xf32>
    %3 = vector.shape_cast %2 : vector<1x16x1xf32> to vector<16x1xf32>
    %4 = vector.broadcast %3 : vector<16x1xf32> to vector<16x256xf32>
    %5 = arith.mulf %1, %4 : vector<16x256xf32>
    %c1 = arith.constant 1 : index
    %c0_5 = arith.constant 0 : index
    %c0_6 = arith.constant 0 : index
    %6 = vector.load %arg3[%c1, %c0_5, %c0_6] : memref<2x16x1xf32, #tpu.memory_space<vmem>>, vector<1x16x1xf32>
    %7 = vector.shape_cast %6 : vector<1x16x1xf32> to vector<16x1xf32>
    %8 = vector.broadcast %7 : vector<16x1xf32> to vector<16x256xf32>
    %9 = arith.addf %5, %8 : vector<16x256xf32>
    %cst = arith.constant 0.000000e+00 : f32
    %10 = vector.broadcast %cst : f32 to vector<16x256xf32>
    %11 = arith.maximumf %9, %10 : vector<16x256xf32>
    %c0_7 = arith.constant 0 : index
    %c0_8 = arith.constant 0 : index
    %12 = vector.load %arg4[%c0_7, %c0_8] : memref<16x16xf32, #tpu.memory_space<vmem>>, vector<16x16xf32>
    %cst_9 = arith.constant dense<0.000000e+00> : vector<16x256xf32>
    %13 = tpu.matmul %12, %11, %cst_9 {dimension_numbers = #tpu.dot_dimension_numbers<[1], [0], [0], [1], [0, 0, 1, 1], [], []>} : vector<16x16xf32>, vector<16x256xf32>, vector<16x256xf32> -> vector<16x256xf32>
    %c0_10 = arith.constant 0 : index
    %c0_11 = arith.constant 0 : index
    %14 = vector.load %arg6[%c0_10, %c0_11] : memref<1x256xf32, #tpu.memory_space<vmem>>, vector<1x256xf32>
    %15 = vector.broadcast %14 : vector<1x256xf32> to vector<16x256xf32>
    %16 = arith.mulf %13, %15 : vector<16x256xf32>
    %c0_12 = arith.constant 0 : index
    %c0_13 = arith.constant 0 : index
    %17 = vector.load %arg5[%c0_12, %c0_13] : memref<16x1xf32, #tpu.memory_space<vmem>>, vector<16x1xf32>
    %18 = vector.broadcast %17 : vector<16x1xf32> to vector<16x256xf32>
    %19 = vector.broadcast %14 : vector<1x256xf32> to vector<16x256xf32>
    %20 = arith.mulf %18, %19 : vector<16x256xf32>
    %21 = arith.addf %16, %20 : vector<16x256xf32>
    %c0_14 = arith.constant 0 : index
    %c0_15 = arith.constant 0 : index
    %c0_16 = arith.constant 0 : index
    %22 = vector.load %arg7[%c0_14, %c0_15, %c0_16] : memref<1x16x256xf32, #tpu.memory_space<vmem>>, vector<1x16x256xf32>
    %23 = vector.shape_cast %22 : vector<1x16x256xf32> to vector<16x256xf32>
    %24 = vector.shape_cast %21 : vector<16x256xf32> to vector<1x16x256xf32>
    tpu.vector_store %arg7[%c0_14, %c0_15, %c0_16], %24 {strides = array<i32>} : memref<1x16x256xf32, #tpu.memory_space<vmem>>, vector<1x16x256xf32>,
    %cst_17 = arith.constant dense<0.000000e+00> : vector<16xf32>
    %25 = vector.multi_reduction <add>, %16, %cst_17 [1] : vector<16x256xf32> to vector<16xf32>
    %26 = vector.shape_cast %25 : vector<16xf32> to vector<16x1xf32>
    %27 = arith.mulf %16, %16 : vector<16x256xf32>
    %cst_18 = arith.constant dense<0.000000e+00> : vector<16xf32>
    %28 = vector.multi_reduction <add>, %27, %cst_18 [1] : vector<16x256xf32> to vector<16xf32>
    %29 = vector.shape_cast %28 : vector<16xf32> to vector<16x1xf32>
    %30 = tpu.concatenate %26, %29 in 0 : vector<16x1xf32>, vector<16x1xf32> -> vector<32x1xf32>
    %c0_19 = arith.constant 0 : index
    %c0_20 = arith.constant 0 : index
    %c0_21 = arith.constant 0 : index
    %c0_22 = arith.constant 0 : index
    %31 = vector.load %arg8[%c0_19, %c0_20, %c0_21, %c0_22] : memref<1x1x32x1xf32, #tpu.memory_space<vmem>>, vector<1x1x32x1xf32>
    %32 = vector.shape_cast %31 : vector<1x1x32x1xf32> to vector<32x1xf32>
    %33 = vector.shape_cast %30 : vector<32x1xf32> to vector<1x1x32x1xf32>
    tpu.vector_store %arg8[%c0_19, %c0_20, %c0_21, %c0_22], %33 {strides = array<i32>} : memref<1x1x32x1xf32, #tpu.memory_space<vmem>>, vector<1x1x32x1xf32>,
    return
  }
  func.func @transform_0(%arg0: i32, %arg1: i32) -> (i32, i32, i32) {
    %c0_i32 = arith.constant 0 : i32
    %c0_i32_0 = arith.constant 0 : i32
    return %arg0, %c0_i32, %arg1 : i32, i32, i32
  }
  func.func @transform_1(%arg0: i32, %arg1: i32) -> (i32, i32, i32) {
    %c0_i32 = arith.constant 0 : i32
    %c0_i32_0 = arith.constant 0 : i32
    %c0_i32_1 = arith.constant 0 : i32
    %c0_i32_2 = arith.constant 0 : i32
    return %c0_i32, %c0_i32_0, %c0_i32_1 : i32, i32, i32
  }
  func.func @transform_2(%arg0: i32, %arg1: i32) -> (i32, i32) {
    %c0_i32 = arith.constant 0 : i32
    %c0_i32_0 = arith.constant 0 : i32
    %c0_i32_1 = arith.constant 0 : i32
    return %c0_i32, %c0_i32_0 : i32, i32
  }
  func.func @transform_3(%arg0: i32, %arg1: i32) -> (i32, i32) {
    %c0_i32 = arith.constant 0 : i32
    %c0_i32_0 = arith.constant 0 : i32
    %c0_i32_1 = arith.constant 0 : i32
    return %c0_i32, %c0_i32_0 : i32, i32
  }
  func.func @transform_4(%arg0: i32, %arg1: i32) -> (i32, i32) {
    %c0_i32 = arith.constant 0 : i32
    %c0_i32_0 = arith.constant 0 : i32
    return %c0_i32, %arg1 : i32, i32
  }
  func.func @transform_5(%arg0: i32, %arg1: i32) -> (i32, i32, i32) {
    %c0_i32 = arith.constant 0 : i32
    %c0_i32_0 = arith.constant 0 : i32
    return %arg0, %c0_i32, %arg1 : i32, i32, i32
  }
  func.func @transform_6(%arg0: i32, %arg1: i32) -> (i32, i32, i32, i32) {
    %c0_i32 = arith.constant 0 : i32
    %c0_i32_0 = arith.constant 0 : i32
    %c0_i32_1 = arith.constant 0 : i32
    return %arg0, %arg1, %c0_i32, %c0_i32_0 : i32, i32, i32, i32
  }
}

module attributes {stable_mosaic.version = 11 : i64} {
  func.func @_bn_relu_kernel(%arg0: i32, %arg1: i32, %arg2: memref<1x16x256xf32, #tpu.memory_space<vmem>>, %arg3: memref<2x16x1xf32, #tpu.memory_space<vmem>>, %arg4: memref<1x16x256xf32, #tpu.memory_space<vmem>>) attributes {dimension_semantics = [#tpu.dimension_semantics<parallel>, #tpu.dimension_semantics<parallel>], iteration_bounds = array<i64: 2, 1>, scalar_prefetch = 0 : i64, scratch_operands = 0 : i64, tpu.core_type = #tpu.core_type<tc>, window_params = [{transform_indices = @transform_0, window_bounds = array<i64: 1, 16, 256>}, {pipeline_mode = #tpu.pipeline_mode<synchronous>, transform_indices = @transform_1, window_bounds = array<i64: 2, 16, 1>}, {transform_indices = @transform_2, window_bounds = array<i64: 1, 16, 256>}]} {
    %c0 = arith.constant 0 : index
    %c0_0 = arith.constant 0 : index
    %c0_1 = arith.constant 0 : index
    %0 = vector.load %arg2[%c0, %c0_0, %c0_1] : memref<1x16x256xf32, #tpu.memory_space<vmem>>, vector<1x16x256xf32>
    %1 = vector.shape_cast %0 : vector<1x16x256xf32> to vector<16x256xf32>
    %c0_2 = arith.constant 0 : index
    %c0_3 = arith.constant 0 : index
    %c0_4 = arith.constant 0 : index
    %2 = vector.load %arg3[%c0_2, %c0_3, %c0_4] : memref<2x16x1xf32, #tpu.memory_space<vmem>>, vector<1x16x1xf32>
    %3 = vector.shape_cast %2 : vector<1x16x1xf32> to vector<16x1xf32>
    %4 = vector.broadcast %3 : vector<16x1xf32> to vector<16x256xf32>
    %5 = arith.mulf %1, %4 : vector<16x256xf32>
    %c1 = arith.constant 1 : index
    %c0_5 = arith.constant 0 : index
    %c0_6 = arith.constant 0 : index
    %6 = vector.load %arg3[%c1, %c0_5, %c0_6] : memref<2x16x1xf32, #tpu.memory_space<vmem>>, vector<1x16x1xf32>
    %7 = vector.shape_cast %6 : vector<1x16x1xf32> to vector<16x1xf32>
    %8 = vector.broadcast %7 : vector<16x1xf32> to vector<16x256xf32>
    %9 = arith.addf %5, %8 : vector<16x256xf32>
    %cst = arith.constant 0.000000e+00 : f32
    %10 = vector.broadcast %cst : f32 to vector<16x256xf32>
    %11 = arith.maximumf %9, %10 : vector<16x256xf32>
    %c0_7 = arith.constant 0 : index
    %c0_8 = arith.constant 0 : index
    %c0_9 = arith.constant 0 : index
    %12 = vector.load %arg4[%c0_7, %c0_8, %c0_9] : memref<1x16x256xf32, #tpu.memory_space<vmem>>, vector<1x16x256xf32>
    %13 = vector.shape_cast %12 : vector<1x16x256xf32> to vector<16x256xf32>
    %14 = vector.shape_cast %11 : vector<16x256xf32> to vector<1x16x256xf32>
    tpu.vector_store %arg4[%c0_7, %c0_8, %c0_9], %14 {strides = array<i32>} : memref<1x16x256xf32, #tpu.memory_space<vmem>>, vector<1x16x256xf32>,
    return
  }
  func.func @transform_0(%arg0: i32, %arg1: i32) -> (i32, i32, i32) {
    %c0_i32 = arith.constant 0 : i32
    %c0_i32_0 = arith.constant 0 : i32
    return %arg0, %c0_i32, %arg1 : i32, i32, i32
  }
  func.func @transform_1(%arg0: i32, %arg1: i32) -> (i32, i32, i32) {
    %c0_i32 = arith.constant 0 : i32
    %c0_i32_0 = arith.constant 0 : i32
    %c0_i32_1 = arith.constant 0 : i32
    %c0_i32_2 = arith.constant 0 : i32
    return %c0_i32, %c0_i32_0, %c0_i32_1 : i32, i32, i32
  }
  func.func @transform_2(%arg0: i32, %arg1: i32) -> (i32, i32, i32) {
    %c0_i32 = arith.constant 0 : i32
    %c0_i32_0 = arith.constant 0 : i32
    return %arg0, %c0_i32, %arg1 : i32, i32, i32
  }
}

</mosaic_0001>

<llo_original>
// kernel: basic_block_forward.5
$region0: #{basic_block_forward.5}
  #allocation0 [shape = 'u32[]', space=smem, size = 0x4, offset = 0x4, fixed_abs, tag = 'smem constant byte address 0x4 - core index']
  #allocation1 [shape = 'u32[144,128]{1,0:T(1,128)}', space=vmem, size = 0x12000, scoped, tag = 'internal scratch']
  %s0 = inlined_call_operand.vmem [shape: f32[2,3,256], index: 0, kind: input, shape index: {}]
  %s1 = inlined_call_operand.vmem [shape: f32[8,3], index: 1, kind: input, shape index: {}]
  %s2 = inlined_call_operand.vmem [shape: f32[8,1], index: 2, kind: input, shape index: {}]
  %s3 = inlined_call_operand.vmem [shape: f32[1,256], index: 3, kind: input, shape index: {}]
  %s4 = inlined_call_operand.vmem [shape: f32[2,8,256], index: 4, kind: output, shape index: {0}]
  %s5 = inlined_call_operand.vmem [shape: f32[2,1,16,1], index: 5, kind: output, shape index: {1}]
  %6 = xla_tuple %s4, %s5
  %s7 = sld [smem:[#allocation0]]
  $region57: #{basic_block_forward.5} parent=0
    _
  %s9 = ssub.s32 1, %s7
  %s10 = scalar_select 0, %s9, %s7
  loop: start=0, step=1, limit=4
  $region2: #{basic_block_forward.5} parent=0 // loop_pre_header
    _
  $region3: #{basic_block_forward.5} parent=0 // loop_header
    %s12 = sphi 0, %s16
    %p13 = scmp.ge.s32.totalorder %s12, 4
    %s19 = sphi 0, %s31
    %s20 = sphi 0, %s27
    %s21 = sphi 0, %s19
    %s22 = sphi 0, %s20
    %s23 = sphi 0, %s21
    %s24 = sphi 0, %s22
    %s36 = sphi 0, %s38
    %s39 = sphi 0, %s36
    %s40 = sphi 0, %s39
    %s56 = sphi 0, %s40
    %s60 = sphi 0, %s60
    %s62 = sphi 0, %s60
    %s63 = sphi 0, %s62
    %s77 = sphi 0, %s63
    %s81 = sphi 0, %s81
    %s83 = sphi 0, %s81
    %s84 = sphi 0, %s83
    %s98 = sphi 0, %s84
    %s104 = sphi 0, %s106
    %s107 = sphi 0, %s104
    %s108 = sphi 0, %s107
    %s124 = sphi 0, %s108
    %s132 = sphi 0, %s134
    %s135 = sphi 0, %s132
    %s136 = sphi 0, %s135
    %s152 = sphi 0, %s136
    %s160 = sphi 0, %s162
    %s163 = sphi 0, %s160
    %s164 = sphi 0, %s163
    %s180 = sphi 0, %s164
  $region4: #{basic_block_forward.5} parent=0 // loop_header_branch
    %15 = sbr.rel (%p13) target = $region8
  $region5: #{basic_block_forward.5} parent=0 // loop_body
    %s17 = ssub.s32 %s12, 1
    %s18 = ssub.s32 %s12, 2
    %s25 = sadd.s32 1, %s20
    %p26 = scmp.ge.s32.totalorder %s25, 1
    %s27 = scalar_select %p26, 0, %s25
    %s28 = sadd.s32 1, %s19
    %s29 = scalar_select %p26, %s28, %s19
    %p30 = scmp.ge.s32.totalorder %s29, 2
    %s31 = scalar_select %p30, 0, %s29
    %s32 = ssub.s32 %s19, %s31
    %s33 = ssub.s32 %s20, %s27
    %s34 = sor.u32 %s32, %s33
    %p35 = scmp.eq.s32.totalorder %s34, 0
    %s37 = sadd.s32 %s36, 1
    %s38 = scalar_select %p35, %s36, %s37
    %p41 = pneg %p35
    %p42 = scmp.eq.s32.totalorder %s12, 1
    %p43 = por %p41, %p42
    %p44 = scmp.ne.s32.totalorder %s36, %s39
    %p45 = scmp.eq.s32.totalorder %s12, 0
    %p46 = por %p44, %p45
    %p47 = scmp.ne.s32.totalorder %s36, %s39
    %p48 = scmp.eq.s32.totalorder %s17, 1
    %p49 = por %p47, %p48
    %p50 = scmp.ne.s32.totalorder %s39, %s40
    %p51 = scmp.eq.s32.totalorder %s17, 0
    %p52 = por %p50, %p51
    %p53 = scmp.ne.s32.totalorder %s39, %s40
    %p54 = scmp.eq.s32.totalorder %s18, 1
    %p55 = por %p53, %p54
    %p57 = scmp.ne.s32.totalorder %s40, %s56
    %p58 = scmp.eq.s32.totalorder %s18, 0
    %p59 = por %p57, %p58
    %s61 = sadd.s32 %s60, 1
    %p64 = scmp.eq.s32.totalorder %s12, 1
    %p65 = scmp.ne.s32.totalorder %s60, %s62
    %p66 = scmp.eq.s32.totalorder %s12, 0
    %p67 = por %p65, %p66
    %p68 = scmp.ne.s32.totalorder %s60, %s62
    %p69 = scmp.eq.s32.totalorder %s17, 1
    %p70 = por %p68, %p69
    %p71 = scmp.ne.s32.totalorder %s62, %s63
    %p72 = scmp.eq.s32.totalorder %s17, 0
    %p73 = por %p71, %p72
    %p74 = scmp.ne.s32.totalorder %s62, %s63
    %p75 = scmp.eq.s32.totalorder %s18, 1
    %p76 = por %p74, %p75
    %p78 = scmp.ne.s32.totalorder %s63, %s77
    %p79 = scmp.eq.s32.totalorder %s18, 0
    %p80 = por %p78, %p79
    %s82 = sadd.s32 %s81, 1
    %p85 = scmp.eq.s32.totalorder %s12, 1
    %p86 = scmp.ne.s32.totalorder %s81, %s83
    %p87 = scmp.eq.s32.totalorder %s12, 0
    %p88 = por %p86, %p87
    %p89 = scmp.ne.s32.totalorder %s81, %s83
    %p90 = scmp.eq.s32.totalorder %s17, 1
    %p91 = por %p89, %p90
    %p92 = scmp.ne.s32.totalorder %s83, %s84
    %p93 = scmp.eq.s32.totalorder %s17, 0
    %p94 = por %p92, %p93
    %p95 = scmp.ne.s32.totalorder %s83, %s84
    %p96 = scmp.eq.s32.totalorder %s18, 1
    %p97 = por %p95, %p96
    %p99 = scmp.ne.s32.totalorder %s84, %s98
    %p100 = scmp.eq.s32.totalorder %s18, 0
    %p101 = por %p99, %p100
    %s102 = ssub.s32 %s20, %s27
    %p103 = scmp.eq.s32.totalorder %s102, 0
    %s105 = sadd.s32 %s104, 1
    %s106 = scalar_select %p103, %s104, %s105
    %p109 = pneg %p103
    %p110 = scmp.eq.s32.totalorder %s12, 1
    %p111 = por %p109, %p110
    %p112 = scmp.ne.s32.totalorder %s104, %s107
    %p113 = scmp.eq.s32.totalorder %s12, 0
    %p114 = por %p112, %p113
    %p115 = scmp.ne.s32.totalorder %s104, %s107
    %p116 = scmp.eq.s32.totalorder %s17, 1
    %p117 = por %p115, %p116
    %p118 = scmp.ne.s32.totalorder %s107, %s108
    %p119 = scmp.eq.s32.totalorder %s17, 0
    %p120 = por %p118, %p119
    %p121 = scmp.ne.s32.totalorder %s107, %s108
    %p122 = scmp.eq.s32.totalorder %s18, 1
    %p123 = por %p121, %p122
    %p125 = scmp.ne.s32.totalorder %s108, %s124
    %p126 = scmp.eq.s32.totalorder %s18, 0
    %p127 = por %p125, %p126
    %s128 = ssub.s32 %s19, %s31
    %s129 = ssub.s32 %s20, %s27
    %s130 = sor.u32 %s128, %s129
    %p131 = scmp.eq.s32.totalorder %s130, 0
    %s133 = sadd.s32 %s132, 1
    %s134 = scalar_select %p131, %s132, %s133
    %p137 = pneg %p131
    %p138 = scmp.eq.s32.totalorder %s12, 1
    %p139 = por %p137, %p138
    %p140 = scmp.ne.s32.totalorder %s132, %s135
    %p141 = scmp.eq.s32.totalorder %s12, 0
    %p142 = por %p140, %p141
    %p143 = scmp.ne.s32.totalorder %s132, %s135
    %p144 = scmp.eq.s32.totalorder %s17, 1
    %p145 = por %p143, %p144
    %p146 = scmp.ne.s32.totalorder %s135, %s136
    %p147 = scmp.eq.s32.totalorder %s17, 0
    %p148 = por %p146, %p147
    %p149 = scmp.ne.s32.totalorder %s135, %s136
    %p150 = scmp.eq.s32.totalorder %s18, 1
    %p151 = por %p149, %p150
    %p153 = scmp.ne.s32.totalorder %s136, %s152
    %p154 = scmp.eq.s32.totalorder %s18, 0
    %p155 = por %p153, %p154
    %s156 = ssub.s32 %s19, %s31
    %s157 = ssub.s32 %s20, %s27
    %s158 = sor.u32 %s156, %s157
    %p159 = scmp.eq.s32.totalorder %s158, 0
    %s161 = sadd.s32 %s160, 1
    %s162 = scalar_select %p159, %s160, %s161
    %p165 = pneg %p159
    %p166 = scmp.eq.s32.totalorder %s12, 1
    %p167 = por %p165, %p166
    %p168 = scmp.ne.s32.totalorder %s160, %s163
    %p169 = scmp.eq.s32.totalorder %s12, 0
    %p170 = por %p168, %p169
    %p171 = scmp.ne.s32.totalorder %s160, %s163
    %p172 = scmp.eq.s32.totalorder %s17, 1
    %p173 = por %p171, %p172
    %p174 = scmp.ne.s32.totalorder %s163, %s164
    %p175 = scmp.eq.s32.totalorder %s17, 0
    %p176 = por %p174, %p175
    %p177 = scmp.ne.s32.totalorder %s163, %s164
    %p178 = scmp.eq.s32.totalorder %s18, 1
    %p179 = por %p177, %p178
    %p181 = scmp.ne.s32.totalorder %s164, %s180
    %p182 = scmp.eq.s32.totalorder %s18, 0
    %p183 = por %p181, %p182
    %p184 = scmp.le.s32.totalorder 1, %s12
    %p185 = scmp.lt.s32.totalorder %s12, 3
    %p186 = pnand %p184, %p185
    %p187 = pneg %p186
    // Predicated region
    $region9: #{basic_block_forward.5} parent=5 // pred_check
      _
    $region10: #{basic_block_forward.5} parent=5 // pred_check_branch
      %189 = sbr.rel (%p186) target = $region12
    $region11: #{basic_block_forward.5} parent=5 // pred_region
      %s190 = ssub.s32 %s12, 1
      // Predicated region
      $region13: #{basic_block_forward.5} parent=11 // pred_check
        %p191 = pneg %p73
      $region14: #{basic_block_forward.5} parent=11 // pred_check_branch
        %193 = sbr.rel (%p191) target = $region16
      $region15: #{basic_block_forward.5} parent=11 // pred_region
        _
      $region16: #{basic_block_forward.5} parent=11 // pred_fallthru
        _
      // Predicated region
      $region17: #{basic_block_forward.5} parent=11 // pred_check
        %p194 = pneg %p94
      $region18: #{basic_block_forward.5} parent=11 // pred_check_branch
        %196 = sbr.rel (%p194) target = $region20
      $region19: #{basic_block_forward.5} parent=11 // pred_region
        _
      $region20: #{basic_block_forward.5} parent=11 // pred_fallthru
        _
      // Predicated region
      $region21: #{basic_block_forward.5} parent=11 // pred_check
        %p197 = pneg %p120
      $region22: #{basic_block_forward.5} parent=11 // pred_check_branch
        %199 = sbr.rel (%p197) target = $region24
      $region23: #{basic_block_forward.5} parent=11 // pred_region
        %s200 = smul.u32 2, %s22
        %p201 = scmp.lt.s32.totalorder %s200, 1
        %s202 = scalar_select %p201, %s200, 1
        %s203 = scalar_lea.vmem %s3, %s202
        %s204 = smul.u32 2, %s22
      $region24: #{basic_block_forward.5} parent=11 // pred_fallthru
        _
    $region12: #{basic_block_forward.5} parent=5 // pred_fallthru
      _
    %p205 = scmp.lt.s32.totalorder %s12, 2
    // Predicated region
    $region25: #{basic_block_forward.5} parent=5 // pred_check
      %p206 = pneg %p205
    $region26: #{basic_block_forward.5} parent=5 // pred_check_branch
      %208 = sbr.rel (%p206) target = $region28
    $region27: #{basic_block_forward.5} parent=5 // pred_region
      // Predicated region
      $region29: #{basic_block_forward.5} parent=27 // pred_check
        %p209 = pneg %p46
      $region30: #{basic_block_forward.5} parent=27 // pred_check_branch
        %211 = sbr.rel (%p209) target = $region32
      $region31: #{basic_block_forward.5} parent=27 // pred_region
        %s212 = smul.u32 2, %s20
        %p213 = scmp.lt.s32.totalorder %s19, 1
        %s214 = scalar_select %p213, %s19, 1
        %p215 = scmp.lt.s32.totalorder %s212, 1
        %s216 = scalar_select %p215, %s212, 1
        %s217 = smul.addr %s214, 2
        %s218 = sadd.s32 %s216, %s217
        %s219 = smul.addr %s218, 4
        %s220 = scalar_lea.vmem %s0, %s219
        %s221 = smul.u32 2, %s20
      $region32: #{basic_block_forward.5} parent=27 // pred_fallthru
        _
    $region28: #{basic_block_forward.5} parent=5 // pred_fallthru
      _
    %p222 = scmp.le.s32.totalorder 1, %s12
    %p223 = scmp.lt.s32.totalorder %s12, 3
    %p224 = pnand %p222, %p223
    %p225 = pneg %p224
    // Predicated region
    $region33: #{basic_block_forward.5} parent=5 // pred_check
      _
    $region34: #{basic_block_forward.5} parent=5 // pred_check_branch
      %227 = sbr.rel (%p224) target = $region36
    $region35: #{basic_block_forward.5} parent=5 // pred_region
      %s228 = ssub.s32 %s12, 1
      %s229 = smul.u32 2, %s22
      %p230 = scmp.lt.s32.totalorder %s21, 1
      %s231 = scalar_select %p230, %s21, 1
      %p232 = scmp.lt.s32.totalorder %s229, 1
      %s233 = scalar_select %p232, %s229, 1
      %s234 = smul.addr %s231, 2
      %s235 = sadd.s32 %s233, %s234
      %s236 = smul.addr %s235, 4
      %s237 = scalar_lea.vmem %s0, %s236
      %p238 = pneg %p52
      %p239 = pneg %p49
      %p240 = pneg %p73
      %p241 = pneg %p70
      %p242 = pneg %p94
      %p243 = pneg %p91
      %s244 = smul.u32 2, %s22
      %p245 = scmp.lt.s32.totalorder %s244, 1
      %s246 = scalar_select %p245, %s244, 1
      %s247 = scalar_lea.vmem %s3, %s246
      %p248 = pneg %p120
      %p249 = pneg %p117
      %p250 = pneg %p148
      %p251 = pneg %p145
      %s252 = smul.u32 2, %s22
      %p253 = scmp.lt.s32.totalorder %s21, 1
      %s254 = scalar_select %p253, %s21, 1
      %p255 = scmp.lt.s32.totalorder %s252, 1
      %s256 = scalar_select %p255, %s252, 1
      %s257 = smul.addr %s254, 2
      %s258 = sadd.s32 %s256, %s257
      %s259 = smul.addr %s258, 8
      %s260 = scalar_lea.vmem %s4, %s259
      %p261 = pneg %p176
      %p262 = pneg %p173
      %p263 = scmp.lt.s32.totalorder %s21, 1
      %s264 = scalar_select %p263, %s21, 1
      %p265 = scmp.lt.s32.totalorder %s22, 0
      %s266 = scalar_select %p265, %s22, 0
      %s267 = smul.addr %s266, 2
      %s268 = smul.addr %s264, 2
      %s269 = sadd.s32 %s267, %s268
      %s270 = smul.addr %s269, 8
      %s271 = scalar_lea.vmem %s5, %s270
      %s272 = smul.u32 2, %s22
      %p273 = scmp.lt.s32.totalorder %s21, 1
      %s274 = scalar_select %p273, %s21, 1
      %p275 = scmp.lt.s32.totalorder %s272, 1
      %s276 = scalar_select %p275, %s272, 1
      %s277 = smul.addr %s274, 2
      %s278 = sadd.s32 %s276, %s277
      %s279 = smul.addr %s278, 4
      %s280 = scalar_lea.vmem %s0, %s279
      %s281 = smul.u32 2, %s22
      %s282 = smul.u32 2, %s22
      %p283 = scmp.lt.s32.totalorder %s282, 1
      %s284 = scalar_select %p283, %s282, 1
      %s285 = scalar_lea.vmem %s3, %s284
      %s286 = smul.u32 2, %s22
      %s287 = smul.u32 2, %s22
      %p288 = scmp.lt.s32.totalorder %s21, 1
      %s289 = scalar_select %p288, %s21, 1
      %p290 = scmp.lt.s32.totalorder %s287, 1
      %s291 = scalar_select %p290, %s287, 1
      %s292 = smul.addr %s289, 2
      %s293 = sadd.s32 %s291, %s292
      %s294 = smul.addr %s293, 8
      %s295 = scalar_lea.vmem %s4, %s294
      %s296 = smul.u32 2, %s22
      %p297 = scmp.lt.s32.totalorder %s21, 1
      %s298 = scalar_select %p297, %s21, 1
      %p299 = scmp.lt.s32.totalorder %s22, 0
      %s300 = scalar_select %p299, %s22, 0
      %s301 = smul.addr %s300, 2
      %s302 = smul.addr %s298, 2
      %s303 = sadd.s32 %s301, %s302
      %s304 = smul.addr %s303, 8
      %s305 = scalar_lea.vmem %s5, %s304
      %v306 = vld [vmem:[%s1] sm:$0xff]
      %v307 = vld [vmem:[%s280] sm:$0x77]
      %v309 = vcombine.high %v307, %v307
      %vm310 = vcmask 23552
      %v312 = vsel %vm310, %v306, 0
      %vm314 = vcmask 1042432
      %v315 = vsel %vm314, %v307, 0
      %v317 = vsel %vm314, %v309, 0
      %319 = vmatprep.subr.mxu0 %v317
      %320 = vmatpush1.msra.mxu0 %v315
      %321 = vmatprep.subr.mxu0 0.0
      %322 = vmatpush1.msra.mxu0 0.0
      %323 = vmatprep.subr.mxu0 0.0
      %324 = vmatpush1.msra.mxu0 0.0
      %325 = vmatprep.subr.mxu0 0.0
      %326 = vmatpush1.msra.mxu0 0.0
      %327 = vmatprep.subr.mxu0 0.0
      %328 = vmatpush1.msra.mxu0 0.0
      %329 = vmatprep.subr.mxu0 0.0
      %330 = vmatpush1.msra.mxu0 0.0
      %331 = vmatprep.subr.mxu0 0.0
      %332 = vmatpush1.msra.mxu0 0.0
      %333 = vmatprep.subr.mxu0 0.0
      %334 = vmatpush1.msra.mxu0 0.0
      %335 = vmatprep.subr.mxu0 0.0
      %336 = vmatpush1.msra.mxu0 0.0
      %337 = vmatprep.subr.mxu0 0.0
      %338 = vmatpush1.msra.mxu0 0.0
      %339 = vmatprep.subr.mxu0 0.0
      %340 = vmatpush1.msra.mxu0 0.0
      %341 = vmatprep.subr.mxu0 0.0
      %342 = vmatpush1.msra.mxu0 0.0
      %343 = vmatprep.subr.mxu0 0.0
      %344 = vmatpush1.msra.mxu0 0.0
      %345 = vmatprep.subr.mxu0 0.0
      %346 = vmatpush1.msra.mxu0 0.0
      %347 = vmatprep.subr.mxu0 0.0
      %348 = vmatpush1.msra.mxu0 0.0
      %349 = vmatprep.subr.mxu0 0.0
      %350 = vmatpush1.msra.mxu0 0.0
      %351 = vmatprep.subr.mxu0 0.0
      %352 = vmatpush1.msra.mxu0 0.0
      %353 = vmatprep.subr.mxu0 0.0
      %354 = vmatpush1.msra.mxu0 0.0
      %355 = vmatprep.subr.mxu0 0.0
      %356 = vmatpush1.msra.mxu0 0.0
      %357 = vmatprep.subr.mxu0 0.0
      %358 = vmatpush1.msra.mxu0 0.0
      %359 = vmatprep.subr.mxu0 0.0
      %360 = vmatpush1.msra.mxu0 0.0
      %361 = vmatprep.subr.mxu0 0.0
      %362 = vmatpush1.msra.mxu0 0.0
      %363 = vmatprep.subr.mxu0 0.0
      %364 = vmatpush1.msra.mxu0 0.0
      %365 = vmatprep.subr.mxu0 0.0
      %366 = vmatpush1.msra.mxu0 0.0
      %367 = vmatprep.subr.mxu0 0.0
      %368 = vmatpush1.msra.mxu0 0.0
      %369 = vmatprep.subr.mxu0 0.0
      %370 = vmatpush1.msra.mxu0 0.0
      %371 = vmatprep.subr.mxu0 0.0
      %372 = vmatpush1.msra.mxu0 0.0
      %373 = vmatprep.subr.mxu0 0.0
      %374 = vmatpush1.msra.mxu0 0.0
      %375 = vmatprep.subr.mxu0 0.0
      %376 = vmatpush1.msra.mxu0 0.0
      %377 = vmatprep.subr.mxu0 0.0
      %378 = vmatpush1.msra.mxu0 0.0
      %379 = vmatprep.subr.mxu0 0.0
      %380 = vmatpush1.msra.mxu0 0.0
      %381 = vmatprep.subr.mxu0 0.0
      %382 = vmatpush1.msra.mxu0 0.0
      %383 = vmatprep.mubr.f32.mxu0 0.0
      %384 = vmatmul.mubr.f32.gmra.mrb[0].mxu0 %v312
      %v385 = vpop.f32.mrb[0].mxu0
      %v386 = vadd.f32 0.0, %v385
      %v387 = vpop.f32.mrb[0].mxu0
      %v388 = vadd.f32 0.0, %v387
      %389 = vdwg.mxu0
      %v390 = vld [vmem:[%s285] sm:$0x3]
      %v392 = vlaneseq
      %v393 = vshrl.u32 %v392, 7
      %v394 = vsub.s32 0, %v393
      %v395 = vrot.slane %v390, %v394
      %v396 = vlaneseq
      %v397 = vshrl.u32 %v396, 7
      %v398 = vsub.s32 1, %v397
      %v399 = vrot.slane %v390, %v398
      %v402 = vmul.f32 %v386, %v395
      %v403 = vmul.f32 %v388, %v399
      %v404 = vld [vmem:[%s2] sm:$0xff]
      %406 = vset.pattern.permute.xlu0 0
      %407 = vperm.xlu0 %406, %v404
      %v408 = vpop.permute.xlu0 %407
      %v410 = vmul.f32 %v408, %v395
      %v411 = vmul.f32 %v408, %v399
      %v412 = vadd.f32 %v402, %v410
      %v413 = vadd.f32 %v403, %v411
      %414 = vst [vmem:[%s295] sm:$0xff] %v412
      %415 = vst [vmem:[%s295 + $0x8] sm:$0xff] %v413
      %v416 = vadd.f32 %v402, %v403
      %417 = vadd.xlane.f32.xlu0 %v416
      %v418 = vpop.xlane.xlu0 %417
      %v419 = vmul.f32 %v402, %v402
      %v420 = vmul.f32 %v403, %v403
      %v421 = vadd.f32 %v419, %v420
      %422 = vadd.xlane.f32.xlu0 %v421
      %v423 = vpop.xlane.xlu0 %422
      %vm424 = vcmask 7168
      %425 = vst.msk [vmem:[%s305] sm:$0xff] %vm424, %v418
      %426 = vst.msk [vmem:[%s305 + $0x8] sm:$0xff] %vm424, %v423
      %s427 = smul.u32 2, %s22
      %p428 = scmp.lt.s32.totalorder %s21, 1
      %s429 = scalar_select %p428, %s21, 1
      %p430 = scmp.lt.s32.totalorder %s427, 1
      %s431 = scalar_select %p430, %s427, 1
      %s432 = smul.addr %s429, 2
      %s433 = sadd.s32 %s431, %s432
      %s434 = smul.addr %s433, 8
      %s435 = scalar_lea.vmem %s4, %s434
      %p436 = scmp.lt.s32.totalorder %s21, 1
      %s437 = scalar_select %p436, %s21, 1
      %p438 = scmp.lt.s32.totalorder %s22, 0
      %s439 = scalar_select %p438, %s22, 0
      %s440 = smul.addr %s439, 2
      %s441 = smul.addr %s437, 2
      %s442 = sadd.s32 %s440, %s441
      %s443 = smul.addr %s442, 8
      %s444 = scalar_lea.vmem %s5, %s443
      // Predicated region
      $region37: #{basic_block_forward.5} parent=35 // pred_check
        %p445 = pneg %p145
      $region38: #{basic_block_forward.5} parent=35 // pred_check_branch
        %447 = sbr.rel (%p445) target = $region40
      $region39: #{basic_block_forward.5} parent=35 // pred_region
        %s448 = smul.u32 2, %s22
      $region40: #{basic_block_forward.5} parent=35 // pred_fallthru
        _
      // Predicated region
      $region41: #{basic_block_forward.5} parent=35 // pred_check
        %p449 = pneg %p173
      $region42: #{basic_block_forward.5} parent=35 // pred_check_branch
        %451 = sbr.rel (%p449) target = $region44
      $region43: #{basic_block_forward.5} parent=35 // pred_region
        _
      $region44: #{basic_block_forward.5} parent=35 // pred_fallthru
        _
    $region36: #{basic_block_forward.5} parent=5 // pred_fallthru
      _
    %p452 = scmp.le.s32.totalorder 2, %s12
    // Predicated region
    $region45: #{basic_block_forward.5} parent=5 // pred_check
      %p453 = pneg %p452
    $region46: #{basic_block_forward.5} parent=5 // pred_check_branch
      %455 = sbr.rel (%p453) target = $region48
    $region47: #{basic_block_forward.5} parent=5 // pred_region
      %s456 = ssub.s32 %s12, 2
      // Predicated region
      $region49: #{basic_block_forward.5} parent=47 // pred_check
        %p457 = pneg %p151
      $region50: #{basic_block_forward.5} parent=47 // pred_check_branch
        %459 = sbr.rel (%p457) target = $region52
      $region51: #{basic_block_forward.5} parent=47 // pred_region
        %s460 = smul.u32 2, %s24
        %p461 = scmp.lt.s32.totalorder %s23, 1
        %s462 = scalar_select %p461, %s23, 1
        %p463 = scmp.lt.s32.totalorder %s460, 1
        %s464 = scalar_select %p463, %s460, 1
        %s465 = smul.addr %s462, 2
        %s466 = sadd.s32 %s464, %s465
        %s467 = smul.addr %s466, 8
        %s468 = scalar_lea.vmem %s4, %s467
      $region52: #{basic_block_forward.5} parent=47 // pred_fallthru
        _
      // Predicated region
      $region53: #{basic_block_forward.5} parent=47 // pred_check
        %p469 = pneg %p179
      $region54: #{basic_block_forward.5} parent=47 // pred_check_branch
        %471 = sbr.rel (%p469) target = $region56
      $region55: #{basic_block_forward.5} parent=47 // pred_region
        %p472 = scmp.lt.s32.totalorder %s23, 1
        %s473 = scalar_select %p472, %s23, 1
        %p474 = scmp.lt.s32.totalorder %s24, 0
        %s475 = scalar_select %p474, %s24, 0
        %s476 = smul.addr %s475, 2
        %s477 = smul.addr %s473, 2
        %s478 = sadd.s32 %s476, %s477
        %s479 = smul.addr %s478, 8
        %s480 = scalar_lea.vmem %s5, %s479
      $region56: #{basic_block_forward.5} parent=47 // pred_fallthru
        _
    $region48: #{basic_block_forward.5} parent=5 // pred_fallthru
      _
  $region6: #{basic_block_forward.5} parent=0 // loop_footer
    %s16 = sadd.s32 1, %s12
  $region7: #{basic_block_forward.5} parent=0 // loop_footer_branch
    %11 = sbr.rel target = $region3
  $region8: #{basic_block_forward.5} parent=0 // loop_exit
    _

// kernel: basic_block_forward.6
$region0: #{basic_block_forward.6}
  #allocation0 [shape = 'u32[]', space=smem, size = 0x4, offset = 0x4, fixed_abs, tag = 'smem constant byte address 0x4 - core index']
  #allocation1 [shape = 'u32[144,128]{1,0:T(1,128)}', space=vmem, size = 0x12000, scoped, tag = 'internal scratch']
  #allocation2 [shape = 'f32[8,288]{1,0:T(8,128)}', space=vmem, size = 0x3000, scoped, tag = 'scratch operand']
  %s0 = inlined_call_operand.vmem [shape: f32[2,8,256], index: 0, kind: input, shape index: {}]
  %s1 = inlined_call_operand.vmem [shape: f32[2,8,1], index: 1, kind: input, shape index: {}]
  %s2 = inlined_call_operand.vmem [shape: f32[3,8,8], index: 2, kind: input, shape index: {}]
  %s3 = inlined_call_operand.vmem [shape: f32[8,1], index: 3, kind: input, shape index: {}]
  %s4 = inlined_call_operand.vmem [shape: f32[1,256], index: 4, kind: input, shape index: {}]
  %s5 = inlined_call_operand.vmem [shape: f32[2,8,256], index: 5, kind: output, shape index: {0}]
  %s6 = inlined_call_operand.vmem [shape: f32[2,1,16,1], index: 6, kind: output, shape index: {1}]
  %7 = xla_tuple %s5, %s6
  %s8 = sld [smem:[#allocation0]]
  $region61: #{basic_block_forward.6} parent=0
    _
  %s10 = ssub.s32 1, %s8
  %s11 = scalar_select 0, %s10, %s8
  loop: start=0, step=1, limit=4
  $region2: #{basic_block_forward.6} parent=0 // loop_pre_header
    _
  $region3: #{basic_block_forward.6} parent=0 // loop_header
    %s13 = sphi 0, %s17
    %p14 = scmp.ge.s32.totalorder %s13, 4
    %s23 = sphi 0, %s25
    %s26 = sphi 0, %s23
    %s27 = sphi 0, %s26
    %s43 = sphi 0, %s27
    %s47 = sphi 0, %s47
    %s49 = sphi 0, %s47
    %s50 = sphi 0, %s49
    %s64 = sphi 0, %s50
    %s68 = sphi 0, %s68
    %s70 = sphi 0, %s68
    %s71 = sphi 0, %s70
    %s85 = sphi 0, %s71
    %s89 = sphi 0, %s89
    %s91 = sphi 0, %s89
    %s92 = sphi 0, %s91
    %s106 = sphi 0, %s92
    %s110 = sphi 0, %s110
    %s112 = sphi 0, %s110
    %s113 = sphi 0, %s112
    %s127 = sphi 0, %s113
    %s133 = sphi 0, %s135
    %s136 = sphi 0, %s133
    %s137 = sphi 0, %s136
    %s153 = sphi 0, %s137
    %s159 = sphi 0, %s161
    %s162 = sphi 0, %s159
    %s163 = sphi 0, %s162
    %s179 = sphi 0, %s163
  $region4: #{basic_block_forward.6} parent=0 // loop_header_branch
    %16 = sbr.rel (%p14) target = $region8
  $region5: #{basic_block_forward.6} parent=0 // loop_body
    %s18 = ssub.s32 %s13, 1
    %s19 = ssub.s32 %s13, 2
    %s20 = sadd.s32 %s13, 1
    %s21 = ssub.s32 %s13, %s20
    %p22 = scmp.eq.s32.totalorder %s21, 0
    %s24 = sadd.s32 %s23, 1
    %s25 = scalar_select %p22, %s23, %s24
    %p28 = pneg %p22
    %p29 = scmp.eq.s32.totalorder %s13, 1
    %p30 = por %p28, %p29
    %p31 = scmp.ne.s32.totalorder %s23, %s26
    %p32 = scmp.eq.s32.totalorder %s13, 0
    %p33 = por %p31, %p32
    %p34 = scmp.ne.s32.totalorder %s23, %s26
    %p35 = scmp.eq.s32.totalorder %s18, 1
    %p36 = por %p34, %p35
    %p37 = scmp.ne.s32.totalorder %s26, %s27
    %p38 = scmp.eq.s32.totalorder %s18, 0
    %p39 = por %p37, %p38
    %p40 = scmp.ne.s32.totalorder %s26, %s27
    %p41 = scmp.eq.s32.totalorder %s19, 1
    %p42 = por %p40, %p41
    %p44 = scmp.ne.s32.totalorder %s27, %s43
    %p45 = scmp.eq.s32.totalorder %s19, 0
    %p46 = por %p44, %p45
    %s48 = sadd.s32 %s47, 1
    %p51 = scmp.eq.s32.totalorder %s13, 1
    %p52 = scmp.ne.s32.totalorder %s47, %s49
    %p53 = scmp.eq.s32.totalorder %s13, 0
    %p54 = por %p52, %p53
    %p55 = scmp.ne.s32.totalorder %s47, %s49
    %p56 = scmp.eq.s32.totalorder %s18, 1
    %p57 = por %p55, %p56
    %p58 = scmp.ne.s32.totalorder %s49, %s50
    %p59 = scmp.eq.s32.totalorder %s18, 0
    %p60 = por %p58, %p59
    %p61 = scmp.ne.s32.totalorder %s49, %s50
    %p62 = scmp.eq.s32.totalorder %s19, 1
    %p63 = por %p61, %p62
    %p65 = scmp.ne.s32.totalorder %s50, %s64
    %p66 = scmp.eq.s32.totalorder %s19, 0
    %p67 = por %p65, %p66
    %s69 = sadd.s32 %s68, 1
    %p72 = scmp.eq.s32.totalorder %s13, 1
    %p73 = scmp.ne.s32.totalorder %s68, %s70
    %p74 = scmp.eq.s32.totalorder %s13, 0
    %p75 = por %p73, %p74
    %p76 = scmp.ne.s32.totalorder %s68, %s70
    %p77 = scmp.eq.s32.totalorder %s18, 1
    %p78 = por %p76, %p77
    %p79 = scmp.ne.s32.totalorder %s70, %s71
    %p80 = scmp.eq.s32.totalorder %s18, 0
    %p81 = por %p79, %p80
    %p82 = scmp.ne.s32.totalorder %s70, %s71
    %p83 = scmp.eq.s32.totalorder %s19, 1
    %p84 = por %p82, %p83
    %p86 = scmp.ne.s32.totalorder %s71, %s85
    %p87 = scmp.eq.s32.totalorder %s19, 0
    %p88 = por %p86, %p87
    %s90 = sadd.s32 %s89, 1
    %p93 = scmp.eq.s32.totalorder %s13, 1
    %p94 = scmp.ne.s32.totalorder %s89, %s91
    %p95 = scmp.eq.s32.totalorder %s13, 0
    %p96 = por %p94, %p95
    %p97 = scmp.ne.s32.totalorder %s89, %s91
    %p98 = scmp.eq.s32.totalorder %s18, 1
    %p99 = por %p97, %p98
    %p100 = scmp.ne.s32.totalorder %s91, %s92
    %p101 = scmp.eq.s32.totalorder %s18, 0
    %p102 = por %p100, %p101
    %p103 = scmp.ne.s32.totalorder %s91, %s92
    %p104 = scmp.eq.s32.totalorder %s19, 1
    %p105 = por %p103, %p104
    %p107 = scmp.ne.s32.totalorder %s92, %s106
    %p108 = scmp.eq.s32.totalorder %s19, 0
    %p109 = por %p107, %p108
    %s111 = sadd.s32 %s110, 1
    %p114 = scmp.eq.s32.totalorder %s13, 1
    %p115 = scmp.ne.s32.totalorder %s110, %s112
    %p116 = scmp.eq.s32.totalorder %s13, 0
    %p117 = por %p115, %p116
    %p118 = scmp.ne.s32.totalorder %s110, %s112
    %p119 = scmp.eq.s32.totalorder %s18, 1
    %p120 = por %p118, %p119
    %p121 = scmp.ne.s32.totalorder %s112, %s113
    %p122 = scmp.eq.s32.totalorder %s18, 0
    %p123 = por %p121, %p122
    %p124 = scmp.ne.s32.totalorder %s112, %s113
    %p125 = scmp.eq.s32.totalorder %s19, 1
    %p126 = por %p124, %p125
    %p128 = scmp.ne.s32.totalorder %s113, %s127
    %p129 = scmp.eq.s32.totalorder %s19, 0
    %p130 = por %p128, %p129
    %s131 = ssub.s32 %s13, %s20
    %p132 = scmp.eq.s32.totalorder %s131, 0
    %s134 = sadd.s32 %s133, 1
    %s135 = scalar_select %p132, %s133, %s134
    %p138 = pneg %p132
    %p139 = scmp.eq.s32.totalorder %s13, 1
    %p140 = por %p138, %p139
    %p141 = scmp.ne.s32.totalorder %s133, %s136
    %p142 = scmp.eq.s32.totalorder %s13, 0
    %p143 = por %p141, %p142
    %p144 = scmp.ne.s32.totalorder %s133, %s136
    %p145 = scmp.eq.s32.totalorder %s18, 1
    %p146 = por %p144, %p145
    %p147 = scmp.ne.s32.totalorder %s136, %s137
    %p148 = scmp.eq.s32.totalorder %s18, 0
    %p149 = por %p147, %p148
    %p150 = scmp.ne.s32.totalorder %s136, %s137
    %p151 = scmp.eq.s32.totalorder %s19, 1
    %p152 = por %p150, %p151
    %p154 = scmp.ne.s32.totalorder %s137, %s153
    %p155 = scmp.eq.s32.totalorder %s19, 0
    %p156 = por %p154, %p155
    %s157 = ssub.s32 %s13, %s20
    %p158 = scmp.eq.s32.totalorder %s157, 0
    %s160 = sadd.s32 %s159, 1
    %s161 = scalar_select %p158, %s159, %s160
    %p164 = pneg %p158
    %p165 = scmp.eq.s32.totalorder %s13, 1
    %p166 = por %p164, %p165
    %p167 = scmp.ne.s32.totalorder %s159, %s162
    %p168 = scmp.eq.s32.totalorder %s13, 0
    %p169 = por %p167, %p168
    %p170 = scmp.ne.s32.totalorder %s159, %s162
    %p171 = scmp.eq.s32.totalorder %s18, 1
    %p172 = por %p170, %p171
    %p173 = scmp.ne.s32.totalorder %s162, %s163
    %p174 = scmp.eq.s32.totalorder %s18, 0
    %p175 = por %p173, %p174
    %p176 = scmp.ne.s32.totalorder %s162, %s163
    %p177 = scmp.eq.s32.totalorder %s19, 1
    %p178 = por %p176, %p177
    %p180 = scmp.ne.s32.totalorder %s163, %s179
    %p181 = scmp.eq.s32.totalorder %s19, 0
    %p182 = por %p180, %p181
    %p183 = scmp.le.s32.totalorder 1, %s13
    %p184 = scmp.lt.s32.totalorder %s13, 3
    %p185 = pnand %p183, %p184
    %p186 = pneg %p185
    // Predicated region
    $region9: #{basic_block_forward.6} parent=5 // pred_check
      _
    $region10: #{basic_block_forward.6} parent=5 // pred_check_branch
      %188 = sbr.rel (%p185) target = $region12
    $region11: #{basic_block_forward.6} parent=5 // pred_region
      %s189 = ssub.s32 %s13, 1
      // Predicated region
      $region13: #{basic_block_forward.6} parent=11 // pred_check
        %p190 = pneg %p60
      $region14: #{basic_block_forward.6} parent=11 // pred_check_branch
        %192 = sbr.rel (%p190) target = $region16
      $region15: #{basic_block_forward.6} parent=11 // pred_region
        _
      $region16: #{basic_block_forward.6} parent=11 // pred_fallthru
        _
      // Predicated region
      $region17: #{basic_block_forward.6} parent=11 // pred_check
        %p193 = pneg %p81
      $region18: #{basic_block_forward.6} parent=11 // pred_check_branch
        %195 = sbr.rel (%p193) target = $region20
      $region19: #{basic_block_forward.6} parent=11 // pred_region
        _
      $region20: #{basic_block_forward.6} parent=11 // pred_fallthru
        _
      // Predicated region
      $region21: #{basic_block_forward.6} parent=11 // pred_check
        %p196 = pneg %p102
      $region22: #{basic_block_forward.6} parent=11 // pred_check_branch
        %198 = sbr.rel (%p196) target = $region24
      $region23: #{basic_block_forward.6} parent=11 // pred_region
        _
      $region24: #{basic_block_forward.6} parent=11 // pred_fallthru
        _
      // Predicated region
      $region25: #{basic_block_forward.6} parent=11 // pred_check
        %p199 = pneg %p123
      $region26: #{basic_block_forward.6} parent=11 // pred_check_branch
        %201 = sbr.rel (%p199) target = $region28
      $region27: #{basic_block_forward.6} parent=11 // pred_region
        _
      $region28: #{basic_block_forward.6} parent=11 // pred_fallthru
        _
    $region12: #{basic_block_forward.6} parent=5 // pred_fallthru
      _
    %p202 = scmp.lt.s32.totalorder %s13, 2
    // Predicated region
    $region29: #{basic_block_forward.6} parent=5 // pred_check
      %p203 = pneg %p202
    $region30: #{basic_block_forward.6} parent=5 // pred_check_branch
      %205 = sbr.rel (%p203) target = $region32
    $region31: #{basic_block_forward.6} parent=5 // pred_region
      // Predicated region
      $region33: #{basic_block_forward.6} parent=31 // pred_check
        %p206 = pneg %p33
      $region34: #{basic_block_forward.6} parent=31 // pred_check_branch
        %208 = sbr.rel (%p206) target = $region36
      $region35: #{basic_block_forward.6} parent=31 // pred_region
        %p209 = scmp.lt.s32.totalorder %s13, 1
        %s210 = scalar_select %p209, %s13, 1
        %s211 = smul.addr %s210, 2
        %s212 = smul.addr %s211, 8
        %s213 = scalar_lea.vmem %s0, %s212
      $region36: #{basic_block_forward.6} parent=31 // pred_fallthru
        _
    $region32: #{basic_block_forward.6} parent=5 // pred_fallthru
      _
    %p214 = scmp.le.s32.totalorder 1, %s13
    %p215 = scmp.lt.s32.totalorder %s13, 3
    %p216 = pnand %p214, %p215
    %p217 = pneg %p216
    // Predicated region
    $region37: #{basic_block_forward.6} parent=5 // pred_check
      _
    $region38: #{basic_block_forward.6} parent=5 // pred_check_branch
      %219 = sbr.rel (%p216) target = $region40
    $region39: #{basic_block_forward.6} parent=5 // pred_region
      %s220 = ssub.s32 %s13, 1
      %p221 = scmp.lt.s32.totalorder %s18, 1
      %s222 = scalar_select %p221, %s18, 1
      %s223 = smul.addr %s222, 2
      %s224 = smul.addr %s223, 8
      %s225 = scalar_lea.vmem %s0, %s224
      %p226 = pneg %p39
      %p227 = pneg %p36
      %p228 = pneg %p60
      %p229 = pneg %p57
      %p230 = pneg %p81
      %p231 = pneg %p78
      %p232 = pneg %p102
      %p233 = pneg %p99
      %p234 = pneg %p123
      %p235 = pneg %p120
      %p236 = pneg %p149
      %p237 = pneg %p146
      %p238 = scmp.lt.s32.totalorder %s18, 1
      %s239 = scalar_select %p238, %s18, 1
      %s240 = smul.addr %s239, 2
      %s241 = smul.addr %s240, 8
      %s242 = scalar_lea.vmem %s5, %s241
      %p243 = pneg %p175
      %p244 = pneg %p172
      %p245 = scmp.lt.s32.totalorder %s18, 1
      %s246 = scalar_select %p245, %s18, 1
      %s247 = smul.addr %s246, 2
      %s248 = smul.addr %s247, 8
      %s249 = scalar_lea.vmem %s6, %s248
      %p250 = scmp.lt.s32.totalorder %s18, 1
      %s251 = scalar_select %p250, %s18, 1
      %s252 = smul.addr %s251, 2
      %s253 = smul.addr %s252, 8
      %s254 = scalar_lea.vmem %s0, %s253
      %p255 = scmp.lt.s32.totalorder %s18, 1
      %s256 = scalar_select %p255, %s18, 1
      %s257 = smul.addr %s256, 2
      %s258 = smul.addr %s257, 8
      %s259 = scalar_lea.vmem %s5, %s258
      %p260 = scmp.lt.s32.totalorder %s18, 1
      %s261 = scalar_select %p260, %s18, 1
      %s262 = smul.addr %s261, 2
      %s263 = smul.addr %s262, 8
      %s264 = scalar_lea.vmem %s6, %s263
      %v265 = vld [vmem:[%s254] sm:$0xff]
      %v266 = vld [vmem:[%s254 + $0x8] sm:$0xff]
      %v267 = vld [vmem:[%s1] sm:$0xff]
      %269 = vset.pattern.permute.xlu0 0
      %270 = vperm.xlu0 %269, %v267
      %v271 = vpop.permute.xlu0 %270
      %v273 = vmul.f32 %v265, %v271
      %v274 = vmul.f32 %v266, %v271
      %s275 = scalar_lea.vmem %s1, 8
      %v276 = vld [vmem:[%s275] sm:$0xff]
      %278 = vset.pattern.permute.xlu0 0
      %279 = vperm.xlu0 %278, %v276
      %v280 = vpop.permute.xlu0 %279
      %v282 = vadd.f32 %v273, %v280
      %v283 = vadd.f32 %v274, %v280
      %v284 = vmax.f32 %v282, 0.0
      %v285 = vmax.f32 %v283, 0.0
      %286 = vst [vmem:[#allocation2] sm:$0xff] %v284
      %287 = vst [vmem:[#allocation2 + $0x8] sm:$0xff] %v285
      %vm288 = vcmask 261120
      %289 = vst.msk [vmem:[#allocation2 + $0x10] sm:$0xff] %vm288, 0.0
      %v290 = vld [vmem:[%s2] sm:$0xff]
      %s291 = scalar_lea.vmem %s2, 8
      %v292 = vld [vmem:[%s291] sm:$0xff]
      %v293 = vld [vmem:[#allocation2] sm:$0xff]
      %v294 = vld [vmem:[#allocation2 + $0x8] sm:$0xff]
      %v295 = vld [vmem:[#allocation2 + $0x10] sm:$0xff]
      %299 = vrot.lane.b32.xlu0 %v293, 112
      %v300 = vpop.permute.xlu0 %299
      %301 = vrot.lane.b32.xlu0 %v294, 112
      %v302 = vpop.permute.xlu0 %301
      %303 = vrot.lane.b32.xlu0 %v295, 112
      %v304 = vpop.permute.xlu0 %303
      %vm305 = vcmask 916480
      %v306 = vsel %vm305, %v300, %v302
      %v307 = vsel %vm305, %v302, %v304
      %vm310 = vcmask 64512
      %v312 = vsel %vm310, %v292, 0
      %314 = vmatprep.subr.mxu0 %v307
      %315 = vmatpush1.msra.mxu0 %v306
      %316 = vmatprep.subr.mxu0 0.0
      %317 = vmatpush1.msra.mxu0 0.0
      %318 = vmatprep.subr.mxu0 0.0
      %319 = vmatpush1.msra.mxu0 0.0
      %320 = vmatprep.subr.mxu0 0.0
      %321 = vmatpush1.msra.mxu0 0.0
      %322 = vmatprep.subr.mxu0 0.0
      %323 = vmatpush1.msra.mxu0 0.0
      %324 = vmatprep.subr.mxu0 0.0
      %325 = vmatpush1.msra.mxu0 0.0
      %326 = vmatprep.subr.mxu0 0.0
      %327 = vmatpush1.msra.mxu0 0.0
      %328 = vmatprep.subr.mxu0 0.0
      %329 = vmatpush1.msra.mxu0 0.0
      %330 = vmatprep.subr.mxu0 0.0
      %331 = vmatpush1.msra.mxu0 0.0
      %332 = vmatprep.subr.mxu0 0.0
      %333 = vmatpush1.msra.mxu0 0.0
      %334 = vmatprep.subr.mxu0 0.0
      %335 = vmatpush1.msra.mxu0 0.0
      %336 = vmatprep.subr.mxu0 0.0
      %337 = vmatpush1.msra.mxu0 0.0
      %338 = vmatprep.subr.mxu0 0.0
      %339 = vmatpush1.msra.mxu0 0.0
      %340 = vmatprep.subr.mxu0 0.0
      %341 = vmatpush1.msra.mxu0 0.0
      %342 = vmatprep.subr.mxu0 0.0
      %343 = vmatpush1.msra.mxu0 0.0
      %344 = vmatprep.subr.mxu0 0.0
      %345 = vmatpush1.msra.mxu0 0.0
      %346 = vmatprep.subr.mxu0 0.0
      %347 = vmatpush1.msra.mxu0 0.0
      %348 = vmatprep.subr.mxu0 0.0
      %349 = vmatpush1.msra.mxu0 0.0
      %350 = vmatprep.subr.mxu0 0.0
      %351 = vmatpush1.msra.mxu0 0.0
      %352 = vmatprep.subr.mxu0 0.0
      %353 = vmatpush1.msra.mxu0 0.0
      %354 = vmatprep.subr.mxu0 0.0
      %355 = vmatpush1.msra.mxu0 0.0
      %356 = vmatprep.subr.mxu0 0.0
      %357 = vmatpush1.msra.mxu0 0.0
      %358 = vmatprep.subr.mxu0 0.0
      %359 = vmatpush1.msra.mxu0 0.0
      %360 = vmatprep.subr.mxu0 0.0
      %361 = vmatpush1.msra.mxu0 0.0
      %362 = vmatprep.subr.mxu0 0.0
      %363 = vmatpush1.msra.mxu0 0.0
      %364 = vmatprep.subr.mxu0 0.0
      %365 = vmatpush1.msra.mxu0 0.0
      %366 = vmatprep.subr.mxu0 0.0
      %367 = vmatpush1.msra.mxu0 0.0
      %368 = vmatprep.subr.mxu0 0.0
      %369 = vmatpush1.msra.mxu0 0.0
      %370 = vmatprep.subr.mxu0 0.0
      %371 = vmatpush1.msra.mxu0 0.0
      %372 = vmatprep.subr.mxu0 0.0
      %373 = vmatpush1.msra.mxu0 0.0
      %374 = vmatprep.subr.mxu0 0.0
      %375 = vmatpush1.msra.mxu0 0.0
      %376 = vmatprep.subr.mxu0 0.0
      %377 = vmatpush1.msra.mxu0 0.0
      %378 = vmatprep.mubr.f32.mxu0 0.0
      %379 = vmatmul.mubr.f32.gmra.mrb[0].mxu0 %v312
      %v380 = vpop.f32.mrb[0].mxu0
      %v381 = vadd.f32 0.0, %v380
      %v382 = vpop.f32.mrb[0].mxu0
      %v383 = vadd.f32 0.0, %v382
      %384 = vdwg.mxu0
      %v386 = vsel %vm310, %v290, 0
      %388 = vmatprep.subr.mxu0 %v285
      %389 = vmatpush1.msra.mxu0 %v284
      %390 = vmatprep.subr.mxu0 0.0
      %391 = vmatpush1.msra.mxu0 0.0
      %392 = vmatprep.subr.mxu0 0.0
      %393 = vmatpush1.msra.mxu0 0.0
      %394 = vmatprep.subr.mxu0 0.0
      %395 = vmatpush1.msra.mxu0 0.0
      %396 = vmatprep.subr.mxu0 0.0
      %397 = vmatpush1.msra.mxu0 0.0
      %398 = vmatprep.subr.mxu0 0.0
      %399 = vmatpush1.msra.mxu0 0.0
      %400 = vmatprep.subr.mxu0 0.0
      %401 = vmatpush1.msra.mxu0 0.0
      %402 = vmatprep.subr.mxu0 0.0
      %403 = vmatpush1.msra.mxu0 0.0
      %404 = vmatprep.subr.mxu0 0.0
      %405 = vmatpush1.msra.mxu0 0.0
      %406 = vmatprep.subr.mxu0 0.0
      %407 = vmatpush1.msra.mxu0 0.0
      %408 = vmatprep.subr.mxu0 0.0
      %409 = vmatpush1.msra.mxu0 0.0
      %410 = vmatprep.subr.mxu0 0.0
      %411 = vmatpush1.msra.mxu0 0.0
      %412 = vmatprep.subr.mxu0 0.0
      %413 = vmatpush1.msra.mxu0 0.0
      %414 = vmatprep.subr.mxu0 0.0
      %415 = vmatpush1.msra.mxu0 0.0
      %416 = vmatprep.subr.mxu0 0.0
      %417 = vmatpush1.msra.mxu0 0.0
      %418 = vmatprep.subr.mxu0 0.0
      %419 = vmatpush1.msra.mxu0 0.0
      %420 = vmatprep.subr.mxu0 0.0
      %421 = vmatpush1.msra.mxu0 0.0
      %422 = vmatprep.subr.mxu0 0.0
      %423 = vmatpush1.msra.mxu0 0.0
      %424 = vmatprep.subr.mxu0 0.0
      %425 = vmatpush1.msra.mxu0 0.0
      %426 = vmatprep.subr.mxu0 0.0
      %427 = vmatpush1.msra.mxu0 0.0
      %428 = vmatprep.subr.mxu0 0.0
      %429 = vmatpush1.msra.mxu0 0.0
      %430 = vmatprep.subr.mxu0 0.0
      %431 = vmatpush1.msra.mxu0 0.0
      %432 = vmatprep.subr.mxu0 0.0
      %433 = vmatpush1.msra.mxu0 0.0
      %434 = vmatprep.subr.mxu0 0.0
      %435 = vmatpush1.msra.mxu0 0.0
      %436 = vmatprep.subr.mxu0 0.0
      %437 = vmatpush1.msra.mxu0 0.0
      %438 = vmatprep.subr.mxu0 0.0
      %439 = vmatpush1.msra.mxu0 0.0
      %440 = vmatprep.subr.mxu0 0.0
      %441 = vmatpush1.msra.mxu0 0.0
      %442 = vmatprep.subr.mxu0 0.0
      %443 = vmatpush1.msra.mxu0 0.0
      %444 = vmatprep.subr.mxu0 0.0
      %445 = vmatpush1.msra.mxu0 0.0
      %446 = vmatprep.subr.mxu0 0.0
      %447 = vmatpush1.msra.mxu0 0.0
      %448 = vmatprep.subr.mxu0 0.0
      %449 = vmatpush1.msra.mxu0 0.0
      %450 = vmatprep.subr.mxu0 0.0
      %451 = vmatpush1.msra.mxu0 0.0
      %452 = vmatprep.mubr.f32.mxu0 0.0
      %453 = vmatmul.mubr.f32.gmra.mrb[0].mxu0 %v386
      %v454 = vpop.f32.mrb[0].mxu0
      %v455 = vadd.f32 %v381, %v454
      %v456 = vpop.f32.mrb[0].mxu0
      %v457 = vadd.f32 %v383, %v456
      %458 = vdwg.mxu0
      %s459 = scalar_lea.vmem %s2, 16
      %v460 = vld [vmem:[%s459] sm:$0xff]
      %461 = vrot.lane.b32.xlu0 %v293, 96
      %v462 = vpop.permute.xlu0 %461
      %463 = vrot.lane.b32.xlu0 %v294, 96
      %v464 = vpop.permute.xlu0 %463
      %465 = vrot.lane.b32.xlu0 %v295, 96
      %v466 = vpop.permute.xlu0 %465
      %vm467 = vcmask 785408
      %v468 = vsel %vm467, %v462, %v464
      %v469 = vsel %vm467, %v464, %v466
      %v473 = vsel %vm310, %v460, 0
      %475 = vmatprep.subr.mxu0 %v469
      %476 = vmatpush1.msra.mxu0 %v468
      %477 = vmatprep.subr.mxu0 0.0
      %478 = vmatpush1.msra.mxu0 0.0
      %479 = vmatprep.subr.mxu0 0.0
      %480 = vmatpush1.msra.mxu0 0.0
      %481 = vmatprep.subr.mxu0 0.0
      %482 = vmatpush1.msra.mxu0 0.0
      %483 = vmatprep.subr.mxu0 0.0
      %484 = vmatpush1.msra.mxu0 0.0
      %485 = vmatprep.subr.mxu0 0.0
      %486 = vmatpush1.msra.mxu0 0.0
      %487 = vmatprep.subr.mxu0 0.0
      %488 = vmatpush1.msra.mxu0 0.0
      %489 = vmatprep.subr.mxu0 0.0
      %490 = vmatpush1.msra.mxu0 0.0
      %491 = vmatprep.subr.mxu0 0.0
      %492 = vmatpush1.msra.mxu0 0.0
      %493 = vmatprep.subr.mxu0 0.0
      %494 = vmatpush1.msra.mxu0 0.0
      %495 = vmatprep.subr.mxu0 0.0
      %496 = vmatpush1.msra.mxu0 0.0
      %497 = vmatprep.subr.mxu0 0.0
      %498 = vmatpush1.msra.mxu0 0.0
      %499 = vmatprep.subr.mxu0 0.0
      %500 = vmatpush1.msra.mxu0 0.0
      %501 = vmatprep.subr.mxu0 0.0
      %502 = vmatpush1.msra.mxu0 0.0
      %503 = vmatprep.subr.mxu0 0.0
      %504 = vmatpush1.msra.mxu0 0.0
      %505 = vmatprep.subr.mxu0 0.0
      %506 = vmatpush1.msra.mxu0 0.0
      %507 = vmatprep.subr.mxu0 0.0
      %508 = vmatpush1.msra.mxu0 0.0
      %509 = vmatprep.subr.mxu0 0.0
      %510 = vmatpush1.msra.mxu0 0.0
      %511 = vmatprep.subr.mxu0 0.0
      %512 = vmatpush1.msra.mxu0 0.0
      %513 = vmatprep.subr.mxu0 0.0
      %514 = vmatpush1.msra.mxu0 0.0
      %515 = vmatprep.subr.mxu0 0.0
      %516 = vmatpush1.msra.mxu0 0.0
      %517 = vmatprep.subr.mxu0 0.0
      %518 = vmatpush1.msra.mxu0 0.0
      %519 = vmatprep.subr.mxu0 0.0
      %520 = vmatpush1.msra.mxu0 0.0
      %521 = vmatprep.subr.mxu0 0.0
      %522 = vmatpush1.msra.mxu0 0.0
      %523 = vmatprep.subr.mxu0 0.0
      %524 = vmatpush1.msra.mxu0 0.0
      %525 = vmatprep.subr.mxu0 0.0
      %526 = vmatpush1.msra.mxu0 0.0
      %527 = vmatprep.subr.mxu0 0.0
      %528 = vmatpush1.msra.mxu0 0.0
      %529 = vmatprep.subr.mxu0 0.0
      %530 = vmatpush1.msra.mxu0 0.0
      %531 = vmatprep.subr.mxu0 0.0
      %532 = vmatpush1.msra.mxu0 0.0
      %533 = vmatprep.subr.mxu0 0.0
      %534 = vmatpush1.msra.mxu0 0.0
      %535 = vmatprep.subr.mxu0 0.0
      %536 = vmatpush1.msra.mxu0 0.0
      %537 = vmatprep.subr.mxu0 0.0
      %538 = vmatpush1.msra.mxu0 0.0
      %539 = vmatprep.mubr.f32.mxu0 0.0
      %540 = vmatmul.mubr.f32.gmra.mrb[0].mxu0 %v473
      %v541 = vpop.f32.mrb[0].mxu0
      %v542 = vadd.f32 0.0, %v541
      %v543 = vpop.f32.mrb[0].mxu0
      %v544 = vadd.f32 0.0, %v543
      %545 = vdwg.mxu0
      %v546 = vadd.f32 %v455, %v542
      %v547 = vadd.f32 %v457, %v544
      %v548 = vld [vmem:[%s4] sm:$0x3]
      %v550 = vlaneseq
      %v551 = vshrl.u32 %v550, 7
      %v552 = vsub.s32 0, %v551
      %v553 = vrot.slane %v548, %v552
      %v554 = vlaneseq
      %v555 = vshrl.u32 %v554, 7
      %v556 = vsub.s32 1, %v555
      %v557 = vrot.slane %v548, %v556
      %v560 = vmul.f32 %v546, %v553
      %v561 = vmul.f32 %v547, %v557
      %v562 = vld [vmem:[%s3] sm:$0xff]
      %564 = vset.pattern.permute.xlu0 0
      %565 = vperm.xlu0 %564, %v562
      %v566 = vpop.permute.xlu0 %565
      %v568 = vmul.f32 %v566, %v553
      %v569 = vmul.f32 %v566, %v557
      %v570 = vadd.f32 %v560, %v568
      %v571 = vadd.f32 %v561, %v569
      %572 = vst [vmem:[%s259] sm:$0xff] %v570
      %573 = vst [vmem:[%s259 + $0x8] sm:$0xff] %v571
      %v574 = vadd.f32 %v560, %v561
      %575 = vadd.xlane.f32.xlu0 %v574
      %v576 = vpop.xlane.xlu0 %575
      %v577 = vmul.f32 %v560, %v560
      %v578 = vmul.f32 %v561, %v561
      %v579 = vadd.f32 %v577, %v578
      %580 = vadd.xlane.f32.xlu0 %v579
      %v581 = vpop.xlane.xlu0 %580
      %vm582 = vcmask 7168
      %583 = vst.msk [vmem:[%s264] sm:$0xff] %vm582, %v576
      %584 = vst.msk [vmem:[%s264 + $0x8] sm:$0xff] %vm582, %v581
      %p585 = scmp.lt.s32.totalorder %s18, 1
      %s586 = scalar_select %p585, %s18, 1
      %s587 = smul.addr %s586, 2
      %s588 = smul.addr %s587, 8
      %s589 = scalar_lea.vmem %s5, %s588
      %p590 = scmp.lt.s32.totalorder %s18, 1
      %s591 = scalar_select %p590, %s18, 1
      %s592 = smul.addr %s591, 2
      %s593 = smul.addr %s592, 8
      %s594 = scalar_lea.vmem %s6, %s593
      // Predicated region
      $region41: #{basic_block_forward.6} parent=39 // pred_check
        %p595 = pneg %p146
      $region42: #{basic_block_forward.6} parent=39 // pred_check_branch
        %597 = sbr.rel (%p595) target = $region44
      $region43: #{basic_block_forward.6} parent=39 // pred_region
        _
      $region44: #{basic_block_forward.6} parent=39 // pred_fallthru
        _
      // Predicated region
      $region45: #{basic_block_forward.6} parent=39 // pred_check
        %p598 = pneg %p172
      $region46: #{basic_block_forward.6} parent=39 // pred_check_branch
        %600 = sbr.rel (%p598) target = $region48
      $region47: #{basic_block_forward.6} parent=39 // pred_region
        _
      $region48: #{basic_block_forward.6} parent=39 // pred_fallthru
        _
    $region40: #{basic_block_forward.6} parent=5 // pred_fallthru
      _
    %p601 = scmp.le.s32.totalorder 2, %s13
    // Predicated region
    $region49: #{basic_block_forward.6} parent=5 // pred_check
      %p602 = pneg %p601
    $region50: #{basic_block_forward.6} parent=5 // pred_check_branch
      %604 = sbr.rel (%p602) target = $region52
    $region51: #{basic_block_forward.6} parent=5 // pred_region
      %s605 = ssub.s32 %s13, 2
      // Predicated region
      $region53: #{basic_block_forward.6} parent=51 // pred_check
        %p606 = pneg %p152
      $region54: #{basic_block_forward.6} parent=51 // pred_check_branch
        %608 = sbr.rel (%p606) target = $region56
      $region55: #{basic_block_forward.6} parent=51 // pred_region
        %p609 = scmp.lt.s32.totalorder %s19, 1
        %s610 = scalar_select %p609, %s19, 1
        %s611 = smul.addr %s610, 2
        %s612 = smul.addr %s611, 8
        %s613 = scalar_lea.vmem %s5, %s612
      $region56: #{basic_block_forward.6} parent=51 // pred_fallthru
        _
      // Predicated region
      $region57: #{basic_block_forward.6} parent=51 // pred_check
        %p614 = pneg %p178
      $region58: #{basic_block_forward.6} parent=51 // pred_check_branch
        %616 = sbr.rel (%p614) target = $region60
      $region59: #{basic_block_forward.6} parent=51 // pred_region
        %p617 = scmp.lt.s32.totalorder %s19, 1
        %s618 = scalar_select %p617, %s19, 1
        %s619 = smul.addr %s618, 2
        %s620 = smul.addr %s619, 8
        %s621 = scalar_lea.vmem %s6, %s620
      $region60: #{basic_block_forward.6} parent=51 // pred_fallthru
        _
    $region52: #{basic_block_forward.6} parent=5 // pred_fallthru
      _
  $region6: #{basic_block_forward.6} parent=0 // loop_footer
    %s17 = sadd.s32 1, %s13
  $region7: #{basic_block_forward.6} parent=0 // loop_footer_branch
    %12 = sbr.rel target = $region3
  $region8: #{basic_block_forward.6} parent=0 // loop_exit
    _

// kernel: basic_block_forward.7
$region0: #{basic_block_forward.7}
  #allocation0 [shape = 'u32[]', space=smem, size = 0x4, offset = 0x4, fixed_abs, tag = 'smem constant byte address 0x4 - core index']
  #allocation1 [shape = 'u32[144,128]{1,0:T(1,128)}', space=vmem, size = 0x12000, scoped, tag = 'internal scratch']
  #allocation2 [shape = 'f32[8,258]{1,0:T(8,128)}', space=vmem, size = 0x3000, scoped, tag = 'scratch operand']
  %s0 = inlined_call_operand.vmem [shape: f32[2,8,256], index: 0, kind: input, shape index: {}]
  %s1 = inlined_call_operand.vmem [shape: f32[2,8,1], index: 1, kind: input, shape index: {}]
  %s2 = inlined_call_operand.vmem [shape: f32[3,16,8], index: 2, kind: input, shape index: {}]
  %s3 = inlined_call_operand.vmem [shape: f32[16,1], index: 3, kind: input, shape index: {}]
  %s4 = inlined_call_operand.vmem [shape: f32[1,256], index: 4, kind: input, shape index: {}]
  %s5 = inlined_call_operand.vmem [shape: f32[2,16,256], index: 5, kind: output, shape index: {0}]
  %s6 = inlined_call_operand.vmem [shape: f32[2,1,32,1], index: 6, kind: output, shape index: {1}]
  %7 = xla_tuple %s5, %s6
  %s8 = sld [smem:[#allocation0]]
  $region61: #{basic_block_forward.7} parent=0
    _
  %s10 = ssub.s32 1, %s8
  %s11 = scalar_select 0, %s10, %s8
  loop: start=0, step=1, limit=4
  $region2: #{basic_block_forward.7} parent=0 // loop_pre_header
    _
  $region3: #{basic_block_forward.7} parent=0 // loop_header
    %s13 = sphi 0, %s17
    %p14 = scmp.ge.s32.totalorder %s13, 4
    %s23 = sphi 0, %s25
    %s26 = sphi 0, %s23
    %s27 = sphi 0, %s26
    %s43 = sphi 0, %s27
    %s47 = sphi 0, %s47
    %s49 = sphi 0, %s47
    %s50 = sphi 0, %s49
    %s64 = sphi 0, %s50
    %s68 = sphi 0, %s68
    %s70 = sphi 0, %s68
    %s71 = sphi 0, %s70
    %s85 = sphi 0, %s71
    %s89 = sphi 0, %s89
    %s91 = sphi 0, %s89
    %s92 = sphi 0, %s91
    %s106 = sphi 0, %s92
    %s110 = sphi 0, %s110
    %s112 = sphi 0, %s110
    %s113 = sphi 0, %s112
    %s127 = sphi 0, %s113
    %s133 = sphi 0, %s135
    %s136 = sphi 0, %s133
    %s137 = sphi 0, %s136
    %s153 = sphi 0, %s137
    %s159 = sphi 0, %s161
    %s162 = sphi 0, %s159
    %s163 = sphi 0, %s162
    %s179 = sphi 0, %s163
  $region4: #{basic_block_forward.7} parent=0 // loop_header_branch
    %16 = sbr.rel (%p14) target = $region8
  $region5: #{basic_block_forward.7} parent=0 // loop_body
    %s18 = ssub.s32 %s13, 1
    %s19 = ssub.s32 %s13, 2
    %s20 = sadd.s32 %s13, 1
    %s21 = ssub.s32 %s13, %s20
    %p22 = scmp.eq.s32.totalorder %s21, 0
    %s24 = sadd.s32 %s23, 1
    %s25 = scalar_select %p22, %s23, %s24
    %p28 = pneg %p22
    %p29 = scmp.eq.s32.totalorder %s13, 1
    %p30 = por %p28, %p29
    %p31 = scmp.ne.s32.totalorder %s23, %s26
    %p32 = scmp.eq.s32.totalorder %s13, 0
    %p33 = por %p31, %p32
    %p34 = scmp.ne.s32.totalorder %s23, %s26
    %p35 = scmp.eq.s32.totalorder %s18, 1
    %p36 = por %p34, %p35
    %p37 = scmp.ne.s32.totalorder %s26, %s27
    %p38 = scmp.eq.s32.totalorder %s18, 0
    %p39 = por %p37, %p38
    %p40 = scmp.ne.s32.totalorder %s26, %s27
    %p41 = scmp.eq.s32.totalorder %s19, 1
    %p42 = por %p40, %p41
    %p44 = scmp.ne.s32.totalorder %s27, %s43
    %p45 = scmp.eq.s32.totalorder %s19, 0
    %p46 = por %p44, %p45
    %s48 = sadd.s32 %s47, 1
    %p51 = scmp.eq.s32.totalorder %s13, 1
    %p52 = scmp.ne.s32.totalorder %s47, %s49
    %p53 = scmp.eq.s32.totalorder %s13, 0
    %p54 = por %p52, %p53
    %p55 = scmp.ne.s32.totalorder %s47, %s49
    %p56 = scmp.eq.s32.totalorder %s18, 1
    %p57 = por %p55, %p56
    %p58 = scmp.ne.s32.totalorder %s49, %s50
    %p59 = scmp.eq.s32.totalorder %s18, 0
    %p60 = por %p58, %p59
    %p61 = scmp.ne.s32.totalorder %s49, %s50
    %p62 = scmp.eq.s32.totalorder %s19, 1
    %p63 = por %p61, %p62
    %p65 = scmp.ne.s32.totalorder %s50, %s64
    %p66 = scmp.eq.s32.totalorder %s19, 0
    %p67 = por %p65, %p66
    %s69 = sadd.s32 %s68, 1
    %p72 = scmp.eq.s32.totalorder %s13, 1
    %p73 = scmp.ne.s32.totalorder %s68, %s70
    %p74 = scmp.eq.s32.totalorder %s13, 0
    %p75 = por %p73, %p74
    %p76 = scmp.ne.s32.totalorder %s68, %s70
    %p77 = scmp.eq.s32.totalorder %s18, 1
    %p78 = por %p76, %p77
    %p79 = scmp.ne.s32.totalorder %s70, %s71
    %p80 = scmp.eq.s32.totalorder %s18, 0
    %p81 = por %p79, %p80
    %p82 = scmp.ne.s32.totalorder %s70, %s71
    %p83 = scmp.eq.s32.totalorder %s19, 1
    %p84 = por %p82, %p83
    %p86 = scmp.ne.s32.totalorder %s71, %s85
    %p87 = scmp.eq.s32.totalorder %s19, 0
    %p88 = por %p86, %p87
    %s90 = sadd.s32 %s89, 1
    %p93 = scmp.eq.s32.totalorder %s13, 1
    %p94 = scmp.ne.s32.totalorder %s89, %s91
    %p95 = scmp.eq.s32.totalorder %s13, 0
    %p96 = por %p94, %p95
    %p97 = scmp.ne.s32.totalorder %s89, %s91
    %p98 = scmp.eq.s32.totalorder %s18, 1
    %p99 = por %p97, %p98
    %p100 = scmp.ne.s32.totalorder %s91, %s92
    %p101 = scmp.eq.s32.totalorder %s18, 0
    %p102 = por %p100, %p101
    %p103 = scmp.ne.s32.totalorder %s91, %s92
    %p104 = scmp.eq.s32.totalorder %s19, 1
    %p105 = por %p103, %p104
    %p107 = scmp.ne.s32.totalorder %s92, %s106
    %p108 = scmp.eq.s32.totalorder %s19, 0
    %p109 = por %p107, %p108
    %s111 = sadd.s32 %s110, 1
    %p114 = scmp.eq.s32.totalorder %s13, 1
    %p115 = scmp.ne.s32.totalorder %s110, %s112
    %p116 = scmp.eq.s32.totalorder %s13, 0
    %p117 = por %p115, %p116
    %p118 = scmp.ne.s32.totalorder %s110, %s112
    %p119 = scmp.eq.s32.totalorder %s18, 1
    %p120 = por %p118, %p119
    %p121 = scmp.ne.s32.totalorder %s112, %s113
    %p122 = scmp.eq.s32.totalorder %s18, 0
    %p123 = por %p121, %p122
    %p124 = scmp.ne.s32.totalorder %s112, %s113
    %p125 = scmp.eq.s32.totalorder %s19, 1
    %p126 = por %p124, %p125
    %p128 = scmp.ne.s32.totalorder %s113, %s127
    %p129 = scmp.eq.s32.totalorder %s19, 0
    %p130 = por %p128, %p129
    %s131 = ssub.s32 %s13, %s20
    %p132 = scmp.eq.s32.totalorder %s131, 0
    %s134 = sadd.s32 %s133, 1
    %s135 = scalar_select %p132, %s133, %s134
    %p138 = pneg %p132
    %p139 = scmp.eq.s32.totalorder %s13, 1
    %p140 = por %p138, %p139
    %p141 = scmp.ne.s32.totalorder %s133, %s136
    %p142 = scmp.eq.s32.totalorder %s13, 0
    %p143 = por %p141, %p142
    %p144 = scmp.ne.s32.totalorder %s133, %s136
    %p145 = scmp.eq.s32.totalorder %s18, 1
    %p146 = por %p144, %p145
    %p147 = scmp.ne.s32.totalorder %s136, %s137
    %p148 = scmp.eq.s32.totalorder %s18, 0
    %p149 = por %p147, %p148
    %p150 = scmp.ne.s32.totalorder %s136, %s137
    %p151 = scmp.eq.s32.totalorder %s19, 1
    %p152 = por %p150, %p151
    %p154 = scmp.ne.s32.totalorder %s137, %s153
    %p155 = scmp.eq.s32.totalorder %s19, 0
    %p156 = por %p154, %p155
    %s157 = ssub.s32 %s13, %s20
    %p158 = scmp.eq.s32.totalorder %s157, 0
    %s160 = sadd.s32 %s159, 1
    %s161 = scalar_select %p158, %s159, %s160
    %p164 = pneg %p158
    %p165 = scmp.eq.s32.totalorder %s13, 1
    %p166 = por %p164, %p165
    %p167 = scmp.ne.s32.totalorder %s159, %s162
    %p168 = scmp.eq.s32.totalorder %s13, 0
    %p169 = por %p167, %p168
    %p170 = scmp.ne.s32.totalorder %s159, %s162
    %p171 = scmp.eq.s32.totalorder %s18, 1
    %p172 = por %p170, %p171
    %p173 = scmp.ne.s32.totalorder %s162, %s163
    %p174 = scmp.eq.s32.totalorder %s18, 0
    %p175 = por %p173, %p174
    %p176 = scmp.ne.s32.totalorder %s162, %s163
    %p177 = scmp.eq.s32.totalorder %s19, 1
    %p178 = por %p176, %p177
    %p180 = scmp.ne.s32.totalorder %s163, %s179
    %p181 = scmp.eq.s32.totalorder %s19, 0
    %p182 = por %p180, %p181
    %p183 = scmp.le.s32.totalorder 1, %s13
    %p184 = scmp.lt.s32.totalorder %s13, 3
    %p185 = pnand %p183, %p184
    %p186 = pneg %p185
    // Predicated region
    $region9: #{basic_block_forward.7} parent=5 // pred_check
      _
    $region10: #{basic_block_forward.7} parent=5 // pred_check_branch
      %188 = sbr.rel (%p185) target = $region12
    $region11: #{basic_block_forward.7} parent=5 // pred_region
      %s189 = ssub.s32 %s13, 1
      // Predicated region
      $region13: #{basic_block_forward.7} parent=11 // pred_check
        %p190 = pneg %p60
      $region14: #{basic_block_forward.7} parent=11 // pred_check_branch
        %192 = sbr.rel (%p190) target = $region16
      $region15: #{basic_block_forward.7} parent=11 // pred_region
        _
      $region16: #{basic_block_forward.7} parent=11 // pred_fallthru
        _
      // Predicated region
      $region17: #{basic_block_forward.7} parent=11 // pred_check
        %p193 = pneg %p81
      $region18: #{basic_block_forward.7} parent=11 // pred_check_branch
        %195 = sbr.rel (%p193) target = $region20
      $region19: #{basic_block_forward.7} parent=11 // pred_region
        _
      $region20: #{basic_block_forward.7} parent=11 // pred_fallthru
        _
      // Predicated region
      $region21: #{basic_block_forward.7} parent=11 // pred_check
        %p196 = pneg %p102
      $region22: #{basic_block_forward.7} parent=11 // pred_check_branch
        %198 = sbr.rel (%p196) target = $region24
      $region23: #{basic_block_forward.7} parent=11 // pred_region
        _
      $region24: #{basic_block_forward.7} parent=11 // pred_fallthru
        _
      // Predicated region
      $region25: #{basic_block_forward.7} parent=11 // pred_check
        %p199 = pneg %p123
      $region26: #{basic_block_forward.7} parent=11 // pred_check_branch
        %201 = sbr.rel (%p199) target = $region28
      $region27: #{basic_block_forward.7} parent=11 // pred_region
        _
      $region28: #{basic_block_forward.7} parent=11 // pred_fallthru
        _
    $region12: #{basic_block_forward.7} parent=5 // pred_fallthru
      _
    %p202 = scmp.lt.s32.totalorder %s13, 2
    // Predicated region
    $region29: #{basic_block_forward.7} parent=5 // pred_check
      %p203 = pneg %p202
    $region30: #{basic_block_forward.7} parent=5 // pred_check_branch
      %205 = sbr.rel (%p203) target = $region32
    $region31: #{basic_block_forward.7} parent=5 // pred_region
      // Predicated region
      $region33: #{basic_block_forward.7} parent=31 // pred_check
        %p206 = pneg %p33
      $region34: #{basic_block_forward.7} parent=31 // pred_check_branch
        %208 = sbr.rel (%p206) target = $region36
      $region35: #{basic_block_forward.7} parent=31 // pred_region
        %p209 = scmp.lt.s32.totalorder %s13, 1
        %s210 = scalar_select %p209, %s13, 1
        %s211 = smul.addr %s210, 2
        %s212 = smul.addr %s211, 8
        %s213 = scalar_lea.vmem %s0, %s212
      $region36: #{basic_block_forward.7} parent=31 // pred_fallthru
        _
    $region32: #{basic_block_forward.7} parent=5 // pred_fallthru
      _
    %p214 = scmp.le.s32.totalorder 1, %s13
    %p215 = scmp.lt.s32.totalorder %s13, 3
    %p216 = pnand %p214, %p215
    %p217 = pneg %p216
    // Predicated region
    $region37: #{basic_block_forward.7} parent=5 // pred_check
      _
    $region38: #{basic_block_forward.7} parent=5 // pred_check_branch
      %219 = sbr.rel (%p216) target = $region40
    $region39: #{basic_block_forward.7} parent=5 // pred_region
      %s220 = ssub.s32 %s13, 1
      %p221 = scmp.lt.s32.totalorder %s18, 1
      %s222 = scalar_select %p221, %s18, 1
      %s223 = smul.addr %s222, 2
      %s224 = smul.addr %s223, 8
      %s225 = scalar_lea.vmem %s0, %s224
      %p226 = pneg %p39
      %p227 = pneg %p36
      %p228 = pneg %p60
      %p229 = pneg %p57
      %p230 = pneg %p81
      %p231 = pneg %p78
      %p232 = pneg %p102
      %p233 = pneg %p99
      %p234 = pneg %p123
      %p235 = pneg %p120
      %p236 = pneg %p149
      %p237 = pneg %p146
      %p238 = scmp.lt.s32.totalorder %s18, 1
      %s239 = scalar_select %p238, %s18, 1
      %s240 = smul.addr %s239, 4
      %s241 = smul.addr %s240, 8
      %s242 = scalar_lea.vmem %s5, %s241
      %p243 = pneg %p175
      %p244 = pneg %p172
      %p245 = scmp.lt.s32.totalorder %s18, 1
      %s246 = scalar_select %p245, %s18, 1
      %s247 = smul.addr %s246, 4
      %s248 = smul.addr %s247, 8
      %s249 = scalar_lea.vmem %s6, %s248
      %p250 = scmp.lt.s32.totalorder %s18, 1
      %s251 = scalar_select %p250, %s18, 1
      %s252 = smul.addr %s251, 2
      %s253 = smul.addr %s252, 8
      %s254 = scalar_lea.vmem %s0, %s253
      %p255 = scmp.lt.s32.totalorder %s18, 1
      %s256 = scalar_select %p255, %s18, 1
      %s257 = smul.addr %s256, 4
      %s258 = smul.addr %s257, 8
      %s259 = scalar_lea.vmem %s5, %s258
      %p260 = scmp.lt.s32.totalorder %s18, 1
      %s261 = scalar_select %p260, %s18, 1
      %s262 = smul.addr %s261, 4
      %s263 = smul.addr %s262, 8
      %s264 = scalar_lea.vmem %s6, %s263
      %v265 = vld [vmem:[%s254] sm:$0xff]
      %v266 = vld [vmem:[%s254 + $0x8] sm:$0xff]
      %v267 = vld [vmem:[%s1] sm:$0xff]
      %269 = vset.pattern.permute.xlu0 0
      %270 = vperm.xlu0 %269, %v267
      %v271 = vpop.permute.xlu0 %270
      %v273 = vmul.f32 %v265, %v271
      %v274 = vmul.f32 %v266, %v271
      %s275 = scalar_lea.vmem %s1, 8
      %v276 = vld [vmem:[%s275] sm:$0xff]
      %278 = vset.pattern.permute.xlu0 0
      %279 = vperm.xlu0 %278, %v276
      %v280 = vpop.permute.xlu0 %279
      %v282 = vadd.f32 %v273, %v280
      %v283 = vadd.f32 %v274, %v280
      %v284 = vmax.f32 %v282, 0.0
      %v285 = vmax.f32 %v283, 0.0
      %286 = vst [vmem:[#allocation2] sm:$0xff] %v284
      %287 = vst [vmem:[#allocation2 + $0x8] sm:$0xff] %v285
      %vm288 = vcmask 15360
      %289 = vst.msk [vmem:[#allocation2 + $0x10] sm:$0xff] %vm288, 0.0
      %v290 = vld [vmem:[%s2] sm:$0xff]
      %v291 = vld [vmem:[%s2 + $0x8] sm:$0xff]
      %s292 = scalar_lea.vmem %s2, 16
      %v293 = vld [vmem:[%s292] sm:$0xff]
      %v294 = vld [vmem:[%s292 + $0x8] sm:$0xff]
      %v295 = vld [vmem:[#allocation2] sm:$0xff]
      %v296 = vld [vmem:[#allocation2 + $0x8] sm:$0xff]
      %v297 = vld [vmem:[#allocation2 + $0x10] sm:$0xff]
      %301 = vrot.lane.b32.xlu0 %v295, 127
      %v302 = vpop.permute.xlu0 %301
      %303 = vrot.lane.b32.xlu0 %v296, 127
      %v304 = vpop.permute.xlu0 %303
      %305 = vrot.lane.b32.xlu0 %v297, 127
      %v306 = vpop.permute.xlu0 %305
      %vm307 = vcmask 1039360
      %v308 = vsel %vm307, %v302, %v304
      %v309 = vsel %vm307, %v304, %v306
      %vm312 = vcmask 64512
      %v314 = vsel %vm312, %v293, 0
      %v317 = vsel %vm312, %v294, 0
      %319 = vmatprep.subr.mxu0 %v309
      %320 = vmatpush1.msra.mxu0 %v308
      %321 = vmatprep.subr.mxu0 0.0
      %322 = vmatpush1.msra.mxu0 0.0
      %323 = vmatprep.subr.mxu0 0.0
      %324 = vmatpush1.msra.mxu0 0.0
      %325 = vmatprep.subr.mxu0 0.0
      %326 = vmatpush1.msra.mxu0 0.0
      %327 = vmatprep.subr.mxu0 0.0
      %328 = vmatpush1.msra.mxu0 0.0
      %329 = vmatprep.subr.mxu0 0.0
      %330 = vmatpush1.msra.mxu0 0.0
      %331 = vmatprep.subr.mxu0 0.0
      %332 = vmatpush1.msra.mxu0 0.0
      %333 = vmatprep.subr.mxu0 0.0
      %334 = vmatpush1.msra.mxu0 0.0
      %335 = vmatprep.subr.mxu0 0.0
      %336 = vmatpush1.msra.mxu0 0.0
      %337 = vmatprep.subr.mxu0 0.0
      %338 = vmatpush1.msra.mxu0 0.0
      %339 = vmatprep.subr.mxu0 0.0
      %340 = vmatpush1.msra.mxu0 0.0
      %341 = vmatprep.subr.mxu0 0.0
      %342 = vmatpush1.msra.mxu0 0.0
      %343 = vmatprep.subr.mxu0 0.0
      %344 = vmatpush1.msra.mxu0 0.0
      %345 = vmatprep.subr.mxu0 0.0
      %346 = vmatpush1.msra.mxu0 0.0
      %347 = vmatprep.subr.mxu0 0.0
      %348 = vmatpush1.msra.mxu0 0.0
      %349 = vmatprep.subr.mxu0 0.0
      %350 = vmatpush1.msra.mxu0 0.0
      %351 = vmatprep.subr.mxu0 0.0
      %352 = vmatpush1.msra.mxu0 0.0
      %353 = vmatprep.subr.mxu0 0.0
      %354 = vmatpush1.msra.mxu0 0.0
      %355 = vmatprep.subr.mxu0 0.0
      %356 = vmatpush1.msra.mxu0 0.0
      %357 = vmatprep.subr.mxu0 0.0
      %358 = vmatpush1.msra.mxu0 0.0
      %359 = vmatprep.subr.mxu0 0.0
      %360 = vmatpush1.msra.mxu0 0.0
      %361 = vmatprep.subr.mxu0 0.0
      %362 = vmatpush1.msra.mxu0 0.0
      %363 = vmatprep.subr.mxu0 0.0
      %364 = vmatpush1.msra.mxu0 0.0
      %365 = vmatprep.subr.mxu0 0.0
      %366 = vmatpush1.msra.mxu0 0.0
      %367 = vmatprep.subr.mxu0 0.0
      %368 = vmatpush1.msra.mxu0 0.0
      %369 = vmatprep.subr.mxu0 0.0
      %370 = vmatpush1.msra.mxu0 0.0
      %371 = vmatprep.subr.mxu0 0.0
      %372 = vmatpush1.msra.mxu0 0.0
      %373 = vmatprep.subr.mxu0 0.0
      %374 = vmatpush1.msra.mxu0 0.0
      %375 = vmatprep.subr.mxu0 0.0
      %376 = vmatpush1.msra.mxu0 0.0
      %377 = vmatprep.subr.mxu0 0.0
      %378 = vmatpush1.msra.mxu0 0.0
      %379 = vmatprep.subr.mxu0 0.0
      %380 = vmatpush1.msra.mxu0 0.0
      %381 = vmatprep.subr.mxu0 0.0
      %382 = vmatpush1.msra.mxu0 0.0
      %383 = vmatprep.mubr.f32.mxu0 0.0
      %384 = vmatmul.mubr.f32.gmra.mrb[0].mxu0 %v314
      %v385 = vpop.f32.mrb[0].mxu0
      %v386 = vadd.f32 0.0, %v385
      %v387 = vpop.f32.mrb[0].mxu0
      %v388 = vadd.f32 0.0, %v387
      %389 = vmatprep.mubr.f32.mxu0 0.0
      %390 = vmatmul.mubr.f32.gmra.mrb[0].mxu0 %v317
      %v391 = vpop.f32.mrb[0].mxu0
      %v392 = vadd.f32 0.0, %v391
      %v393 = vpop.f32.mrb[0].mxu0
      %v394 = vadd.f32 0.0, %v393
      %395 = vdwg.mxu0
      %v397 = vsel %vm312, %v290, 0
      %v400 = vsel %vm312, %v291, 0
      %402 = vmatprep.subr.mxu0 %v285
      %403 = vmatpush1.msra.mxu0 %v284
      %404 = vmatprep.subr.mxu0 0.0
      %405 = vmatpush1.msra.mxu0 0.0
      %406 = vmatprep.subr.mxu0 0.0
      %407 = vmatpush1.msra.mxu0 0.0
      %408 = vmatprep.subr.mxu0 0.0
      %409 = vmatpush1.msra.mxu0 0.0
      %410 = vmatprep.subr.mxu0 0.0
      %411 = vmatpush1.msra.mxu0 0.0
      %412 = vmatprep.subr.mxu0 0.0
      %413 = vmatpush1.msra.mxu0 0.0
      %414 = vmatprep.subr.mxu0 0.0
      %415 = vmatpush1.msra.mxu0 0.0
      %416 = vmatprep.subr.mxu0 0.0
      %417 = vmatpush1.msra.mxu0 0.0
      %418 = vmatprep.subr.mxu0 0.0
      %419 = vmatpush1.msra.mxu0 0.0
      %420 = vmatprep.subr.mxu0 0.0
      %421 = vmatpush1.msra.mxu0 0.0
      %422 = vmatprep.subr.mxu0 0.0
      %423 = vmatpush1.msra.mxu0 0.0
      %424 = vmatprep.subr.mxu0 0.0
      %425 = vmatpush1.msra.mxu0 0.0
      %426 = vmatprep.subr.mxu0 0.0
      %427 = vmatpush1.msra.mxu0 0.0
      %428 = vmatprep.subr.mxu0 0.0
      %429 = vmatpush1.msra.mxu0 0.0
      %430 = vmatprep.subr.mxu0 0.0
      %431 = vmatpush1.msra.mxu0 0.0
      %432 = vmatprep.subr.mxu0 0.0
      %433 = vmatpush1.msra.mxu0 0.0
      %434 = vmatprep.subr.mxu0 0.0
      %435 = vmatpush1.msra.mxu0 0.0
      %436 = vmatprep.subr.mxu0 0.0
      %437 = vmatpush1.msra.mxu0 0.0
      %438 = vmatprep.subr.mxu0 0.0
      %439 = vmatpush1.msra.mxu0 0.0
      %440 = vmatprep.subr.mxu0 0.0
      %441 = vmatpush1.msra.mxu0 0.0
      %442 = vmatprep.subr.mxu0 0.0
      %443 = vmatpush1.msra.mxu0 0.0
      %444 = vmatprep.subr.mxu0 0.0
      %445 = vmatpush1.msra.mxu0 0.0
      %446 = vmatprep.subr.mxu0 0.0
      %447 = vmatpush1.msra.mxu0 0.0
      %448 = vmatprep.subr.mxu0 0.0
      %449 = vmatpush1.msra.mxu0 0.0
      %450 = vmatprep.subr.mxu0 0.0
      %451 = vmatpush1.msra.mxu0 0.0
      %452 = vmatprep.subr.mxu0 0.0
      %453 = vmatpush1.msra.mxu0 0.0
      %454 = vmatprep.subr.mxu0 0.0
      %455 = vmatpush1.msra.mxu0 0.0
      %456 = vmatprep.subr.mxu0 0.0
      %457 = vmatpush1.msra.mxu0 0.0
      %458 = vmatprep.subr.mxu0 0.0
      %459 = vmatpush1.msra.mxu0 0.0
      %460 = vmatprep.subr.mxu0 0.0
      %461 = vmatpush1.msra.mxu0 0.0
      %462 = vmatprep.subr.mxu0 0.0
      %463 = vmatpush1.msra.mxu0 0.0
      %464 = vmatprep.subr.mxu0 0.0
      %465 = vmatpush1.msra.mxu0 0.0
      %466 = vmatprep.mubr.f32.mxu0 0.0
      %467 = vmatmul.mubr.f32.gmra.mrb[0].mxu0 %v397
      %v468 = vpop.f32.mrb[0].mxu0
      %v469 = vadd.f32 %v386, %v468
      %v470 = vpop.f32.mrb[0].mxu0
      %v471 = vadd.f32 %v388, %v470
      %472 = vmatprep.mubr.f32.mxu0 0.0
      %473 = vmatmul.mubr.f32.gmra.mrb[0].mxu0 %v400
      %v474 = vpop.f32.mrb[0].mxu0
      %v475 = vadd.f32 %v392, %v474
      %v476 = vpop.f32.mrb[0].mxu0
      %v477 = vadd.f32 %v394, %v476
      %478 = vdwg.mxu0
      %s479 = scalar_lea.vmem %s2, 32
      %v480 = vld [vmem:[%s479] sm:$0xff]
      %v481 = vld [vmem:[%s479 + $0x8] sm:$0xff]
      %482 = vrot.lane.b32.xlu0 %v295, 126
      %v483 = vpop.permute.xlu0 %482
      %484 = vrot.lane.b32.xlu0 %v296, 126
      %v485 = vpop.permute.xlu0 %484
      %486 = vrot.lane.b32.xlu0 %v297, 126
      %v487 = vpop.permute.xlu0 %486
      %vm488 = vcmask 1031168
      %v489 = vsel %vm488, %v483, %v485
      %v490 = vsel %vm488, %v485, %v487
      %v494 = vsel %vm312, %v480, 0
      %v497 = vsel %vm312, %v481, 0
      %499 = vmatprep.subr.mxu0 %v490
      %500 = vmatpush1.msra.mxu0 %v489
      %501 = vmatprep.subr.mxu0 0.0
      %502 = vmatpush1.msra.mxu0 0.0
      %503 = vmatprep.subr.mxu0 0.0
      %504 = vmatpush1.msra.mxu0 0.0
      %505 = vmatprep.subr.mxu0 0.0
      %506 = vmatpush1.msra.mxu0 0.0
      %507 = vmatprep.subr.mxu0 0.0
      %508 = vmatpush1.msra.mxu0 0.0
      %509 = vmatprep.subr.mxu0 0.0
      %510 = vmatpush1.msra.mxu0 0.0
      %511 = vmatprep.subr.mxu0 0.0
      %512 = vmatpush1.msra.mxu0 0.0
      %513 = vmatprep.subr.mxu0 0.0
      %514 = vmatpush1.msra.mxu0 0.0
      %515 = vmatprep.subr.mxu0 0.0
      %516 = vmatpush1.msra.mxu0 0.0
      %517 = vmatprep.subr.mxu0 0.0
      %518 = vmatpush1.msra.mxu0 0.0
      %519 = vmatprep.subr.mxu0 0.0
      %520 = vmatpush1.msra.mxu0 0.0
      %521 = vmatprep.subr.mxu0 0.0
      %522 = vmatpush1.msra.mxu0 0.0
      %523 = vmatprep.subr.mxu0 0.0
      %524 = vmatpush1.msra.mxu0 0.0
      %525 = vmatprep.subr.mxu0 0.0
      %526 = vmatpush1.msra.mxu0 0.0
      %527 = vmatprep.subr.mxu0 0.0
      %528 = vmatpush1.msra.mxu0 0.0
      %529 = vmatprep.subr.mxu0 0.0
      %530 = vmatpush1.msra.mxu0 0.0
      %531 = vmatprep.subr.mxu0 0.0
      %532 = vmatpush1.msra.mxu0 0.0
      %533 = vmatprep.subr.mxu0 0.0
      %534 = vmatpush1.msra.mxu0 0.0
      %535 = vmatprep.subr.mxu0 0.0
      %536 = vmatpush1.msra.mxu0 0.0
      %537 = vmatprep.subr.mxu0 0.0
      %538 = vmatpush1.msra.mxu0 0.0
      %539 = vmatprep.subr.mxu0 0.0
      %540 = vmatpush1.msra.mxu0 0.0
      %541 = vmatprep.subr.mxu0 0.0
      %542 = vmatpush1.msra.mxu0 0.0
      %543 = vmatprep.subr.mxu0 0.0
      %544 = vmatpush1.msra.mxu0 0.0
      %545 = vmatprep.subr.mxu0 0.0
      %546 = vmatpush1.msra.mxu0 0.0
      %547 = vmatprep.subr.mxu0 0.0
      %548 = vmatpush1.msra.mxu0 0.0
      %549 = vmatprep.subr.mxu0 0.0
      %550 = vmatpush1.msra.mxu0 0.0
      %551 = vmatprep.subr.mxu0 0.0
      %552 = vmatpush1.msra.mxu0 0.0
      %553 = vmatprep.subr.mxu0 0.0
      %554 = vmatpush1.msra.mxu0 0.0
      %555 = vmatprep.subr.mxu0 0.0
      %556 = vmatpush1.msra.mxu0 0.0
      %557 = vmatprep.subr.mxu0 0.0
      %558 = vmatpush1.msra.mxu0 0.0
      %559 = vmatprep.subr.mxu0 0.0
      %560 = vmatpush1.msra.mxu0 0.0
      %561 = vmatprep.subr.mxu0 0.0
      %562 = vmatpush1.msra.mxu0 0.0
      %563 = vmatprep.mubr.f32.mxu0 0.0
      %564 = vmatmul.mubr.f32.gmra.mrb[0].mxu0 %v494
      %v565 = vpop.f32.mrb[0].mxu0
      %v566 = vadd.f32 0.0, %v565
      %v567 = vpop.f32.mrb[0].mxu0
      %v568 = vadd.f32 0.0, %v567
      %569 = vmatprep.mubr.f32.mxu0 0.0
      %570 = vmatmul.mubr.f32.gmra.mrb[0].mxu0 %v497
      %v571 = vpop.f32.mrb[0].mxu0
      %v572 = vadd.f32 0.0, %v571
      %v573 = vpop.f32.mrb[0].mxu0
      %v574 = vadd.f32 0.0, %v573
      %575 = vdwg.mxu0
      %v576 = vadd.f32 %v469, %v566
      %v577 = vadd.f32 %v471, %v568
      %v578 = vadd.f32 %v475, %v572
      %v579 = vadd.f32 %v477, %v574
      %v580 = vld [vmem:[%s4] sm:$0x3]
      %v582 = vlaneseq
      %v583 = vshrl.u32 %v582, 7
      %v584 = vsub.s32 0, %v583
      %v585 = vrot.slane %v580, %v584
      %v586 = vlaneseq
      %v587 = vshrl.u32 %v586, 7
      %v588 = vsub.s32 1, %v587
      %v589 = vrot.slane %v580, %v588
      %v592 = vmul.f32 %v576, %v585
      %v593 = vmul.f32 %v577, %v589
      %v594 = vmul.f32 %v578, %v585
      %v595 = vmul.f32 %v579, %v589
      %v596 = vld [vmem:[%s3] sm:$0xff]
      %v597 = vld [vmem:[%s3 + $0x8] sm:$0xff]
      %599 = vset.pattern.permute.xlu0 0
      %600 = vperm.xlu0 %599, %v596
      %v601 = vpop.permute.xlu0 %600
      %604 = vset.pattern.permute.xlu0 0
      %605 = vperm.xlu0 %604, %v597
      %v606 = vpop.permute.xlu0 %605
      %v608 = vmul.f32 %v601, %v585
      %v609 = vmul.f32 %v601, %v589
      %v610 = vmul.f32 %v606, %v585
      %v611 = vmul.f32 %v606, %v589
      %v612 = vadd.f32 %v592, %v608
      %v613 = vadd.f32 %v593, %v609
      %v614 = vadd.f32 %v594, %v610
      %v615 = vadd.f32 %v595, %v611
      %616 = vst [vmem:[%s259] sm:$0xff] %v612
      %617 = vst [vmem:[%s259 + $0x8] sm:$0xff] %v613
      %618 = vst [vmem:[%s259 + $0x10] sm:$0xff] %v614
      %619 = vst [vmem:[%s259 + $0x18] sm:$0xff] %v615
      %v620 = vadd.f32 %v592, %v593
      %621 = vadd.xlane.f32.xlu0 %v620
      %v622 = vpop.xlane.xlu0 %621
      %v623 = vadd.f32 %v594, %v595
      %624 = vadd.xlane.f32.xlu0 %v623
      %v625 = vpop.xlane.xlu0 %624
      %v626 = vmul.f32 %v592, %v592
      %v627 = vmul.f32 %v593, %v593
      %v628 = vmul.f32 %v594, %v594
      %v629 = vmul.f32 %v595, %v595
      %v630 = vadd.f32 %v626, %v627
      %631 = vadd.xlane.f32.xlu0 %v630
      %v632 = vpop.xlane.xlu0 %631
      %v633 = vadd.f32 %v628, %v629
      %634 = vadd.xlane.f32.xlu0 %v633
      %v635 = vpop.xlane.xlu0 %634
      %vm636 = vcmask 7168
      %637 = vst.msk [vmem:[%s264] sm:$0xff] %vm636, %v622
      %638 = vst.msk [vmem:[%s264 + $0x8] sm:$0xff] %vm636, %v625
      %639 = vst.msk [vmem:[%s264 + $0x10] sm:$0xff] %vm636, %v632
      %640 = vst.msk [vmem:[%s264 + $0x18] sm:$0xff] %vm636, %v635
      %p641 = scmp.lt.s32.totalorder %s18, 1
      %s642 = scalar_select %p641, %s18, 1
      %s643 = smul.addr %s642, 4
      %s644 = smul.addr %s643, 8
      %s645 = scalar_lea.vmem %s5, %s644
      %p646 = scmp.lt.s32.totalorder %s18, 1
      %s647 = scalar_select %p646, %s18, 1
      %s648 = smul.addr %s647, 4
      %s649 = smul.addr %s648, 8
      %s650 = scalar_lea.vmem %s6, %s649
      // Predicated region
      $region41: #{basic_block_forward.7} parent=39 // pred_check
        %p651 = pneg %p146
      $region42: #{basic_block_forward.7} parent=39 // pred_check_branch
        %653 = sbr.rel (%p651) target = $region44
      $region43: #{basic_block_forward.7} parent=39 // pred_region
        _
      $region44: #{basic_block_forward.7} parent=39 // pred_fallthru
        _
      // Predicated region
      $region45: #{basic_block_forward.7} parent=39 // pred_check
        %p654 = pneg %p172
      $region46: #{basic_block_forward.7} parent=39 // pred_check_branch
        %656 = sbr.rel (%p654) target = $region48
      $region47: #{basic_block_forward.7} parent=39 // pred_region
        _
      $region48: #{basic_block_forward.7} parent=39 // pred_fallthru
        _
    $region40: #{basic_block_forward.7} parent=5 // pred_fallthru
      _
    %p657 = scmp.le.s32.totalorder 2, %s13
    // Predicated region
    $region49: #{basic_block_forward.7} parent=5 // pred_check
      %p658 = pneg %p657
    $region50: #{basic_block_forward.7} parent=5 // pred_check_branch
      %660 = sbr.rel (%p658) target = $region52
    $region51: #{basic_block_forward.7} parent=5 // pred_region
      %s661 = ssub.s32 %s13, 2
      // Predicated region
      $region53: #{basic_block_forward.7} parent=51 // pred_check
        %p662 = pneg %p152
      $region54: #{basic_block_forward.7} parent=51 // pred_check_branch
        %664 = sbr.rel (%p662) target = $region56
      $region55: #{basic_block_forward.7} parent=51 // pred_region
        %p665 = scmp.lt.s32.totalorder %s19, 1
        %s666 = scalar_select %p665, %s19, 1
        %s667 = smul.addr %s666, 4
        %s668 = smul.addr %s667, 8
        %s669 = scalar_lea.vmem %s5, %s668
      $region56: #{basic_block_forward.7} parent=51 // pred_fallthru
        _
      // Predicated region
      $region57: #{basic_block_forward.7} parent=51 // pred_check
        %p670 = pneg %p178
      $region58: #{basic_block_forward.7} parent=51 // pred_check_branch
        %672 = sbr.rel (%p670) target = $region60
      $region59: #{basic_block_forward.7} parent=51 // pred_region
        %p673 = scmp.lt.s32.totalorder %s19, 1
        %s674 = scalar_select %p673, %s19, 1
        %s675 = smul.addr %s674, 4
        %s676 = smul.addr %s675, 8
        %s677 = scalar_lea.vmem %s6, %s676
      $region60: #{basic_block_forward.7} parent=51 // pred_fallthru
        _
    $region52: #{basic_block_forward.7} parent=5 // pred_fallthru
      _
  $region6: #{basic_block_forward.7} parent=0 // loop_footer
    %s17 = sadd.s32 1, %s13
  $region7: #{basic_block_forward.7} parent=0 // loop_footer_branch
    %12 = sbr.rel target = $region3
  $region8: #{basic_block_forward.7} parent=0 // loop_exit
    _

// kernel: basic_block_forward.8
$region0: #{basic_block_forward.8}
  #allocation0 [shape = 'u32[]', space=smem, size = 0x4, offset = 0x4, fixed_abs, tag = 'smem constant byte address 0x4 - core index']
  #allocation1 [shape = 'u32[144,128]{1,0:T(1,128)}', space=vmem, size = 0x12000, scoped, tag = 'internal scratch']
  %s0 = inlined_call_operand.vmem [shape: f32[2,16,256], index: 0, kind: input, shape index: {}]
  %s1 = inlined_call_operand.vmem [shape: f32[2,16,1], index: 1, kind: input, shape index: {}]
  %s2 = inlined_call_operand.vmem [shape: f32[16,16], index: 2, kind: input, shape index: {}]
  %s3 = inlined_call_operand.vmem [shape: f32[16,1], index: 3, kind: input, shape index: {}]
  %s4 = inlined_call_operand.vmem [shape: f32[1,256], index: 4, kind: input, shape index: {}]
  %s5 = inlined_call_operand.vmem [shape: f32[2,16,256], index: 5, kind: output, shape index: {0}]
  %s6 = inlined_call_operand.vmem [shape: f32[2,1,32,1], index: 6, kind: output, shape index: {1}]
  %7 = xla_tuple %s5, %s6
  %s8 = sld [smem:[#allocation0]]
  $region61: #{basic_block_forward.8} parent=0
    _
  %s10 = ssub.s32 1, %s8
  %s11 = scalar_select 0, %s10, %s8
  loop: start=0, step=1, limit=4
  $region2: #{basic_block_forward.8} parent=0 // loop_pre_header
    _
  $region3: #{basic_block_forward.8} parent=0 // loop_header
    %s13 = sphi 0, %s17
    %p14 = scmp.ge.s32.totalorder %s13, 4
    %s20 = sphi 0, %s32
    %s21 = sphi 0, %s28
    %s22 = sphi 0, %s20
    %s23 = sphi 0, %s21
    %s24 = sphi 0, %s22
    %s25 = sphi 0, %s23
    %s37 = sphi 0, %s39
    %s40 = sphi 0, %s37
    %s41 = sphi 0, %s40
    %s57 = sphi 0, %s41
    %s61 = sphi 0, %s61
    %s63 = sphi 0, %s61
    %s64 = sphi 0, %s63
    %s78 = sphi 0, %s64
    %s82 = sphi 0, %s82
    %s84 = sphi 0, %s82
    %s85 = sphi 0, %s84
    %s99 = sphi 0, %s85
    %s103 = sphi 0, %s103
    %s105 = sphi 0, %s103
    %s106 = sphi 0, %s105
    %s120 = sphi 0, %s106
    %s126 = sphi 0, %s128
    %s129 = sphi 0, %s126
    %s130 = sphi 0, %s129
    %s146 = sphi 0, %s130
    %s154 = sphi 0, %s156
    %s157 = sphi 0, %s154
    %s158 = sphi 0, %s157
    %s174 = sphi 0, %s158
    %s182 = sphi 0, %s184
    %s185 = sphi 0, %s182
    %s186 = sphi 0, %s185
    %s202 = sphi 0, %s186
  $region4: #{basic_block_forward.8} parent=0 // loop_header_branch
    %16 = sbr.rel (%p14) target = $region8
  $region5: #{basic_block_forward.8} parent=0 // loop_body
    %s18 = ssub.s32 %s13, 1
    %s19 = ssub.s32 %s13, 2
    %s26 = sadd.s32 1, %s21
    %p27 = scmp.ge.s32.totalorder %s26, 1
    %s28 = scalar_select %p27, 0, %s26
    %s29 = sadd.s32 1, %s20
    %s30 = scalar_select %p27, %s29, %s20
    %p31 = scmp.ge.s32.totalorder %s30, 2
    %s32 = scalar_select %p31, 0, %s30
    %s33 = ssub.s32 %s20, %s32
    %s34 = ssub.s32 %s21, %s28
    %s35 = sor.u32 %s33, %s34
    %p36 = scmp.eq.s32.totalorder %s35, 0
    %s38 = sadd.s32 %s37, 1
    %s39 = scalar_select %p36, %s37, %s38
    %p42 = pneg %p36
    %p43 = scmp.eq.s32.totalorder %s13, 1
    %p44 = por %p42, %p43
    %p45 = scmp.ne.s32.totalorder %s37, %s40
    %p46 = scmp.eq.s32.totalorder %s13, 0
    %p47 = por %p45, %p46
    %p48 = scmp.ne.s32.totalorder %s37, %s40
    %p49 = scmp.eq.s32.totalorder %s18, 1
    %p50 = por %p48, %p49
    %p51 = scmp.ne.s32.totalorder %s40, %s41
    %p52 = scmp.eq.s32.totalorder %s18, 0
    %p53 = por %p51, %p52
    %p54 = scmp.ne.s32.totalorder %s40, %s41
    %p55 = scmp.eq.s32.totalorder %s19, 1
    %p56 = por %p54, %p55
    %p58 = scmp.ne.s32.totalorder %s41, %s57
    %p59 = scmp.eq.s32.totalorder %s19, 0
    %p60 = por %p58, %p59
    %s62 = sadd.s32 %s61, 1
    %p65 = scmp.eq.s32.totalorder %s13, 1
    %p66 = scmp.ne.s32.totalorder %s61, %s63
    %p67 = scmp.eq.s32.totalorder %s13, 0
    %p68 = por %p66, %p67
    %p69 = scmp.ne.s32.totalorder %s61, %s63
    %p70 = scmp.eq.s32.totalorder %s18, 1
    %p71 = por %p69, %p70
    %p72 = scmp.ne.s32.totalorder %s63, %s64
    %p73 = scmp.eq.s32.totalorder %s18, 0
    %p74 = por %p72, %p73
    %p75 = scmp.ne.s32.totalorder %s63, %s64
    %p76 = scmp.eq.s32.totalorder %s19, 1
    %p77 = por %p75, %p76
    %p79 = scmp.ne.s32.totalorder %s64, %s78
    %p80 = scmp.eq.s32.totalorder %s19, 0
    %p81 = por %p79, %p80
    %s83 = sadd.s32 %s82, 1
    %p86 = scmp.eq.s32.totalorder %s13, 1
    %p87 = scmp.ne.s32.totalorder %s82, %s84
    %p88 = scmp.eq.s32.totalorder %s13, 0
    %p89 = por %p87, %p88
    %p90 = scmp.ne.s32.totalorder %s82, %s84
    %p91 = scmp.eq.s32.totalorder %s18, 1
    %p92 = por %p90, %p91
    %p93 = scmp.ne.s32.totalorder %s84, %s85
    %p94 = scmp.eq.s32.totalorder %s18, 0
    %p95 = por %p93, %p94
    %p96 = scmp.ne.s32.totalorder %s84, %s85
    %p97 = scmp.eq.s32.totalorder %s19, 1
    %p98 = por %p96, %p97
    %p100 = scmp.ne.s32.totalorder %s85, %s99
    %p101 = scmp.eq.s32.totalorder %s19, 0
    %p102 = por %p100, %p101
    %s104 = sadd.s32 %s103, 1
    %p107 = scmp.eq.s32.totalorder %s13, 1
    %p108 = scmp.ne.s32.totalorder %s103, %s105
    %p109 = scmp.eq.s32.totalorder %s13, 0
    %p110 = por %p108, %p109
    %p111 = scmp.ne.s32.totalorder %s103, %s105
    %p112 = scmp.eq.s32.totalorder %s18, 1
    %p113 = por %p111, %p112
    %p114 = scmp.ne.s32.totalorder %s105, %s106
    %p115 = scmp.eq.s32.totalorder %s18, 0
    %p116 = por %p114, %p115
    %p117 = scmp.ne.s32.totalorder %s105, %s106
    %p118 = scmp.eq.s32.totalorder %s19, 1
    %p119 = por %p117, %p118
    %p121 = scmp.ne.s32.totalorder %s106, %s120
    %p122 = scmp.eq.s32.totalorder %s19, 0
    %p123 = por %p121, %p122
    %s124 = ssub.s32 %s21, %s28
    %p125 = scmp.eq.s32.totalorder %s124, 0
    %s127 = sadd.s32 %s126, 1
    %s128 = scalar_select %p125, %s126, %s127
    %p131 = pneg %p125
    %p132 = scmp.eq.s32.totalorder %s13, 1
    %p133 = por %p131, %p132
    %p134 = scmp.ne.s32.totalorder %s126, %s129
    %p135 = scmp.eq.s32.totalorder %s13, 0
    %p136 = por %p134, %p135
    %p137 = scmp.ne.s32.totalorder %s126, %s129
    %p138 = scmp.eq.s32.totalorder %s18, 1
    %p139 = por %p137, %p138
    %p140 = scmp.ne.s32.totalorder %s129, %s130
    %p141 = scmp.eq.s32.totalorder %s18, 0
    %p142 = por %p140, %p141
    %p143 = scmp.ne.s32.totalorder %s129, %s130
    %p144 = scmp.eq.s32.totalorder %s19, 1
    %p145 = por %p143, %p144
    %p147 = scmp.ne.s32.totalorder %s130, %s146
    %p148 = scmp.eq.s32.totalorder %s19, 0
    %p149 = por %p147, %p148
    %s150 = ssub.s32 %s20, %s32
    %s151 = ssub.s32 %s21, %s28
    %s152 = sor.u32 %s150, %s151
    %p153 = scmp.eq.s32.totalorder %s152, 0
    %s155 = sadd.s32 %s154, 1
    %s156 = scalar_select %p153, %s154, %s155
    %p159 = pneg %p153
    %p160 = scmp.eq.s32.totalorder %s13, 1
    %p161 = por %p159, %p160
    %p162 = scmp.ne.s32.totalorder %s154, %s157
    %p163 = scmp.eq.s32.totalorder %s13, 0
    %p164 = por %p162, %p163
    %p165 = scmp.ne.s32.totalorder %s154, %s157
    %p166 = scmp.eq.s32.totalorder %s18, 1
    %p167 = por %p165, %p166
    %p168 = scmp.ne.s32.totalorder %s157, %s158
    %p169 = scmp.eq.s32.totalorder %s18, 0
    %p170 = por %p168, %p169
    %p171 = scmp.ne.s32.totalorder %s157, %s158
    %p172 = scmp.eq.s32.totalorder %s19, 1
    %p173 = por %p171, %p172
    %p175 = scmp.ne.s32.totalorder %s158, %s174
    %p176 = scmp.eq.s32.totalorder %s19, 0
    %p177 = por %p175, %p176
    %s178 = ssub.s32 %s20, %s32
    %s179 = ssub.s32 %s21, %s28
    %s180 = sor.u32 %s178, %s179
    %p181 = scmp.eq.s32.totalorder %s180, 0
    %s183 = sadd.s32 %s182, 1
    %s184 = scalar_select %p181, %s182, %s183
    %p187 = pneg %p181
    %p188 = scmp.eq.s32.totalorder %s13, 1
    %p189 = por %p187, %p188
    %p190 = scmp.ne.s32.totalorder %s182, %s185
    %p191 = scmp.eq.s32.totalorder %s13, 0
    %p192 = por %p190, %p191
    %p193 = scmp.ne.s32.totalorder %s182, %s185
    %p194 = scmp.eq.s32.totalorder %s18, 1
    %p195 = por %p193, %p194
    %p196 = scmp.ne.s32.totalorder %s185, %s186
    %p197 = scmp.eq.s32.totalorder %s18, 0
    %p198 = por %p196, %p197
    %p199 = scmp.ne.s32.totalorder %s185, %s186
    %p200 = scmp.eq.s32.totalorder %s19, 1
    %p201 = por %p199, %p200
    %p203 = scmp.ne.s32.totalorder %s186, %s202
    %p204 = scmp.eq.s32.totalorder %s19, 0
    %p205 = por %p203, %p204
    %p206 = scmp.le.s32.totalorder 1, %s13
    %p207 = scmp.lt.s32.totalorder %s13, 3
    %p208 = pnand %p206, %p207
    %p209 = pneg %p208
    // Predicated region
    $region9: #{basic_block_forward.8} parent=5 // pred_check
      _
    $region10: #{basic_block_forward.8} parent=5 // pred_check_branch
      %211 = sbr.rel (%p208) target = $region12
    $region11: #{basic_block_forward.8} parent=5 // pred_region
      %s212 = ssub.s32 %s13, 1
      // Predicated region
      $region13: #{basic_block_forward.8} parent=11 // pred_check
        %p213 = pneg %p74
      $region14: #{basic_block_forward.8} parent=11 // pred_check_branch
        %215 = sbr.rel (%p213) target = $region16
      $region15: #{basic_block_forward.8} parent=11 // pred_region
        _
      $region16: #{basic_block_forward.8} parent=11 // pred_fallthru
        _
      // Predicated region
      $region17: #{basic_block_forward.8} parent=11 // pred_check
        %p216 = pneg %p95
      $region18: #{basic_block_forward.8} parent=11 // pred_check_branch
        %218 = sbr.rel (%p216) target = $region20
      $region19: #{basic_block_forward.8} parent=11 // pred_region
        _
      $region20: #{basic_block_forward.8} parent=11 // pred_fallthru
        _
      // Predicated region
      $region21: #{basic_block_forward.8} parent=11 // pred_check
        %p219 = pneg %p116
      $region22: #{basic_block_forward.8} parent=11 // pred_check_branch
        %221 = sbr.rel (%p219) target = $region24
      $region23: #{basic_block_forward.8} parent=11 // pred_region
        _
      $region24: #{basic_block_forward.8} parent=11 // pred_fallthru
        _
      // Predicated region
      $region25: #{basic_block_forward.8} parent=11 // pred_check
        %p222 = pneg %p142
      $region26: #{basic_block_forward.8} parent=11 // pred_check_branch
        %224 = sbr.rel (%p222) target = $region28
      $region27: #{basic_block_forward.8} parent=11 // pred_region
        %s225 = smul.u32 2, %s23
        %p226 = scmp.lt.s32.totalorder %s225, 1
        %s227 = scalar_select %p226, %s225, 1
        %s228 = scalar_lea.vmem %s4, %s227
        %s229 = smul.u32 2, %s23
      $region28: #{basic_block_forward.8} parent=11 // pred_fallthru
        _
    $region12: #{basic_block_forward.8} parent=5 // pred_fallthru
      _
    %p230 = scmp.lt.s32.totalorder %s13, 2
    // Predicated region
    $region29: #{basic_block_forward.8} parent=5 // pred_check
      %p231 = pneg %p230
    $region30: #{basic_block_forward.8} parent=5 // pred_check_branch
      %233 = sbr.rel (%p231) target = $region32
    $region31: #{basic_block_forward.8} parent=5 // pred_region
      // Predicated region
      $region33: #{basic_block_forward.8} parent=31 // pred_check
        %p234 = pneg %p47
      $region34: #{basic_block_forward.8} parent=31 // pred_check_branch
        %236 = sbr.rel (%p234) target = $region36
      $region35: #{basic_block_forward.8} parent=31 // pred_region
        %s237 = smul.u32 2, %s21
        %p238 = scmp.lt.s32.totalorder %s20, 1
        %s239 = scalar_select %p238, %s20, 1
        %p240 = scmp.lt.s32.totalorder %s237, 1
        %s241 = scalar_select %p240, %s237, 1
        %s242 = smul.addr %s239, 4
        %s243 = sadd.s32 %s241, %s242
        %s244 = smul.addr %s243, 8
        %s245 = scalar_lea.vmem %s0, %s244
        %s246 = smul.u32 2, %s21
      $region36: #{basic_block_forward.8} parent=31 // pred_fallthru
        _
    $region32: #{basic_block_forward.8} parent=5 // pred_fallthru
      _
    %p247 = scmp.le.s32.totalorder 1, %s13
    %p248 = scmp.lt.s32.totalorder %s13, 3
    %p249 = pnand %p247, %p248
    %p250 = pneg %p249
    // Predicated region
    $region37: #{basic_block_forward.8} parent=5 // pred_check
      _
    $region38: #{basic_block_forward.8} parent=5 // pred_check_branch
      %252 = sbr.rel (%p249) target = $region40
    $region39: #{basic_block_forward.8} parent=5 // pred_region
      %s253 = ssub.s32 %s13, 1
      %s254 = smul.u32 2, %s23
      %p255 = scmp.lt.s32.totalorder %s22, 1
      %s256 = scalar_select %p255, %s22, 1
      %p257 = scmp.lt.s32.totalorder %s254, 1
      %s258 = scalar_select %p257, %s254, 1
      %s259 = smul.addr %s256, 4
      %s260 = sadd.s32 %s258, %s259
      %s261 = smul.addr %s260, 8
      %s262 = scalar_lea.vmem %s0, %s261
      %p263 = pneg %p53
      %p264 = pneg %p50
      %p265 = pneg %p74
      %p266 = pneg %p71
      %p267 = pneg %p95
      %p268 = pneg %p92
      %p269 = pneg %p116
      %p270 = pneg %p113
      %s271 = smul.u32 2, %s23
      %p272 = scmp.lt.s32.totalorder %s271, 1
      %s273 = scalar_select %p272, %s271, 1
      %s274 = scalar_lea.vmem %s4, %s273
      %p275 = pneg %p142
      %p276 = pneg %p139
      %p277 = pneg %p170
      %p278 = pneg %p167
      %s279 = smul.u32 2, %s23
      %p280 = scmp.lt.s32.totalorder %s22, 1
      %s281 = scalar_select %p280, %s22, 1
      %p282 = scmp.lt.s32.totalorder %s279, 1
      %s283 = scalar_select %p282, %s279, 1
      %s284 = smul.addr %s281, 4
      %s285 = sadd.s32 %s283, %s284
      %s286 = smul.addr %s285, 8
      %s287 = scalar_lea.vmem %s5, %s286
      %p288 = pneg %p198
      %p289 = pneg %p195
      %p290 = scmp.lt.s32.totalorder %s22, 1
      %s291 = scalar_select %p290, %s22, 1
      %p292 = scmp.lt.s32.totalorder %s23, 0
      %s293 = scalar_select %p292, %s23, 0
      %s294 = smul.addr %s293, 4
      %s295 = smul.addr %s291, 4
      %s296 = sadd.s32 %s294, %s295
      %s297 = smul.addr %s296, 8
      %s298 = scalar_lea.vmem %s6, %s297
      %s299 = smul.u32 2, %s23
      %p300 = scmp.lt.s32.totalorder %s22, 1
      %s301 = scalar_select %p300, %s22, 1
      %p302 = scmp.lt.s32.totalorder %s299, 1
      %s303 = scalar_select %p302, %s299, 1
      %s304 = smul.addr %s301, 4
      %s305 = sadd.s32 %s303, %s304
      %s306 = smul.addr %s305, 8
      %s307 = scalar_lea.vmem %s0, %s306
      %s308 = smul.u32 2, %s23
      %s309 = smul.u32 2, %s23
      %p310 = scmp.lt.s32.totalorder %s309, 1
      %s311 = scalar_select %p310, %s309, 1
      %s312 = scalar_lea.vmem %s4, %s311
      %s313 = smul.u32 2, %s23
      %s314 = smul.u32 2, %s23
      %p315 = scmp.lt.s32.totalorder %s22, 1
      %s316 = scalar_select %p315, %s22, 1
      %p317 = scmp.lt.s32.totalorder %s314, 1
      %s318 = scalar_select %p317, %s314, 1
      %s319 = smul.addr %s316, 4
      %s320 = sadd.s32 %s318, %s319
      %s321 = smul.addr %s320, 8
      %s322 = scalar_lea.vmem %s5, %s321
      %s323 = smul.u32 2, %s23
      %p324 = scmp.lt.s32.totalorder %s22, 1
      %s325 = scalar_select %p324, %s22, 1
      %p326 = scmp.lt.s32.totalorder %s23, 0
      %s327 = scalar_select %p326, %s23, 0
      %s328 = smul.addr %s327, 4
      %s329 = smul.addr %s325, 4
      %s330 = sadd.s32 %s328, %s329
      %s331 = smul.addr %s330, 8
      %s332 = scalar_lea.vmem %s6, %s331
      %v333 = vld [vmem:[%s307] sm:$0xff]
      %v334 = vld [vmem:[%s307 + $0x8] sm:$0xff]
      %v335 = vld [vmem:[%s307 + $0x10] sm:$0xff]
      %v336 = vld [vmem:[%s307 + $0x18] sm:$0xff]
      %v337 = vld [vmem:[%s1] sm:$0xff]
      %v338 = vld [vmem:[%s1 + $0x8] sm:$0xff]
      %340 = vset.pattern.permute.xlu0 0
      %341 = vperm.xlu0 %340, %v337
      %v342 = vpop.permute.xlu0 %341
      %345 = vset.pattern.permute.xlu0 0
      %346 = vperm.xlu0 %345, %v338
      %v347 = vpop.permute.xlu0 %346
      %v349 = vmul.f32 %v333, %v342
      %v350 = vmul.f32 %v334, %v342
      %v351 = vmul.f32 %v335, %v347
      %v352 = vmul.f32 %v336, %v347
      %s353 = scalar_lea.vmem %s1, 16
      %v354 = vld [vmem:[%s353] sm:$0xff]
      %v355 = vld [vmem:[%s353 + $0x8] sm:$0xff]
      %357 = vset.pattern.permute.xlu0 0
      %358 = vperm.xlu0 %357, %v354
      %v359 = vpop.permute.xlu0 %358
      %362 = vset.pattern.permute.xlu0 0
      %363 = vperm.xlu0 %362, %v355
      %v364 = vpop.permute.xlu0 %363
      %v366 = vadd.f32 %v349, %v359
      %v367 = vadd.f32 %v350, %v359
      %v368 = vadd.f32 %v351, %v364
      %v369 = vadd.f32 %v352, %v364
      %v370 = vmax.f32 %v366, 0.0
      %v371 = vmax.f32 %v367, 0.0
      %v372 = vmax.f32 %v368, 0.0
      %v373 = vmax.f32 %v369, 0.0
      %v374 = vld [vmem:[%s2] sm:$0xff]
      %v375 = vld [vmem:[%s2 + $0x8] sm:$0xff]
      %vm376 = vcmask 130048
      %v378 = vsel %vm376, %v374, 0
      %v381 = vsel %vm376, %v375, 0
      %383 = vmatprep.subr.mxu0 %v371
      %384 = vmatpush1.msra.mxu0 %v370
      %385 = vmatprep.subr.mxu0 %v373
      %386 = vmatpush1.msra.mxu0 %v372
      %387 = vmatprep.subr.mxu0 0.0
      %388 = vmatpush1.msra.mxu0 0.0
      %389 = vmatprep.subr.mxu0 0.0
      %390 = vmatpush1.msra.mxu0 0.0
      %391 = vmatprep.subr.mxu0 0.0
      %392 = vmatpush1.msra.mxu0 0.0
      %393 = vmatprep.subr.mxu0 0.0
      %394 = vmatpush1.msra.mxu0 0.0
      %395 = vmatprep.subr.mxu0 0.0
      %396 = vmatpush1.msra.mxu0 0.0
      %397 = vmatprep.subr.mxu0 0.0
      %398 = vmatpush1.msra.mxu0 0.0
      %399 = vmatprep.subr.mxu0 0.0
      %400 = vmatpush1.msra.mxu0 0.0
      %401 = vmatprep.subr.mxu0 0.0
      %402 = vmatpush1.msra.mxu0 0.0
      %403 = vmatprep.subr.mxu0 0.0
      %404 = vmatpush1.msra.mxu0 0.0
      %405 = vmatprep.subr.mxu0 0.0
      %406 = vmatpush1.msra.mxu0 0.0
      %407 = vmatprep.subr.mxu0 0.0
      %408 = vmatpush1.msra.mxu0 0.0
      %409 = vmatprep.subr.mxu0 0.0
      %410 = vmatpush1.msra.mxu0 0.0
      %411 = vmatprep.subr.mxu0 0.0
      %412 = vmatpush1.msra.mxu0 0.0
      %413 = vmatprep.subr.mxu0 0.0
      %414 = vmatpush1.msra.mxu0 0.0
      %415 = vmatprep.subr.mxu0 0.0
      %416 = vmatpush1.msra.mxu0 0.0
      %417 = vmatprep.subr.mxu0 0.0
      %418 = vmatpush1.msra.mxu0 0.0
      %419 = vmatprep.subr.mxu0 0.0
      %420 = vmatpush1.msra.mxu0 0.0
      %421 = vmatprep.subr.mxu0 0.0
      %422 = vmatpush1.msra.mxu0 0.0
      %423 = vmatprep.subr.mxu0 0.0
      %424 = vmatpush1.msra.mxu0 0.0
      %425 = vmatprep.subr.mxu0 0.0
      %426 = vmatpush1.msra.mxu0 0.0
      %427 = vmatprep.subr.mxu0 0.0
      %428 = vmatpush1.msra.mxu0 0.0
      %429 = vmatprep.subr.mxu0 0.0
      %430 = vmatpush1.msra.mxu0 0.0
      %431 = vmatprep.subr.mxu0 0.0
      %432 = vmatpush1.msra.mxu0 0.0
      %433 = vmatprep.subr.mxu0 0.0
      %434 = vmatpush1.msra.mxu0 0.0
      %435 = vmatprep.subr.mxu0 0.0
      %436 = vmatpush1.msra.mxu0 0.0
      %437 = vmatprep.subr.mxu0 0.0
      %438 = vmatpush1.msra.mxu0 0.0
      %439 = vmatprep.subr.mxu0 0.0
      %440 = vmatpush1.msra.mxu0 0.0
      %441 = vmatprep.subr.mxu0 0.0
      %442 = vmatpush1.msra.mxu0 0.0
      %443 = vmatprep.subr.mxu0 0.0
      %444 = vmatpush1.msra.mxu0 0.0
      %445 = vmatprep.subr.mxu0 0.0
      %446 = vmatpush1.msra.mxu0 0.0
      %447 = vmatprep.mubr.f32.mxu0 0.0
      %448 = vmatmul.mubr.f32.gmra.mrb[0].mxu0 %v378
      %v449 = vpop.f32.mrb[0].mxu0
      %v450 = vadd.f32 0.0, %v449
      %v451 = vpop.f32.mrb[0].mxu0
      %v452 = vadd.f32 0.0, %v451
      %453 = vmatprep.mubr.f32.mxu0 0.0
      %454 = vmatmul.mubr.f32.gmra.mrb[0].mxu0 %v381
      %v455 = vpop.f32.mrb[0].mxu0
      %v456 = vadd.f32 0.0, %v455
      %v457 = vpop.f32.mrb[0].mxu0
      %v458 = vadd.f32 0.0, %v457
      %459 = vdwg.mxu0
      %v460 = vld [vmem:[%s312] sm:$0x3]
      %v462 = vlaneseq
      %v463 = vshrl.u32 %v462, 7
      %v464 = vsub.s32 0, %v463
      %v465 = vrot.slane %v460, %v464
      %v466 = vlaneseq
      %v467 = vshrl.u32 %v466, 7
      %v468 = vsub.s32 1, %v467
      %v469 = vrot.slane %v460, %v468
      %v472 = vmul.f32 %v450, %v465
      %v473 = vmul.f32 %v452, %v469
      %v474 = vmul.f32 %v456, %v465
      %v475 = vmul.f32 %v458, %v469
      %v476 = vld [vmem:[%s3] sm:$0xff]
      %v477 = vld [vmem:[%s3 + $0x8] sm:$0xff]
      %479 = vset.pattern.permute.xlu0 0
      %480 = vperm.xlu0 %479, %v476
      %v481 = vpop.permute.xlu0 %480
      %484 = vset.pattern.permute.xlu0 0
      %485 = vperm.xlu0 %484, %v477
      %v486 = vpop.permute.xlu0 %485
      %v488 = vmul.f32 %v481, %v465
      %v489 = vmul.f32 %v481, %v469
      %v490 = vmul.f32 %v486, %v465
      %v491 = vmul.f32 %v486, %v469
      %v492 = vadd.f32 %v472, %v488
      %v493 = vadd.f32 %v473, %v489
      %v494 = vadd.f32 %v474, %v490
      %v495 = vadd.f32 %v475, %v491
      %496 = vst [vmem:[%s322] sm:$0xff] %v492
      %497 = vst [vmem:[%s322 + $0x8] sm:$0xff] %v493
      %498 = vst [vmem:[%s322 + $0x10] sm:$0xff] %v494
      %499 = vst [vmem:[%s322 + $0x18] sm:$0xff] %v495
      %v500 = vadd.f32 %v472, %v473
      %501 = vadd.xlane.f32.xlu0 %v500
      %v502 = vpop.xlane.xlu0 %501
      %v503 = vadd.f32 %v474, %v475
      %504 = vadd.xlane.f32.xlu0 %v503
      %v505 = vpop.xlane.xlu0 %504
      %v506 = vmul.f32 %v472, %v472
      %v507 = vmul.f32 %v473, %v473
      %v508 = vmul.f32 %v474, %v474
      %v509 = vmul.f32 %v475, %v475
      %v510 = vadd.f32 %v506, %v507
      %511 = vadd.xlane.f32.xlu0 %v510
      %v512 = vpop.xlane.xlu0 %511
      %v513 = vadd.f32 %v508, %v509
      %514 = vadd.xlane.f32.xlu0 %v513
      %v515 = vpop.xlane.xlu0 %514
      %vm516 = vcmask 7168
      %517 = vst.msk [vmem:[%s332] sm:$0xff] %vm516, %v502
      %518 = vst.msk [vmem:[%s332 + $0x8] sm:$0xff] %vm516, %v505
      %519 = vst.msk [vmem:[%s332 + $0x10] sm:$0xff] %vm516, %v512
      %520 = vst.msk [vmem:[%s332 + $0x18] sm:$0xff] %vm516, %v515
      %s521 = smul.u32 2, %s23
      %p522 = scmp.lt.s32.totalorder %s22, 1
      %s523 = scalar_select %p522, %s22, 1
      %p524 = scmp.lt.s32.totalorder %s521, 1
      %s525 = scalar_select %p524, %s521, 1
      %s526 = smul.addr %s523, 4
      %s527 = sadd.s32 %s525, %s526
      %s528 = smul.addr %s527, 8
      %s529 = scalar_lea.vmem %s5, %s528
      %p530 = scmp.lt.s32.totalorder %s22, 1
      %s531 = scalar_select %p530, %s22, 1
      %p532 = scmp.lt.s32.totalorder %s23, 0
      %s533 = scalar_select %p532, %s23, 0
      %s534 = smul.addr %s533, 4
      %s535 = smul.addr %s531, 4
      %s536 = sadd.s32 %s534, %s535
      %s537 = smul.addr %s536, 8
      %s538 = scalar_lea.vmem %s6, %s537
      // Predicated region
      $region41: #{basic_block_forward.8} parent=39 // pred_check
        %p539 = pneg %p167
      $region42: #{basic_block_forward.8} parent=39 // pred_check_branch
        %541 = sbr.rel (%p539) target = $region44
      $region43: #{basic_block_forward.8} parent=39 // pred_region
        %s542 = smul.u32 2, %s23
      $region44: #{basic_block_forward.8} parent=39 // pred_fallthru
        _
      // Predicated region
      $region45: #{basic_block_forward.8} parent=39 // pred_check
        %p543 = pneg %p195
      $region46: #{basic_block_forward.8} parent=39 // pred_check_branch
        %545 = sbr.rel (%p543) target = $region48
      $region47: #{basic_block_forward.8} parent=39 // pred_region
        _
      $region48: #{basic_block_forward.8} parent=39 // pred_fallthru
        _
    $region40: #{basic_block_forward.8} parent=5 // pred_fallthru
      _
    %p546 = scmp.le.s32.totalorder 2, %s13
    // Predicated region
    $region49: #{basic_block_forward.8} parent=5 // pred_check
      %p547 = pneg %p546
    $region50: #{basic_block_forward.8} parent=5 // pred_check_branch
      %549 = sbr.rel (%p547) target = $region52
    $region51: #{basic_block_forward.8} parent=5 // pred_region
      %s550 = ssub.s32 %s13, 2
      // Predicated region
      $region53: #{basic_block_forward.8} parent=51 // pred_check
        %p551 = pneg %p173
      $region54: #{basic_block_forward.8} parent=51 // pred_check_branch
        %553 = sbr.rel (%p551) target = $region56
      $region55: #{basic_block_forward.8} parent=51 // pred_region
        %s554 = smul.u32 2, %s25
        %p555 = scmp.lt.s32.totalorder %s24, 1
        %s556 = scalar_select %p555, %s24, 1
        %p557 = scmp.lt.s32.totalorder %s554, 1
        %s558 = scalar_select %p557, %s554, 1
        %s559 = smul.addr %s556, 4
        %s560 = sadd.s32 %s558, %s559
        %s561 = smul.addr %s560, 8
        %s562 = scalar_lea.vmem %s5, %s561
      $region56: #{basic_block_forward.8} parent=51 // pred_fallthru
        _
      // Predicated region
      $region57: #{basic_block_forward.8} parent=51 // pred_check
        %p563 = pneg %p201
      $region58: #{basic_block_forward.8} parent=51 // pred_check_branch
        %565 = sbr.rel (%p563) target = $region60
      $region59: #{basic_block_forward.8} parent=51 // pred_region
        %p566 = scmp.lt.s32.totalorder %s24, 1
        %s567 = scalar_select %p566, %s24, 1
        %p568 = scmp.lt.s32.totalorder %s25, 0
        %s569 = scalar_select %p568, %s25, 0
        %s570 = smul.addr %s569, 4
        %s571 = smul.addr %s567, 4
        %s572 = sadd.s32 %s570, %s571
        %s573 = smul.addr %s572, 8
        %s574 = scalar_lea.vmem %s6, %s573
      $region60: #{basic_block_forward.8} parent=51 // pred_fallthru
        _
    $region52: #{basic_block_forward.8} parent=5 // pred_fallthru
      _
  $region6: #{basic_block_forward.8} parent=0 // loop_footer
    %s17 = sadd.s32 1, %s13
  $region7: #{basic_block_forward.8} parent=0 // loop_footer_branch
    %12 = sbr.rel target = $region3
  $region8: #{basic_block_forward.8} parent=0 // loop_exit
    _

// kernel: basic_block_forward.9
$region0: #{basic_block_forward.9}
  #allocation0 [shape = 'u32[]', space=smem, size = 0x4, offset = 0x4, fixed_abs, tag = 'smem constant byte address 0x4 - core index']
  #allocation1 [shape = 'u32[144,128]{1,0:T(1,128)}', space=vmem, size = 0x12000, scoped, tag = 'internal scratch']
  %s0 = inlined_call_operand.vmem [shape: f32[2,16,256], index: 0, kind: input, shape index: {}]
  %s1 = inlined_call_operand.vmem [shape: f32[2,16,1], index: 1, kind: input, shape index: {}]
  %s2 = inlined_call_operand.vmem [shape: f32[2,16,256], index: 2, kind: output, shape index: {}]
  %s3 = sld [smem:[#allocation0]]
  $region41: #{basic_block_forward.9} parent=0
    _
  %s5 = ssub.s32 1, %s3
  %s6 = scalar_select 0, %s5, %s3
  loop: start=0, step=1, limit=4
  $region2: #{basic_block_forward.9} parent=0 // loop_pre_header
    _
  $region3: #{basic_block_forward.9} parent=0 // loop_header
    %s8 = sphi 0, %s12
    %p9 = scmp.ge.s32.totalorder %s8, 4
    %s15 = sphi 0, %s27
    %s16 = sphi 0, %s23
    %s17 = sphi 0, %s15
    %s18 = sphi 0, %s16
    %s19 = sphi 0, %s17
    %s20 = sphi 0, %s18
    %s32 = sphi 0, %s34
    %s35 = sphi 0, %s32
    %s36 = sphi 0, %s35
    %s52 = sphi 0, %s36
    %s56 = sphi 0, %s56
    %s58 = sphi 0, %s56
    %s59 = sphi 0, %s58
    %s73 = sphi 0, %s59
    %s81 = sphi 0, %s83
    %s84 = sphi 0, %s81
    %s85 = sphi 0, %s84
    %s101 = sphi 0, %s85
  $region4: #{basic_block_forward.9} parent=0 // loop_header_branch
    %11 = sbr.rel (%p9) target = $region8
  $region5: #{basic_block_forward.9} parent=0 // loop_body
    %s13 = ssub.s32 %s8, 1
    %s14 = ssub.s32 %s8, 2
    %s21 = sadd.s32 1, %s16
    %p22 = scmp.ge.s32.totalorder %s21, 1
    %s23 = scalar_select %p22, 0, %s21
    %s24 = sadd.s32 1, %s15
    %s25 = scalar_select %p22, %s24, %s15
    %p26 = scmp.ge.s32.totalorder %s25, 2
    %s27 = scalar_select %p26, 0, %s25
    %s28 = ssub.s32 %s15, %s27
    %s29 = ssub.s32 %s16, %s23
    %s30 = sor.u32 %s28, %s29
    %p31 = scmp.eq.s32.totalorder %s30, 0
    %s33 = sadd.s32 %s32, 1
    %s34 = scalar_select %p31, %s32, %s33
    %p37 = pneg %p31
    %p38 = scmp.eq.s32.totalorder %s8, 1
    %p39 = por %p37, %p38
    %p40 = scmp.ne.s32.totalorder %s32, %s35
    %p41 = scmp.eq.s32.totalorder %s8, 0
    %p42 = por %p40, %p41
    %p43 = scmp.ne.s32.totalorder %s32, %s35
    %p44 = scmp.eq.s32.totalorder %s13, 1
    %p45 = por %p43, %p44
    %p46 = scmp.ne.s32.totalorder %s35, %s36
    %p47 = scmp.eq.s32.totalorder %s13, 0
    %p48 = por %p46, %p47
    %p49 = scmp.ne.s32.totalorder %s35, %s36
    %p50 = scmp.eq.s32.totalorder %s14, 1
    %p51 = por %p49, %p50
    %p53 = scmp.ne.s32.totalorder %s36, %s52
    %p54 = scmp.eq.s32.totalorder %s14, 0
    %p55 = por %p53, %p54
    %s57 = sadd.s32 %s56, 1
    %p60 = scmp.eq.s32.totalorder %s8, 1
    %p61 = scmp.ne.s32.totalorder %s56, %s58
    %p62 = scmp.eq.s32.totalorder %s8, 0
    %p63 = por %p61, %p62
    %p64 = scmp.ne.s32.totalorder %s56, %s58
    %p65 = scmp.eq.s32.totalorder %s13, 1
    %p66 = por %p64, %p65
    %p67 = scmp.ne.s32.totalorder %s58, %s59
    %p68 = scmp.eq.s32.totalorder %s13, 0
    %p69 = por %p67, %p68
    %p70 = scmp.ne.s32.totalorder %s58, %s59
    %p71 = scmp.eq.s32.totalorder %s14, 1
    %p72 = por %p70, %p71
    %p74 = scmp.ne.s32.totalorder %s59, %s73
    %p75 = scmp.eq.s32.totalorder %s14, 0
    %p76 = por %p74, %p75
    %s77 = ssub.s32 %s15, %s27
    %s78 = ssub.s32 %s16, %s23
    %s79 = sor.u32 %s77, %s78
    %p80 = scmp.eq.s32.totalorder %s79, 0
    %s82 = sadd.s32 %s81, 1
    %s83 = scalar_select %p80, %s81, %s82
    %p86 = pneg %p80
    %p87 = scmp.eq.s32.totalorder %s8, 1
    %p88 = por %p86, %p87
    %p89 = scmp.ne.s32.totalorder %s81, %s84
    %p90 = scmp.eq.s32.totalorder %s8, 0
    %p91 = por %p89, %p90
    %p92 = scmp.ne.s32.totalorder %s81, %s84
    %p93 = scmp.eq.s32.totalorder %s13, 1
    %p94 = por %p92, %p93
    %p95 = scmp.ne.s32.totalorder %s84, %s85
    %p96 = scmp.eq.s32.totalorder %s13, 0
    %p97 = por %p95, %p96
    %p98 = scmp.ne.s32.totalorder %s84, %s85
    %p99 = scmp.eq.s32.totalorder %s14, 1
    %p100 = por %p98, %p99
    %p102 = scmp.ne.s32.totalorder %s85, %s101
    %p103 = scmp.eq.s32.totalorder %s14, 0
    %p104 = por %p102, %p103
    %p105 = scmp.le.s32.totalorder 1, %s8
    %p106 = scmp.lt.s32.totalorder %s8, 3
    %p107 = pnand %p105, %p106
    %p108 = pneg %p107
    // Predicated region
    $region9: #{basic_block_forward.9} parent=5 // pred_check
      _
    $region10: #{basic_block_forward.9} parent=5 // pred_check_branch
      %110 = sbr.rel (%p107) target = $region12
    $region11: #{basic_block_forward.9} parent=5 // pred_region
      %s111 = ssub.s32 %s8, 1
      // Predicated region
      $region13: #{basic_block_forward.9} parent=11 // pred_check
        %p112 = pneg %p69
      $region14: #{basic_block_forward.9} parent=11 // pred_check_branch
        %114 = sbr.rel (%p112) target = $region16
      $region15: #{basic_block_forward.9} parent=11 // pred_region
        _
      $region16: #{basic_block_forward.9} parent=11 // pred_fallthru
        _
    $region12: #{basic_block_forward.9} parent=5 // pred_fallthru
      _
    %p115 = scmp.lt.s32.totalorder %s8, 2
    // Predicated region
    $region17: #{basic_block_forward.9} parent=5 // pred_check
      %p116 = pneg %p115
    $region18: #{basic_block_forward.9} parent=5 // pred_check_branch
      %118 = sbr.rel (%p116) target = $region20
    $region19: #{basic_block_forward.9} parent=5 // pred_region
      // Predicated region
      $region21: #{basic_block_forward.9} parent=19 // pred_check
        %p119 = pneg %p42
      $region22: #{basic_block_forward.9} parent=19 // pred_check_branch
        %121 = sbr.rel (%p119) target = $region24
      $region23: #{basic_block_forward.9} parent=19 // pred_region
        %s122 = smul.u32 2, %s16
        %p123 = scmp.lt.s32.totalorder %s15, 1
        %s124 = scalar_select %p123, %s15, 1
        %p125 = scmp.lt.s32.totalorder %s122, 1
        %s126 = scalar_select %p125, %s122, 1
        %s127 = smul.addr %s124, 4
        %s128 = sadd.s32 %s126, %s127
        %s129 = smul.addr %s128, 8
        %s130 = scalar_lea.vmem %s0, %s129
        %s131 = smul.u32 2, %s16
      $region24: #{basic_block_forward.9} parent=19 // pred_fallthru
        _
    $region20: #{basic_block_forward.9} parent=5 // pred_fallthru
      _
    %p132 = scmp.le.s32.totalorder 1, %s8
    %p133 = scmp.lt.s32.totalorder %s8, 3
    %p134 = pnand %p132, %p133
    %p135 = pneg %p134
    // Predicated region
    $region25: #{basic_block_forward.9} parent=5 // pred_check
      _
    $region26: #{basic_block_forward.9} parent=5 // pred_check_branch
      %137 = sbr.rel (%p134) target = $region28
    $region27: #{basic_block_forward.9} parent=5 // pred_region
      %s138 = ssub.s32 %s8, 1
      %s139 = smul.u32 2, %s18
      %p140 = scmp.lt.s32.totalorder %s17, 1
      %s141 = scalar_select %p140, %s17, 1
      %p142 = scmp.lt.s32.totalorder %s139, 1
      %s143 = scalar_select %p142, %s139, 1
      %s144 = smul.addr %s141, 4
      %s145 = sadd.s32 %s143, %s144
      %s146 = smul.addr %s145, 8
      %s147 = scalar_lea.vmem %s0, %s146
      %p148 = pneg %p48
      %p149 = pneg %p45
      %p150 = pneg %p69
      %p151 = pneg %p66
      %p152 = pneg %p97
      %p153 = pneg %p94
      %s154 = smul.u32 2, %s18
      %p155 = scmp.lt.s32.totalorder %s17, 1
      %s156 = scalar_select %p155, %s17, 1
      %p157 = scmp.lt.s32.totalorder %s154, 1
      %s158 = scalar_select %p157, %s154, 1
      %s159 = smul.addr %s156, 4
      %s160 = sadd.s32 %s158, %s159
      %s161 = smul.addr %s160, 8
      %s162 = scalar_lea.vmem %s2, %s161
      %s163 = smul.u32 2, %s18
      %p164 = scmp.lt.s32.totalorder %s17, 1
      %s165 = scalar_select %p164, %s17, 1
      %p166 = scmp.lt.s32.totalorder %s163, 1
      %s167 = scalar_select %p166, %s163, 1
      %s168 = smul.addr %s165, 4
      %s169 = sadd.s32 %s167, %s168
      %s170 = smul.addr %s169, 8
      %s171 = scalar_lea.vmem %s0, %s170
      %s172 = smul.u32 2, %s18
      %s173 = smul.u32 2, %s18
      %p174 = scmp.lt.s32.totalorder %s17, 1
      %s175 = scalar_select %p174, %s17, 1
      %p176 = scmp.lt.s32.totalorder %s173, 1
      %s177 = scalar_select %p176, %s173, 1
      %s178 = smul.addr %s175, 4
      %s179 = sadd.s32 %s177, %s178
      %s180 = smul.addr %s179, 8
      %s181 = scalar_lea.vmem %s2, %s180
      %s182 = smul.u32 2, %s18
      %v183 = vld [vmem:[%s171] sm:$0xff]
      %v184 = vld [vmem:[%s171 + $0x8] sm:$0xff]
      %v185 = vld [vmem:[%s171 + $0x10] sm:$0xff]
      %v186 = vld [vmem:[%s171 + $0x18] sm:$0xff]
      %v187 = vld [vmem:[%s1] sm:$0xff]
      %v188 = vld [vmem:[%s1 + $0x8] sm:$0xff]
      %190 = vset.pattern.permute.xlu0 0
      %191 = vperm.xlu0 %190, %v187
      %v192 = vpop.permute.xlu0 %191
      %195 = vset.pattern.permute.xlu0 0
      %196 = vperm.xlu0 %195, %v188
      %v197 = vpop.permute.xlu0 %196
      %v199 = vmul.f32 %v183, %v192
      %v200 = vmul.f32 %v184, %v192
      %v201 = vmul.f32 %v185, %v197
      %v202 = vmul.f32 %v186, %v197
      %s203 = scalar_lea.vmem %s1, 16
      %v204 = vld [vmem:[%s203] sm:$0xff]
      %v205 = vld [vmem:[%s203 + $0x8] sm:$0xff]
      %207 = vset.pattern.permute.xlu0 0
      %208 = vperm.xlu0 %207, %v204
      %v209 = vpop.permute.xlu0 %208
      %212 = vset.pattern.permute.xlu0 0
      %213 = vperm.xlu0 %212, %v205
      %v214 = vpop.permute.xlu0 %213
      %v216 = vadd.f32 %v199, %v209
      %v217 = vadd.f32 %v200, %v209
      %v218 = vadd.f32 %v201, %v214
      %v219 = vadd.f32 %v202, %v214
      %v220 = vmax.f32 %v216, 0.0
      %v221 = vmax.f32 %v217, 0.0
      %v222 = vmax.f32 %v218, 0.0
      %v223 = vmax.f32 %v219, 0.0
      %224 = vst [vmem:[%s181] sm:$0xff] %v220
      %225 = vst [vmem:[%s181 + $0x8] sm:$0xff] %v221
      %226 = vst [vmem:[%s181 + $0x10] sm:$0xff] %v222
      %227 = vst [vmem:[%s181 + $0x18] sm:$0xff] %v223
      %s228 = smul.u32 2, %s18
      %p229 = scmp.lt.s32.totalorder %s17, 1
      %s230 = scalar_select %p229, %s17, 1
      %p231 = scmp.lt.s32.totalorder %s228, 1
      %s232 = scalar_select %p231, %s228, 1
      %s233 = smul.addr %s230, 4
      %s234 = sadd.s32 %s232, %s233
      %s235 = smul.addr %s234, 8
      %s236 = scalar_lea.vmem %s2, %s235
      // Predicated region
      $region29: #{basic_block_forward.9} parent=27 // pred_check
        %p237 = pneg %p94
      $region30: #{basic_block_forward.9} parent=27 // pred_check_branch
        %239 = sbr.rel (%p237) target = $region32
      $region31: #{basic_block_forward.9} parent=27 // pred_region
        %s240 = smul.u32 2, %s18
      $region32: #{basic_block_forward.9} parent=27 // pred_fallthru
        _
    $region28: #{basic_block_forward.9} parent=5 // pred_fallthru
      _
    %p241 = scmp.le.s32.totalorder 2, %s8
    // Predicated region
    $region33: #{basic_block_forward.9} parent=5 // pred_check
      %p242 = pneg %p241
    $region34: #{basic_block_forward.9} parent=5 // pred_check_branch
      %244 = sbr.rel (%p242) target = $region36
    $region35: #{basic_block_forward.9} parent=5 // pred_region
      %s245 = ssub.s32 %s8, 2
      // Predicated region
      $region37: #{basic_block_forward.9} parent=35 // pred_check
        %p246 = pneg %p100
      $region38: #{basic_block_forward.9} parent=35 // pred_check_branch
        %248 = sbr.rel (%p246) target = $region40
      $region39: #{basic_block_forward.9} parent=35 // pred_region
        %s249 = smul.u32 2, %s20
        %p250 = scmp.lt.s32.totalorder %s19, 1
        %s251 = scalar_select %p250, %s19, 1
        %p252 = scmp.lt.s32.totalorder %s249, 1
        %s253 = scalar_select %p252, %s249, 1
        %s254 = smul.addr %s251, 4
        %s255 = sadd.s32 %s253, %s254
        %s256 = smul.addr %s255, 8
        %s257 = scalar_lea.vmem %s2, %s256
      $region40: #{basic_block_forward.9} parent=35 // pred_fallthru
        _
    $region36: #{basic_block_forward.9} parent=5 // pred_fallthru
      _
  $region6: #{basic_block_forward.9} parent=0 // loop_footer
    %s12 = sadd.s32 1, %s8
  $region7: #{basic_block_forward.9} parent=0 // loop_footer_branch
    %7 = sbr.rel target = $region3
  $region8: #{basic_block_forward.9} parent=0 // loop_exit
    _

</llo_original>
